<compile_context>
chip_gen: v7x
topology: tpu7x:2x2x1
jax: 0.10.0
libtpu: 0.0.40
codegen_flags: <defaults>
</compile_context>

<pallas_src>
import jax
import jax.numpy as jnp
from jax.experimental import pallas as pl
from jax.experimental.pallas import tpu as pltpu


def _make_mattention_kernel(B, N, C, num_heads, head_dim):
    """Fused: qkv projection -> per-head batched attention -> output proj."""

    def kernel(x_ref, wqkv_ref, wp_ref, bp_ref, o_ref, qkv_scr, attn_scr):
        # ---- Fused QKV projection over all B*N rows: (B*N, C) @ (C, 3C). ----
        # bf16 operands, f32 accumulation (single MXU pass).
        xb = x_ref[...].astype(jnp.bfloat16)
        qkv = jnp.dot(xb, wqkv_ref[...], preferred_element_type=jnp.float32)
        # Spill to bf16 VMEM scratch: bounds the live range of the big slab
        # and the bf16 copy is exactly what the attention MXU passes need.
        qkv_scr[...] = qkv.astype(jnp.bfloat16)

        # ---- Per-head attention, batched over B via 3-D einsums. ----
        for h in range(num_heads):                       # static, tiny unroll
            lo = h * head_dim
            hi = lo + head_dim
            # (B*N, hd) -> (B, N, hd): leading-dim split only (no transpose).
            qh = qkv_scr[:, lo:hi].reshape(B, N, head_dim)            # bf16
            kh = qkv_scr[:, C + lo:C + hi].reshape(B, N, head_dim)    # bf16
            vh = qkv_scr[:, 2 * C + lo:2 * C + hi].reshape(B, N, head_dim)

            # Scores (B, N, N); softmax scale already folded into q weights.
            s = jnp.einsum("bnd,bmd->bnm", qh, kh,
                           preferred_element_type=jnp.float32)

            # Numerically stable softmax, f32 elementwise (v5e-safe),
            # normalization deferred to the small (B, N, hd) output.
            m = jnp.max(s, axis=-1, keepdims=True)
            p = jnp.exp(s - m)
            l = jnp.sum(p, axis=-1, keepdims=True)                    # (B,N,1)

            o = jnp.einsum("bnm,bmd->bnd", p.astype(jnp.bfloat16), vh,
                           preferred_element_type=jnp.float32)        # (B,N,hd)
            o = o * pl.reciprocal(l, approx=True)                     # EUP vrcp

            # Store this head's output at its lane offset; no concatenates.
            attn_scr[:, lo:hi] = (
                o.reshape(B * N, head_dim).astype(jnp.bfloat16))

        # ---- Output projection + bias over all 128 rows (lane-dense). ----
        out = jnp.dot(attn_scr[...], wp_ref[...],
                      preferred_element_type=jnp.float32)
        out = out + bp_ref[...]
        # attn_drop / proj_drop have p=0.0 -> identity.
        o_ref[...] = out.astype(o_ref.dtype)

    return kernel


def prepare_mattention_params(params, dim, num_heads=4):
    """One-time weight prep, hoisted out of the forward.

    Fuses Wq (from qkv_r) / Wk / Wv (from qkv_f) into a single pre-transposed
    (C, 3C) matrix, folds the softmax scale into the q columns, and casts the
    MXU operands to bf16.
    """
    C = dim
    head_dim = C // num_heads
    scale = head_dim ** (-0.5)
    w_r = params["qkv_r_w"]                      # (3C, C) torch Linear layout
    w_f = params["qkv_f_w"]                      # (3C, C)
    wq = jnp.transpose(w_r[0:C, :]) * scale      # q from qkv_r, scale folded
    wk = jnp.transpose(w_f[C:2 * C, :])          # k from qkv_f
    wv = jnp.transpose(w_f[2 * C:3 * C, :])      # v from qkv_f
    wqkv = jnp.concatenate([wq, wk, wv], axis=1).astype(jnp.bfloat16)  # (C,3C)
    wp = jnp.transpose(params["proj_w"]).astype(jnp.bfloat16)          # (C, C)
    bp = params["proj_b"].reshape(1, C).astype(jnp.float32)            # (1, C)
    return {"wqkv": wqkv, "wp": wp, "bp": bp}


def mattention_forward(x_nchw, prepared, num_heads=4):
    """Forward pass of MAttention.  x_nchw: (B, C, H, W) float32."""
    B, C, H, W = x_nchw.shape
    N = H * W
    head_dim = C // num_heads

    # Exact semantics of the PyTorch code: plain row-major reshape (the module
    # uses rgb.reshape(B, H*W, C), NOT flatten(2).transpose(1, 2)).
    x_flat = x_nchw.reshape(B * N, C)

    kernel = _make_mattention_kernel(B, N, C, num_heads, head_dim)

    # Whole-array, untiled VMEM residency; no grid => single invocation, no
    # redundant double-buffering of grid-invariant weights.
    vmem = pl.BlockSpec(memory_space=pltpu.MemorySpace.VMEM)

    out = pl.pallas_call(
        kernel,
        out_shape=jax.ShapeDtypeStruct((B * N, C), jnp.float32),
        in_specs=[vmem, vmem, vmem, vmem],
        out_specs=vmem,
        scratch_shapes=[
            pltpu.VMEM((B * N, 3 * C), jnp.bfloat16),   # spilled qkv slab
            pltpu.VMEM((B * N, C), jnp.bfloat16),       # per-head attn output
        ],
    )(x_flat, prepared["wqkv"], prepared["wp"], prepared["bp"])

    # Plain row-major reshape back to NCHW (module assumes H == W).
    return out.reshape(B, C, H, W)


def mattention_reference(x_nchw, params, num_heads=4):
    """Pure-JAX mirror of the PyTorch forward (correctness check)."""
    with jax.default_matmul_precision("highest"):
        B, C, H, W = x_nchw.shape
        N = H * W
        hd = C // num_heads
        scale = hd ** (-0.5)
        rgb = x_nchw.reshape(B, N, C)
        qkv_r = (rgb @ params["qkv_r_w"].T).reshape(B, N, 3, num_heads, hd)
        qkv_r = jnp.transpose(qkv_r, (2, 0, 3, 1, 4))
        qkv_f = (rgb @ params["qkv_f_w"].T).reshape(B, N, 3, num_heads, hd)
        qkv_f = jnp.transpose(qkv_f, (2, 0, 3, 1, 4))
        qr, kg, vg = qkv_r[0], qkv_f[1], qkv_f[2]
        attn = jnp.einsum("bhnd,bhmd->bhnm", qr, kg) * scale
        attn = jax.nn.softmax(attn, axis=-1)
        out = jnp.einsum("bhnm,bhmd->bhnd", attn, vg)
        out = jnp.transpose(out, (0, 2, 1, 3)).reshape(B, N, C)
        out = out @ params["proj_w"].T + params["proj_b"]
        return out.reshape(B, C, H, W)


def init_params(key, dim):
    """Deterministic synthetic parameters matching the module's shapes."""
    k1, k2, k3, k4 = jax.random.split(key, 4)
    return {
        "qkv_r_w": 0.05 * jax.random.normal(k1, (3 * dim, dim), jnp.float32),
        "qkv_f_w": 0.05 * jax.random.normal(k2, (3 * dim, dim), jnp.float32),
        "proj_w": 0.05 * jax.random.normal(k3, (dim, dim), jnp.float32),
        "proj_b": 0.05 * jax.random.normal(k4, (dim,), jnp.float32),
    }


if __name__ == "__main__":
    # dim=128, num_heads=4 -> head_dim=32, N=64, B*N=128: every big matmul
    # operand and the output store are lane-dense (last dim multiple of 128).
    B, C, H, W = 2, 128, 8, 8
    num_heads = 4

    key = jax.random.PRNGKey(0)
    kx, kp = jax.random.split(key)
    x = jax.random.normal(kx, (B, C, H, W), jnp.float32)
    params = init_params(kp, C)

    # One-time weight prep (transpose / fuse / scale-fold / bf16 cast) hoisted
    # out of the forward path.
    prepared = prepare_mattention_params(params, C, num_heads)

    out = jax.block_until_ready(mattention_forward(x, prepared, num_heads))
    ref = jax.block_until_ready(mattention_reference(x, params, num_heads))

    assert out.shape == (B, C, H, W)
    # bf16 MXU operands + approx reciprocal vs. an f32 HIGHEST-precision
    # reference: measured error ~1e-3; 2e-2 leaves generous margin.
    err = float(jnp.max(jnp.abs(out - ref)))
    assert jnp.allclose(out, ref, atol=2e-2, rtol=2e-2), err

    print("KERNEL_OK")
</pallas_src>

<mosaic_0001>
module attributes {stable_mosaic.version = 11 : i64} {
  func.func @kernel(%arg0: memref<128x128xf32, #tpu.memory_space<vmem>>, %arg1: memref<128x384xbf16, #tpu.memory_space<vmem>>, %arg2: memref<128x128xbf16, #tpu.memory_space<vmem>>, %arg3: memref<1x128xf32, #tpu.memory_space<vmem>>, %arg4: memref<128x128xf32, #tpu.memory_space<vmem>>, %arg5: memref<128x384xbf16, #tpu.memory_space<vmem>>, %arg6: memref<128x128xbf16, #tpu.memory_space<vmem>>) attributes {dimension_semantics = [], scalar_prefetch = 0 : i64, scratch_operands = 2 : i64, tpu.core_type = #tpu.core_type<tc>} {
    %c0 = arith.constant 0 : index
    %c0_0 = arith.constant 0 : index
    %0 = vector.load %arg0[%c0, %c0_0] : memref<128x128xf32, #tpu.memory_space<vmem>>, vector<128x128xf32>
    %1 = arith.truncf %0 : vector<128x128xf32> to vector<128x128xbf16>
    %c0_1 = arith.constant 0 : index
    %c0_2 = arith.constant 0 : index
    %2 = vector.load %arg1[%c0_1, %c0_2] : memref<128x384xbf16, #tpu.memory_space<vmem>>, vector<128x384xbf16>
    %cst = arith.constant dense<0.000000e+00> : vector<128x384xf32>
    %3 = tpu.matmul %1, %2, %cst {dimension_numbers = #tpu.dot_dimension_numbers<[1], [0], [0], [1], [0, 0, 1, 1], [], []>} : vector<128x128xbf16>, vector<128x384xbf16>, vector<128x384xf32> -> vector<128x384xf32>
    %4 = arith.truncf %3 : vector<128x384xf32> to vector<128x384xbf16>
    %c0_3 = arith.constant 0 : index
    %c0_4 = arith.constant 0 : index
    %5 = vector.load %arg5[%c0_3, %c0_4] : memref<128x384xbf16, #tpu.memory_space<vmem>>, vector<128x384xbf16>
    tpu.vector_store %arg5[%c0_3, %c0_4], %4 {strides = array<i32>} : memref<128x384xbf16, #tpu.memory_space<vmem>>, vector<128x384xbf16>,
    %c0_5 = arith.constant 0 : index
    %c0_6 = arith.constant 0 : index
    %6 = vector.load %arg5[%c0_5, %c0_6] : memref<128x384xbf16, #tpu.memory_space<vmem>>, vector<128x32xbf16>
    %7 = vector.shape_cast %6 : vector<128x32xbf16> to vector<2x64x32xbf16>
    %c0_7 = arith.constant 0 : index
    %c128 = arith.constant 128 : index
    %8 = vector.load %arg5[%c0_7, %c128] : memref<128x384xbf16, #tpu.memory_space<vmem>>, vector<128x32xbf16>
    %9 = vector.shape_cast %8 : vector<128x32xbf16> to vector<2x64x32xbf16>
    %c0_8 = arith.constant 0 : index
    %c256 = arith.constant 256 : index
    %10 = vector.load %arg5[%c0_8, %c256] : memref<128x384xbf16, #tpu.memory_space<vmem>>, vector<128x32xbf16>
    %11 = vector.shape_cast %10 : vector<128x32xbf16> to vector<2x64x32xbf16>
    "tpu.trace_start"() <{level = 10 : i32, message = "bnd,bmd->bnm"}> : () -> ()
    %cst_9 = arith.constant dense<0.000000e+00> : vector<2x64x64xf32>
    %12 = tpu.matmul %7, %9, %cst_9 {dimension_numbers = #tpu.dot_dimension_numbers<[2], [2], [1], [1], [0, 0, 0, 1, 1, 1], [0], [0]>} : vector<2x64x32xbf16>, vector<2x64x32xbf16>, vector<2x64x64xf32> -> vector<2x64x64xf32>
    "tpu.trace_stop"() : () -> ()
    %cst_10 = arith.constant dense<0xFF800000> : vector<2x64xf32>
    %13 = vector.multi_reduction <maximumf>, %12, %cst_10 [2] : vector<2x64x64xf32> to vector<2x64xf32>
    %14 = vector.shape_cast %13 : vector<2x64xf32> to vector<2x64x1xf32>
    %15 = vector.broadcast %14 : vector<2x64x1xf32> to vector<2x64x64xf32>
    %16 = arith.subf %12, %15 : vector<2x64x64xf32>
    %17 = math.exp %16 : vector<2x64x64xf32>
    %cst_11 = arith.constant dense<0.000000e+00> : vector<2x64xf32>
    %18 = vector.multi_reduction <add>, %17, %cst_11 [2] : vector<2x64x64xf32> to vector<2x64xf32>
    %19 = vector.shape_cast %18 : vector<2x64xf32> to vector<2x64x1xf32>
    %20 = arith.truncf %17 : vector<2x64x64xf32> to vector<2x64x64xbf16>
    "tpu.trace_start"() <{level = 10 : i32, message = "bnm,bmd->bnd"}> : () -> ()
    %cst_12 = arith.constant dense<0.000000e+00> : vector<2x64x32xf32>
    %21 = tpu.matmul %20, %11, %cst_12 {dimension_numbers = #tpu.dot_dimension_numbers<[2], [1], [1], [2], [0, 0, 0, 1, 1, 2], [0], [0]>} : vector<2x64x64xbf16>, vector<2x64x32xbf16>, vector<2x64x32xf32> -> vector<2x64x32xf32>
    "tpu.trace_stop"() : () -> ()
    %22 = tpu.reciprocal %19 {approx = true} : vector<2x64x1xf32> -> vector<2x64x1xf32>
    %23 = vector.broadcast %22 : vector<2x64x1xf32> to vector<2x64x32xf32>
    %24 = arith.mulf %21, %23 : vector<2x64x32xf32>
    %25 = vector.shape_cast %24 : vector<2x64x32xf32> to vector<128x32xf32>
    %26 = arith.truncf %25 : vector<128x32xf32> to vector<128x32xbf16>
    %c0_13 = arith.constant 0 : index
    %c0_14 = arith.constant 0 : index
    %27 = vector.load %arg6[%c0_13, %c0_14] : memref<128x128xbf16, #tpu.memory_space<vmem>>, vector<128x32xbf16>
    tpu.vector_store %arg6[%c0_13, %c0_14], %26 {strides = array<i32>} : memref<128x128xbf16, #tpu.memory_space<vmem>>, vector<128x32xbf16>,
    %c0_15 = arith.constant 0 : index
    %c32 = arith.constant 32 : index
    %28 = vector.load %arg5[%c0_15, %c32] : memref<128x384xbf16, #tpu.memory_space<vmem>>, vector<128x32xbf16>
    %29 = vector.shape_cast %28 : vector<128x32xbf16> to vector<2x64x32xbf16>
    %c0_16 = arith.constant 0 : index
    %c160 = arith.constant 160 : index
    %30 = vector.load %arg5[%c0_16, %c160] : memref<128x384xbf16, #tpu.memory_space<vmem>>, vector<128x32xbf16>
    %31 = vector.shape_cast %30 : vector<128x32xbf16> to vector<2x64x32xbf16>
    %c0_17 = arith.constant 0 : index
    %c288 = arith.constant 288 : index
    %32 = vector.load %arg5[%c0_17, %c288] : memref<128x384xbf16, #tpu.memory_space<vmem>>, vector<128x32xbf16>
    %33 = vector.shape_cast %32 : vector<128x32xbf16> to vector<2x64x32xbf16>
    "tpu.trace_start"() <{level = 10 : i32, message = "bnd,bmd->bnm"}> : () -> ()
    %cst_18 = arith.constant dense<0.000000e+00> : vector<2x64x64xf32>
    %34 = tpu.matmul %29, %31, %cst_18 {dimension_numbers = #tpu.dot_dimension_numbers<[2], [2], [1], [1], [0, 0, 0, 1, 1, 1], [0], [0]>} : vector<2x64x32xbf16>, vector<2x64x32xbf16>, vector<2x64x64xf32> -> vector<2x64x64xf32>
    "tpu.trace_stop"() : () -> ()
    %cst_19 = arith.constant dense<0xFF800000> : vector<2x64xf32>
    %35 = vector.multi_reduction <maximumf>, %34, %cst_19 [2] : vector<2x64x64xf32> to vector<2x64xf32>
    %36 = vector.shape_cast %35 : vector<2x64xf32> to vector<2x64x1xf32>
    %37 = vector.broadcast %36 : vector<2x64x1xf32> to vector<2x64x64xf32>
    %38 = arith.subf %34, %37 : vector<2x64x64xf32>
    %39 = math.exp %38 : vector<2x64x64xf32>
    %cst_20 = arith.constant dense<0.000000e+00> : vector<2x64xf32>
    %40 = vector.multi_reduction <add>, %39, %cst_20 [2] : vector<2x64x64xf32> to vector<2x64xf32>
    %41 = vector.shape_cast %40 : vector<2x64xf32> to vector<2x64x1xf32>
    %42 = arith.truncf %39 : vector<2x64x64xf32> to vector<2x64x64xbf16>
    "tpu.trace_start"() <{level = 10 : i32, message = "bnm,bmd->bnd"}> : () -> ()
    %cst_21 = arith.constant dense<0.000000e+00> : vector<2x64x32xf32>
    %43 = tpu.matmul %42, %33, %cst_21 {dimension_numbers = #tpu.dot_dimension_numbers<[2], [1], [1], [2], [0, 0, 0, 1, 1, 2], [0], [0]>} : vector<2x64x64xbf16>, vector<2x64x32xbf16>, vector<2x64x32xf32> -> vector<2x64x32xf32>
    "tpu.trace_stop"() : () -> ()
    %44 = tpu.reciprocal %41 {approx = true} : vector<2x64x1xf32> -> vector<2x64x1xf32>
    %45 = vector.broadcast %44 : vector<2x64x1xf32> to vector<2x64x32xf32>
    %46 = arith.mulf %43, %45 : vector<2x64x32xf32>
    %47 = vector.shape_cast %46 : vector<2x64x32xf32> to vector<128x32xf32>
    %48 = arith.truncf %47 : vector<128x32xf32> to vector<128x32xbf16>
    %c0_22 = arith.constant 0 : index
    %c32_23 = arith.constant 32 : index
    %49 = vector.load %arg6[%c0_22, %c32_23] : memref<128x128xbf16, #tpu.memory_space<vmem>>, vector<128x32xbf16>
    tpu.vector_store %arg6[%c0_22, %c32_23], %48 {strides = array<i32>} : memref<128x128xbf16, #tpu.memory_space<vmem>>, vector<128x32xbf16>,
    %c0_24 = arith.constant 0 : index
    %c64 = arith.constant 64 : index
    %50 = vector.load %arg5[%c0_24, %c64] : memref<128x384xbf16, #tpu.memory_space<vmem>>, vector<128x32xbf16>
    %51 = vector.shape_cast %50 : vector<128x32xbf16> to vector<2x64x32xbf16>
    %c0_25 = arith.constant 0 : index
    %c192 = arith.constant 192 : index
    %52 = vector.load %arg5[%c0_25, %c192] : memref<128x384xbf16, #tpu.memory_space<vmem>>, vector<128x32xbf16>
    %53 = vector.shape_cast %52 : vector<128x32xbf16> to vector<2x64x32xbf16>
    %c0_26 = arith.constant 0 : index
    %c320 = arith.constant 320 : index
    %54 = vector.load %arg5[%c0_26, %c320] : memref<128x384xbf16, #tpu.memory_space<vmem>>, vector<128x32xbf16>
    %55 = vector.shape_cast %54 : vector<128x32xbf16> to vector<2x64x32xbf16>
    "tpu.trace_start"() <{level = 10 : i32, message = "bnd,bmd->bnm"}> : () -> ()
    %cst_27 = arith.constant dense<0.000000e+00> : vector<2x64x64xf32>
    %56 = tpu.matmul %51, %53, %cst_27 {dimension_numbers = #tpu.dot_dimension_numbers<[2], [2], [1], [1], [0, 0, 0, 1, 1, 1], [0], [0]>} : vector<2x64x32xbf16>, vector<2x64x32xbf16>, vector<2x64x64xf32> -> vector<2x64x64xf32>
    "tpu.trace_stop"() : () -> ()
    %cst_28 = arith.constant dense<0xFF800000> : vector<2x64xf32>
    %57 = vector.multi_reduction <maximumf>, %56, %cst_28 [2] : vector<2x64x64xf32> to vector<2x64xf32>
    %58 = vector.shape_cast %57 : vector<2x64xf32> to vector<2x64x1xf32>
    %59 = vector.broadcast %58 : vector<2x64x1xf32> to vector<2x64x64xf32>
    %60 = arith.subf %56, %59 : vector<2x64x64xf32>
    %61 = math.exp %60 : vector<2x64x64xf32>
    %cst_29 = arith.constant dense<0.000000e+00> : vector<2x64xf32>
    %62 = vector.multi_reduction <add>, %61, %cst_29 [2] : vector<2x64x64xf32> to vector<2x64xf32>
    %63 = vector.shape_cast %62 : vector<2x64xf32> to vector<2x64x1xf32>
    %64 = arith.truncf %61 : vector<2x64x64xf32> to vector<2x64x64xbf16>
    "tpu.trace_start"() <{level = 10 : i32, message = "bnm,bmd->bnd"}> : () -> ()
    %cst_30 = arith.constant dense<0.000000e+00> : vector<2x64x32xf32>
    %65 = tpu.matmul %64, %55, %cst_30 {dimension_numbers = #tpu.dot_dimension_numbers<[2], [1], [1], [2], [0, 0, 0, 1, 1, 2], [0], [0]>} : vector<2x64x64xbf16>, vector<2x64x32xbf16>, vector<2x64x32xf32> -> vector<2x64x32xf32>
    "tpu.trace_stop"() : () -> ()
    %66 = tpu.reciprocal %63 {approx = true} : vector<2x64x1xf32> -> vector<2x64x1xf32>
    %67 = vector.broadcast %66 : vector<2x64x1xf32> to vector<2x64x32xf32>
    %68 = arith.mulf %65, %67 : vector<2x64x32xf32>
    %69 = vector.shape_cast %68 : vector<2x64x32xf32> to vector<128x32xf32>
    %70 = arith.truncf %69 : vector<128x32xf32> to vector<128x32xbf16>
    %c0_31 = arith.constant 0 : index
    %c64_32 = arith.constant 64 : index
    %71 = vector.load %arg6[%c0_31, %c64_32] : memref<128x128xbf16, #tpu.memory_space<vmem>>, vector<128x32xbf16>
    tpu.vector_store %arg6[%c0_31, %c64_32], %70 {strides = array<i32>} : memref<128x128xbf16, #tpu.memory_space<vmem>>, vector<128x32xbf16>,
    %c0_33 = arith.constant 0 : index
    %c96 = arith.constant 96 : index
    %72 = vector.load %arg5[%c0_33, %c96] : memref<128x384xbf16, #tpu.memory_space<vmem>>, vector<128x32xbf16>
    %73 = vector.shape_cast %72 : vector<128x32xbf16> to vector<2x64x32xbf16>
    %c0_34 = arith.constant 0 : index
    %c224 = arith.constant 224 : index
    %74 = vector.load %arg5[%c0_34, %c224] : memref<128x384xbf16, #tpu.memory_space<vmem>>, vector<128x32xbf16>
    %75 = vector.shape_cast %74 : vector<128x32xbf16> to vector<2x64x32xbf16>
    %c0_35 = arith.constant 0 : index
    %c352 = arith.constant 352 : index
    %76 = vector.load %arg5[%c0_35, %c352] : memref<128x384xbf16, #tpu.memory_space<vmem>>, vector<128x32xbf16>
    %77 = vector.shape_cast %76 : vector<128x32xbf16> to vector<2x64x32xbf16>
    "tpu.trace_start"() <{level = 10 : i32, message = "bnd,bmd->bnm"}> : () -> ()
    %cst_36 = arith.constant dense<0.000000e+00> : vector<2x64x64xf32>
    %78 = tpu.matmul %73, %75, %cst_36 {dimension_numbers = #tpu.dot_dimension_numbers<[2], [2], [1], [1], [0, 0, 0, 1, 1, 1], [0], [0]>} : vector<2x64x32xbf16>, vector<2x64x32xbf16>, vector<2x64x64xf32> -> vector<2x64x64xf32>
    "tpu.trace_stop"() : () -> ()
    %cst_37 = arith.constant dense<0xFF800000> : vector<2x64xf32>
    %79 = vector.multi_reduction <maximumf>, %78, %cst_37 [2] : vector<2x64x64xf32> to vector<2x64xf32>
    %80 = vector.shape_cast %79 : vector<2x64xf32> to vector<2x64x1xf32>
    %81 = vector.broadcast %80 : vector<2x64x1xf32> to vector<2x64x64xf32>
    %82 = arith.subf %78, %81 : vector<2x64x64xf32>
    %83 = math.exp %82 : vector<2x64x64xf32>
    %cst_38 = arith.constant dense<0.000000e+00> : vector<2x64xf32>
    %84 = vector.multi_reduction <add>, %83, %cst_38 [2] : vector<2x64x64xf32> to vector<2x64xf32>
    %85 = vector.shape_cast %84 : vector<2x64xf32> to vector<2x64x1xf32>
    %86 = arith.truncf %83 : vector<2x64x64xf32> to vector<2x64x64xbf16>
    "tpu.trace_start"() <{level = 10 : i32, message = "bnm,bmd->bnd"}> : () -> ()
    %cst_39 = arith.constant dense<0.000000e+00> : vector<2x64x32xf32>
    %87 = tpu.matmul %86, %77, %cst_39 {dimension_numbers = #tpu.dot_dimension_numbers<[2], [1], [1], [2], [0, 0, 0, 1, 1, 2], [0], [0]>} : vector<2x64x64xbf16>, vector<2x64x32xbf16>, vector<2x64x32xf32> -> vector<2x64x32xf32>
    "tpu.trace_stop"() : () -> ()
    %88 = tpu.reciprocal %85 {approx = true} : vector<2x64x1xf32> -> vector<2x64x1xf32>
    %89 = vector.broadcast %88 : vector<2x64x1xf32> to vector<2x64x32xf32>
    %90 = arith.mulf %87, %89 : vector<2x64x32xf32>
    %91 = vector.shape_cast %90 : vector<2x64x32xf32> to vector<128x32xf32>
    %92 = arith.truncf %91 : vector<128x32xf32> to vector<128x32xbf16>
    %c0_40 = arith.constant 0 : index
    %c96_41 = arith.constant 96 : index
    %93 = vector.load %arg6[%c0_40, %c96_41] : memref<128x128xbf16, #tpu.memory_space<vmem>>, vector<128x32xbf16>
    tpu.vector_store %arg6[%c0_40, %c96_41], %92 {strides = array<i32>} : memref<128x128xbf16, #tpu.memory_space<vmem>>, vector<128x32xbf16>,
    %c0_42 = arith.constant 0 : index
    %c0_43 = arith.constant 0 : index
    %94 = vector.load %arg6[%c0_42, %c0_43] : memref<128x128xbf16, #tpu.memory_space<vmem>>, vector<128x128xbf16>
    %c0_44 = arith.constant 0 : index
    %c0_45 = arith.constant 0 : index
    %95 = vector.load %arg2[%c0_44, %c0_45] : memref<128x128xbf16, #tpu.memory_space<vmem>>, vector<128x128xbf16>
    %cst_46 = arith.constant dense<0.000000e+00> : vector<128x128xf32>
    %96 = tpu.matmul %94, %95, %cst_46 {dimension_numbers = #tpu.dot_dimension_numbers<[1], [0], [0], [1], [0, 0, 1, 1], [], []>} : vector<128x128xbf16>, vector<128x128xbf16>, vector<128x128xf32> -> vector<128x128xf32>
    %c0_47 = arith.constant 0 : index
    %c0_48 = arith.constant 0 : index
    %97 = vector.load %arg3[%c0_47, %c0_48] : memref<1x128xf32, #tpu.memory_space<vmem>>, vector<1x128xf32>
    %98 = vector.broadcast %97 : vector<1x128xf32> to vector<128x128xf32>
    %99 = arith.addf %96, %98 : vector<128x128xf32>
    %c0_49 = arith.constant 0 : index
    %c0_50 = arith.constant 0 : index
    %100 = vector.load %arg4[%c0_49, %c0_50] : memref<128x128xf32, #tpu.memory_space<vmem>>, vector<128x128xf32>
    tpu.vector_store %arg4[%c0_49, %c0_50], %99 {strides = array<i32>} : memref<128x128xf32, #tpu.memory_space<vmem>>, vector<128x128xf32>,
    return
  }
}

</mosaic_0001>

<llo_original>
// kernel: tpu_custom_call.1
$region0: #{tpu_custom_call.1}
  #allocation0 [shape = 'u32[]', space=smem, size = 0x4, offset = 0x4, fixed_abs, tag = 'smem constant byte address 0x4 - core index']
  #allocation1 [shape = 'u32[144,128]{1,0:T(1,128)}', space=vmem, size = 0x12000, scoped, tag = 'internal scratch']
  #allocation2 [shape = 'bf16[128,384]{1,0:T(16,128)(2,1)}', space=vmem, size = 0x18000, scoped, tag = 'scratch operand']
  #allocation3 [shape = 'bf16[128,128]{1,0:T(16,128)(2,1)}', space=vmem, size = 0x8000, scoped, tag = 'scratch operand']
  %s0 = inlined_call_operand.hbm [shape: f32[128,128], index: 0, kind: input, shape index: {}]
  %s1 = inlined_call_operand.hbm [shape: bf16[128,384], index: 1, kind: input, shape index: {}]
  %s2 = inlined_call_operand.hbm [shape: bf16[128,128], index: 2, kind: input, shape index: {}]
  %s3 = inlined_call_operand.vmem [shape: f32[1,128], index: 3, kind: input, shape index: {}]
  %s4 = inlined_call_operand.hbm [shape: f32[128,128], index: 4, kind: output, shape index: {}]
  %s5 = sld [smem:[#allocation0]]
  $region38: #{tpu_custom_call.1} parent=0
    _
  %s7 = ssub.s32 1, %s5
  %s8 = scalar_select 0, %s7, %s5
  $region1: #{tpu_custom_call.1} parent=0
    #allocation4 [shape = 'u8[65536]{0}', space=vmem, size = 0x10000, scoped, tag = 'input window, operand 0, single buffered']
    #allocation5 [shape = 's32[1]{0}', space=sflag, size = 0x4, scoped, tag = 'scoped memory for tpu_custom_call.1']
    #allocation6 [shape = 's32[1]{0}', space=sflag, size = 0x4, scoped, tag = 'scoped memory for tpu_custom_call.1']
    #allocation7 [shape = 'u8[98304]{0}', space=vmem, size = 0x18000, scoped, tag = 'input window, operand 1, single buffered']
    #allocation8 [shape = 's32[1]{0}', space=sflag, size = 0x4, scoped, tag = 'scoped memory for tpu_custom_call.1']
    #allocation9 [shape = 'u8[32768]{0}', space=vmem, size = 0x8000, scoped, tag = 'input window, operand 2, single buffered']
    #allocation10 [shape = 'u8[65536]{0}', space=vmem, size = 0x10000, scoped, tag = 'output window, operand 0, single buffered']
    %9 = vsyncpa [#allocation5], 0
    %10 = vsyncpa [#allocation8], 0
    %11 = vsyncpa [#allocation6], 0
    // Predicated region
    $region2: #{tpu_custom_call.1} parent=1 // pred_check
      _
    $region3: #{tpu_custom_call.1} parent=1 // pred_check_branch
      %13 = sbr.rel (0) target = $region5
    $region4: #{tpu_custom_call.1} parent=1 // pred_region
      %s15 = ssub.s32 2048, 2048
      %16 = vsyncadd [#allocation5], %s15
      %s17 = sshll.u32 [#allocation4], 4
      %s18 = int_to_ptr.vmem [resolvable:$true] %s17
      %23 = dma.hbm_to_vmem [thread:$0]  %s0, 2048, %s18, [#allocation5], 128, 128, 8
    $region5: #{tpu_custom_call.1} parent=1 // pred_fallthru
      _
    // Predicated region
    $region6: #{tpu_custom_call.1} parent=1 // pred_check
      _
    $region7: #{tpu_custom_call.1} parent=1 // pred_check_branch
      %25 = sbr.rel (0) target = $region9
    $region8: #{tpu_custom_call.1} parent=1 // pred_region
      %s27 = ssub.s32 3072, 3072
      %28 = vsyncadd [#allocation8], %s27
      %s29 = sshll.u32 [#allocation7], 4
      %s30 = int_to_ptr.vmem [resolvable:$true] %s29
      %35 = dma.hbm_to_vmem [thread:$0]  %s1, 3072, %s30, [#allocation8], 192, 192, 12
    $region9: #{tpu_custom_call.1} parent=1 // pred_fallthru
      _
    // Predicated region
    $region10: #{tpu_custom_call.1} parent=1 // pred_check
      _
    $region11: #{tpu_custom_call.1} parent=1 // pred_check_branch
      %37 = sbr.rel (0) target = $region13
    $region12: #{tpu_custom_call.1} parent=1 // pred_region
      %s39 = ssub.s32 1024, 1024
      %40 = vsyncadd [#allocation8], %s39
      %s41 = sshll.u32 [#allocation9], 4
      %s42 = int_to_ptr.vmem [resolvable:$true] %s41
      %47 = dma.hbm_to_vmem [thread:$0]  %s2, 1024, %s42, [#allocation8], 64, 64, 4
    $region13: #{tpu_custom_call.1} parent=1 // pred_fallthru
      _
    // Predicated region
    $region14: #{tpu_custom_call.1} parent=1 // pred_check
      _
    $region15: #{tpu_custom_call.1} parent=1 // pred_check_branch
      %49 = sbr.rel (0) target = $region17
    $region16: #{tpu_custom_call.1} parent=1 // pred_region
      _
    $region17: #{tpu_custom_call.1} parent=1 // pred_fallthru
      _
    // Predicated region
    $region18: #{tpu_custom_call.1} parent=1 // pred_check
      _
    $region19: #{tpu_custom_call.1} parent=1 // pred_check_branch
      %51 = sbr.rel (0) target = $region21
    $region20: #{tpu_custom_call.1} parent=1 // pred_region
      %52 = dma.done [#allocation5], 2048
    $region21: #{tpu_custom_call.1} parent=1 // pred_fallthru
      _
    // Predicated region
    $region22: #{tpu_custom_call.1} parent=1 // pred_check
      _
    $region23: #{tpu_custom_call.1} parent=1 // pred_check_branch
      %54 = sbr.rel (0) target = $region25
    $region24: #{tpu_custom_call.1} parent=1 // pred_region
      %55 = dma.done [#allocation8], 3072
    $region25: #{tpu_custom_call.1} parent=1 // pred_fallthru
      _
    // Predicated region
    $region26: #{tpu_custom_call.1} parent=1 // pred_check
      _
    $region27: #{tpu_custom_call.1} parent=1 // pred_check_branch
      %57 = sbr.rel (0) target = $region29
    $region28: #{tpu_custom_call.1} parent=1 // pred_region
      %58 = dma.done [#allocation8], 1024
    $region29: #{tpu_custom_call.1} parent=1 // pred_fallthru
      _
    %v60 = vld [vmem:[#allocation4] sm:$0xff]
    %v61 = vld [vmem:[#allocation4 + $0x8] sm:$0xff]
    %v62 = vld [vmem:[#allocation4 + $0x10] sm:$0xff]
    %v63 = vld [vmem:[#allocation4 + $0x18] sm:$0xff]
    %v64 = vld [vmem:[#allocation4 + $0x20] sm:$0xff]
    %v65 = vld [vmem:[#allocation4 + $0x28] sm:$0xff]
    %v66 = vld [vmem:[#allocation4 + $0x30] sm:$0xff]
    %v67 = vld [vmem:[#allocation4 + $0x38] sm:$0xff]
    %v68 = vld [vmem:[#allocation4 + $0x40] sm:$0xff]
    %v69 = vld [vmem:[#allocation4 + $0x48] sm:$0xff]
    %v70 = vld [vmem:[#allocation4 + $0x50] sm:$0xff]
    %v71 = vld [vmem:[#allocation4 + $0x58] sm:$0xff]
    %v72 = vld [vmem:[#allocation4 + $0x60] sm:$0xff]
    %v73 = vld [vmem:[#allocation4 + $0x68] sm:$0xff]
    %v74 = vld [vmem:[#allocation4 + $0x70] sm:$0xff]
    %v75 = vld [vmem:[#allocation4 + $0x78] sm:$0xff]
    %v76 = vpack.c.bf16 %v61, %v60
    %v77 = vpack.c.bf16 %v63, %v62
    %v78 = vpack.c.bf16 %v65, %v64
    %v79 = vpack.c.bf16 %v67, %v66
    %v80 = vpack.c.bf16 %v69, %v68
    %v81 = vpack.c.bf16 %v71, %v70
    %v82 = vpack.c.bf16 %v73, %v72
    %v83 = vpack.c.bf16 %v75, %v74
    %v84 = vld [vmem:[#allocation7] sm:$0xff]
    %v85 = vld [vmem:[#allocation7 + $0x8] sm:$0xf]
    %v86 = vld [vmem:[#allocation7 + $0xc] sm:$0xff]
    %v87 = vld [vmem:[#allocation7 + $0x14] sm:$0xf]
    %v88 = vld [vmem:[#allocation7 + $0x18] sm:$0xff]
    %v89 = vld [vmem:[#allocation7 + $0x20] sm:$0xf]
    %v90 = vld [vmem:[#allocation7 + $0x24] sm:$0xff]
    %v91 = vld [vmem:[#allocation7 + $0x2c] sm:$0xf]
    %v92 = vld [vmem:[#allocation7 + $0x30] sm:$0xff]
    %v93 = vld [vmem:[#allocation7 + $0x38] sm:$0xf]
    %v94 = vld [vmem:[#allocation7 + $0x3c] sm:$0xff]
    %v95 = vld [vmem:[#allocation7 + $0x44] sm:$0xf]
    %v96 = vld [vmem:[#allocation7 + $0x48] sm:$0xff]
    %v97 = vld [vmem:[#allocation7 + $0x50] sm:$0xf]
    %v98 = vld [vmem:[#allocation7 + $0x54] sm:$0xff]
    %v99 = vld [vmem:[#allocation7 + $0x5c] sm:$0xf]
    %v100 = vld [vmem:[#allocation7 + $0x60] sm:$0xff]
    %v101 = vld [vmem:[#allocation7 + $0x68] sm:$0xf]
    %v102 = vld [vmem:[#allocation7 + $0x6c] sm:$0xff]
    %v103 = vld [vmem:[#allocation7 + $0x74] sm:$0xf]
    %v104 = vld [vmem:[#allocation7 + $0x78] sm:$0xff]
    %v105 = vld [vmem:[#allocation7 + $0x80] sm:$0xf]
    %v106 = vld [vmem:[#allocation7 + $0x84] sm:$0xff]
    %v107 = vld [vmem:[#allocation7 + $0x8c] sm:$0xf]
    %v108 = vld [vmem:[#allocation7 + $0x90] sm:$0xff]
    %v109 = vld [vmem:[#allocation7 + $0x98] sm:$0xf]
    %v110 = vld [vmem:[#allocation7 + $0x9c] sm:$0xff]
    %v111 = vld [vmem:[#allocation7 + $0xa4] sm:$0xf]
    %v112 = vld [vmem:[#allocation7 + $0xa8] sm:$0xff]
    %v113 = vld [vmem:[#allocation7 + $0xb0] sm:$0xf]
    %v114 = vld [vmem:[#allocation7 + $0xb4] sm:$0xff]
    %v115 = vld [vmem:[#allocation7 + $0xbc] sm:$0xf]
    %v148 = vunpack.c.l.b16 %v84
    %v149 = vunpack.c.h.b16 %v84
    %v150 = vunpack.c.l.b16 %v85
    %v151 = vunpack.c.l.b16 %v86
    %v152 = vunpack.c.h.b16 %v86
    %v153 = vunpack.c.l.b16 %v87
    %v154 = vunpack.c.l.b16 %v88
    %v155 = vunpack.c.h.b16 %v88
    %v156 = vunpack.c.l.b16 %v89
    %v157 = vunpack.c.l.b16 %v90
    %v158 = vunpack.c.h.b16 %v90
    %v159 = vunpack.c.l.b16 %v91
    %v160 = vunpack.c.l.b16 %v92
    %v161 = vunpack.c.h.b16 %v92
    %v162 = vunpack.c.l.b16 %v93
    %v163 = vunpack.c.l.b16 %v94
    %v164 = vunpack.c.h.b16 %v94
    %v165 = vunpack.c.l.b16 %v95
    %v166 = vunpack.c.l.b16 %v96
    %v167 = vunpack.c.h.b16 %v96
    %v168 = vunpack.c.l.b16 %v97
    %v169 = vunpack.c.l.b16 %v98
    %v170 = vunpack.c.h.b16 %v98
    %v171 = vunpack.c.l.b16 %v99
    %v172 = vunpack.c.l.b16 %v100
    %v173 = vunpack.c.h.b16 %v100
    %v174 = vunpack.c.l.b16 %v101
    %v175 = vunpack.c.l.b16 %v102
    %v176 = vunpack.c.h.b16 %v102
    %v177 = vunpack.c.l.b16 %v103
    %v178 = vunpack.c.l.b16 %v104
    %v179 = vunpack.c.h.b16 %v104
    %v180 = vunpack.c.l.b16 %v105
    %v181 = vunpack.c.l.b16 %v106
    %v182 = vunpack.c.h.b16 %v106
    %v183 = vunpack.c.l.b16 %v107
    %v184 = vunpack.c.l.b16 %v108
    %v185 = vunpack.c.h.b16 %v108
    %v186 = vunpack.c.l.b16 %v109
    %v187 = vunpack.c.l.b16 %v110
    %v188 = vunpack.c.h.b16 %v110
    %v189 = vunpack.c.l.b16 %v111
    %v190 = vunpack.c.l.b16 %v112
    %v191 = vunpack.c.h.b16 %v112
    %v192 = vunpack.c.l.b16 %v113
    %v193 = vunpack.c.l.b16 %v114
    %v194 = vunpack.c.h.b16 %v114
    %v195 = vunpack.c.l.b16 %v115
    %v196 = vpack.c.b16 %v151, %v148
    %v197 = vpack.c.b16 %v152, %v149
    %v198 = vpack.c.b16 %v153, %v150
    %v199 = vpack.c.b16 %v157, %v154
    %v200 = vpack.c.b16 %v158, %v155
    %v201 = vpack.c.b16 %v159, %v156
    %v202 = vpack.c.b16 %v163, %v160
    %v203 = vpack.c.b16 %v164, %v161
    %v204 = vpack.c.b16 %v165, %v162
    %v205 = vpack.c.b16 %v169, %v166
    %v206 = vpack.c.b16 %v170, %v167
    %v207 = vpack.c.b16 %v171, %v168
    %v208 = vpack.c.b16 %v175, %v172
    %v209 = vpack.c.b16 %v176, %v173
    %v210 = vpack.c.b16 %v177, %v174
    %v211 = vpack.c.b16 %v181, %v178
    %v212 = vpack.c.b16 %v182, %v179
    %v213 = vpack.c.b16 %v183, %v180
    %v214 = vpack.c.b16 %v187, %v184
    %v215 = vpack.c.b16 %v188, %v185
    %v216 = vpack.c.b16 %v189, %v186
    %v217 = vpack.c.b16 %v193, %v190
    %v218 = vpack.c.b16 %v194, %v191
    %v219 = vpack.c.b16 %v195, %v192
    %244 = vmatprep.subr.bf16.mxu0 %v197
    %245 = vmatpush1.bf16.msra.mxu0 %v196
    %246 = vmatprep.subr.bf16.mxu0 %v200
    %247 = vmatpush1.bf16.msra.mxu0 %v199
    %248 = vmatprep.subr.bf16.mxu0 %v203
    %249 = vmatpush1.bf16.msra.mxu0 %v202
    %250 = vmatprep.subr.bf16.mxu0 %v206
    %251 = vmatpush1.bf16.msra.mxu0 %v205
    %252 = vmatprep.subr.bf16.mxu0 %v209
    %253 = vmatpush1.bf16.msra.mxu0 %v208
    %254 = vmatprep.subr.bf16.mxu0 %v212
    %255 = vmatpush1.bf16.msra.mxu0 %v211
    %256 = vmatprep.subr.bf16.mxu0 %v215
    %257 = vmatpush1.bf16.msra.mxu0 %v214
    %258 = vmatprep.subr.bf16.mxu0 %v218
    %259 = vmatpush1.bf16.msra.mxu0 %v217
    %260 = vmatprep.subr.bf16.mxu0 0
    %261 = vmatpush1.bf16.msra.mxu0 0
    %262 = vmatprep.subr.bf16.mxu0 0
    %263 = vmatpush1.bf16.msra.mxu0 0
    %264 = vmatprep.subr.bf16.mxu0 0
    %265 = vmatpush1.bf16.msra.mxu0 0
    %266 = vmatprep.subr.bf16.mxu0 0
    %267 = vmatpush1.bf16.msra.mxu0 0
    %268 = vmatprep.subr.bf16.mxu0 0
    %269 = vmatpush1.bf16.msra.mxu0 0
    %270 = vmatprep.subr.bf16.mxu0 0
    %271 = vmatpush1.bf16.msra.mxu0 0
    %272 = vmatprep.subr.bf16.mxu0 0
    %273 = vmatpush1.bf16.msra.mxu0 0
    %274 = vmatprep.subr.bf16.mxu0 0
    %275 = vmatpush1.bf16.msra.mxu0 0
    %276 = vmatprep.mubr.bf16.mxu0 0
    %277 = vmatmul.mubr.bf16.gmra.mrb[0].mxu0 %v76
    %v278 = vpop.f32.mrb[0].mxu0
    %v279 = vadd.f32 0.0, %v278
    %v280 = vpop.f32.mrb[0].mxu0
    %v281 = vadd.f32 0.0, %v280
    %v282 = vpop.f32.mrb[0].mxu0
    %v283 = vadd.f32 0.0, %v282
    %v284 = vpop.f32.mrb[0].mxu0
    %v285 = vadd.f32 0.0, %v284
    %286 = vmatprep.mubr.bf16.mxu0 0
    %287 = vmatmul.mubr.bf16.gmra.mrb[0].mxu0 %v77
    %v288 = vpop.f32.mrb[0].mxu0
    %v289 = vadd.f32 0.0, %v288
    %v290 = vpop.f32.mrb[0].mxu0
    %v291 = vadd.f32 0.0, %v290
    %v292 = vpop.f32.mrb[0].mxu0
    %v293 = vadd.f32 0.0, %v292
    %v294 = vpop.f32.mrb[0].mxu0
    %v295 = vadd.f32 0.0, %v294
    %296 = vmatprep.mubr.bf16.mxu0 0
    %297 = vmatmul.mubr.bf16.gmra.mrb[0].mxu0 %v78
    %v298 = vpop.f32.mrb[0].mxu0
    %v299 = vadd.f32 0.0, %v298
    %v300 = vpop.f32.mrb[0].mxu0
    %v301 = vadd.f32 0.0, %v300
    %v302 = vpop.f32.mrb[0].mxu0
    %v303 = vadd.f32 0.0, %v302
    %v304 = vpop.f32.mrb[0].mxu0
    %v305 = vadd.f32 0.0, %v304
    %306 = vmatprep.mubr.bf16.mxu0 0
    %307 = vmatmul.mubr.bf16.gmra.mrb[0].mxu0 %v79
    %v308 = vpop.f32.mrb[0].mxu0
    %v309 = vadd.f32 0.0, %v308
    %v310 = vpop.f32.mrb[0].mxu0
    %v311 = vadd.f32 0.0, %v310
    %v312 = vpop.f32.mrb[0].mxu0
    %v313 = vadd.f32 0.0, %v312
    %v314 = vpop.f32.mrb[0].mxu0
    %v315 = vadd.f32 0.0, %v314
    %316 = vmatprep.mubr.bf16.mxu0 0
    %317 = vmatmul.mubr.bf16.gmra.mrb[0].mxu0 %v80
    %v318 = vpop.f32.mrb[0].mxu0
    %v319 = vadd.f32 0.0, %v318
    %v320 = vpop.f32.mrb[0].mxu0
    %v321 = vadd.f32 0.0, %v320
    %v322 = vpop.f32.mrb[0].mxu0
    %v323 = vadd.f32 0.0, %v322
    %v324 = vpop.f32.mrb[0].mxu0
    %v325 = vadd.f32 0.0, %v324
    %326 = vmatprep.mubr.bf16.mxu0 0
    %327 = vmatmul.mubr.bf16.gmra.mrb[0].mxu0 %v81
    %v328 = vpop.f32.mrb[0].mxu0
    %v329 = vadd.f32 0.0, %v328
    %v330 = vpop.f32.mrb[0].mxu0
    %v331 = vadd.f32 0.0, %v330
    %v332 = vpop.f32.mrb[0].mxu0
    %v333 = vadd.f32 0.0, %v332
    %v334 = vpop.f32.mrb[0].mxu0
    %v335 = vadd.f32 0.0, %v334
    %336 = vmatprep.mubr.bf16.mxu0 0
    %337 = vmatmul.mubr.bf16.gmra.mrb[0].mxu0 %v82
    %v338 = vpop.f32.mrb[0].mxu0
    %v339 = vadd.f32 0.0, %v338
    %v340 = vpop.f32.mrb[0].mxu0
    %v341 = vadd.f32 0.0, %v340
    %v342 = vpop.f32.mrb[0].mxu0
    %v343 = vadd.f32 0.0, %v342
    %v344 = vpop.f32.mrb[0].mxu0
    %v345 = vadd.f32 0.0, %v344
    %346 = vmatprep.mubr.bf16.mxu0 0
    %347 = vmatmul.mubr.bf16.gmra.mrb[0].mxu0 %v83
    %v348 = vpop.f32.mrb[0].mxu0
    %v349 = vadd.f32 0.0, %v348
    %v350 = vpop.f32.mrb[0].mxu0
    %v351 = vadd.f32 0.0, %v350
    %v352 = vpop.f32.mrb[0].mxu0
    %v353 = vadd.f32 0.0, %v352
    %v354 = vpop.f32.mrb[0].mxu0
    %v355 = vadd.f32 0.0, %v354
    %356 = vdwg.mxu0
    %357 = vmatprep.subr.bf16.mxu0 0
    %358 = vmatpush1.bf16.msra.mxu0 %v198
    %359 = vmatprep.subr.bf16.mxu0 0
    %360 = vmatpush1.bf16.msra.mxu0 %v201
    %361 = vmatprep.subr.bf16.mxu0 0
    %362 = vmatpush1.bf16.msra.mxu0 %v204
    %363 = vmatprep.subr.bf16.mxu0 0
    %364 = vmatpush1.bf16.msra.mxu0 %v207
    %365 = vmatprep.subr.bf16.mxu0 0
    %366 = vmatpush1.bf16.msra.mxu0 %v210
    %367 = vmatprep.subr.bf16.mxu0 0
    %368 = vmatpush1.bf16.msra.mxu0 %v213
    %369 = vmatprep.subr.bf16.mxu0 0
    %370 = vmatpush1.bf16.msra.mxu0 %v216
    %371 = vmatprep.subr.bf16.mxu0 0
    %372 = vmatpush1.bf16.msra.mxu0 %v219
    %373 = vmatprep.subr.bf16.mxu0 0
    %374 = vmatpush1.bf16.msra.mxu0 0
    %375 = vmatprep.subr.bf16.mxu0 0
    %376 = vmatpush1.bf16.msra.mxu0 0
    %377 = vmatprep.subr.bf16.mxu0 0
    %378 = vmatpush1.bf16.msra.mxu0 0
    %379 = vmatprep.subr.bf16.mxu0 0
    %380 = vmatpush1.bf16.msra.mxu0 0
    %381 = vmatprep.subr.bf16.mxu0 0
    %382 = vmatpush1.bf16.msra.mxu0 0
    %383 = vmatprep.subr.bf16.mxu0 0
    %384 = vmatpush1.bf16.msra.mxu0 0
    %385 = vmatprep.subr.bf16.mxu0 0
    %386 = vmatpush1.bf16.msra.mxu0 0
    %387 = vmatprep.subr.bf16.mxu0 0
    %388 = vmatpush1.bf16.msra.mxu0 0
    %389 = vmatprep.mubr.bf16.mxu0 0
    %390 = vmatmul.mubr.bf16.gmra.mrb[0].mxu0 %v76
    %v391 = vpop.f32.mrb[0].mxu0
    %v392 = vadd.f32 0.0, %v391
    %v393 = vpop.f32.mrb[0].mxu0
    %v394 = vpop.f32.mrb[0].mxu0
    %v395 = vadd.f32 0.0, %v394
    %v396 = vpop.f32.mrb[0].mxu0
    %397 = vmatprep.mubr.bf16.mxu0 0
    %398 = vmatmul.mubr.bf16.gmra.mrb[0].mxu0 %v77
    %v399 = vpop.f32.mrb[0].mxu0
    %v400 = vadd.f32 0.0, %v399
    %v401 = vpop.f32.mrb[0].mxu0
    %v402 = vpop.f32.mrb[0].mxu0
    %v403 = vadd.f32 0.0, %v402
    %v404 = vpop.f32.mrb[0].mxu0
    %405 = vmatprep.mubr.bf16.mxu0 0
    %406 = vmatmul.mubr.bf16.gmra.mrb[0].mxu0 %v78
    %v407 = vpop.f32.mrb[0].mxu0
    %v408 = vadd.f32 0.0, %v407
    %v409 = vpop.f32.mrb[0].mxu0
    %v410 = vpop.f32.mrb[0].mxu0
    %v411 = vadd.f32 0.0, %v410
    %v412 = vpop.f32.mrb[0].mxu0
    %413 = vmatprep.mubr.bf16.mxu0 0
    %414 = vmatmul.mubr.bf16.gmra.mrb[0].mxu0 %v79
    %v415 = vpop.f32.mrb[0].mxu0
    %v416 = vadd.f32 0.0, %v415
    %v417 = vpop.f32.mrb[0].mxu0
    %v418 = vpop.f32.mrb[0].mxu0
    %v419 = vadd.f32 0.0, %v418
    %v420 = vpop.f32.mrb[0].mxu0
    %421 = vmatprep.mubr.bf16.mxu0 0
    %422 = vmatmul.mubr.bf16.gmra.mrb[0].mxu0 %v80
    %v423 = vpop.f32.mrb[0].mxu0
    %v424 = vadd.f32 0.0, %v423
    %v425 = vpop.f32.mrb[0].mxu0
    %v426 = vpop.f32.mrb[0].mxu0
    %v427 = vadd.f32 0.0, %v426
    %v428 = vpop.f32.mrb[0].mxu0
    %429 = vmatprep.mubr.bf16.mxu0 0
    %430 = vmatmul.mubr.bf16.gmra.mrb[0].mxu0 %v81
    %v431 = vpop.f32.mrb[0].mxu0
    %v432 = vadd.f32 0.0, %v431
    %v433 = vpop.f32.mrb[0].mxu0
    %v434 = vpop.f32.mrb[0].mxu0
    %v435 = vadd.f32 0.0, %v434
    %v436 = vpop.f32.mrb[0].mxu0
    %437 = vmatprep.mubr.bf16.mxu0 0
    %438 = vmatmul.mubr.bf16.gmra.mrb[0].mxu0 %v82
    %v439 = vpop.f32.mrb[0].mxu0
    %v440 = vadd.f32 0.0, %v439
    %v441 = vpop.f32.mrb[0].mxu0
    %v442 = vpop.f32.mrb[0].mxu0
    %v443 = vadd.f32 0.0, %v442
    %v444 = vpop.f32.mrb[0].mxu0
    %445 = vmatprep.mubr.bf16.mxu0 0
    %446 = vmatmul.mubr.bf16.gmra.mrb[0].mxu0 %v83
    %v447 = vpop.f32.mrb[0].mxu0
    %v448 = vadd.f32 0.0, %v447
    %v449 = vpop.f32.mrb[0].mxu0
    %v450 = vpop.f32.mrb[0].mxu0
    %v451 = vadd.f32 0.0, %v450
    %v452 = vpop.f32.mrb[0].mxu0
    %453 = vdwg.mxu0
    %v454 = vpack.c.bf16 %v283, %v279
    %v455 = vpack.c.bf16 %v285, %v281
    %v456 = vpack.c.bf16 %v395, %v392
    %v457 = vpack.c.bf16 %v293, %v289
    %v458 = vpack.c.bf16 %v295, %v291
    %v459 = vpack.c.bf16 %v403, %v400
    %v460 = vpack.c.bf16 %v303, %v299
    %v461 = vpack.c.bf16 %v305, %v301
    %v462 = vpack.c.bf16 %v411, %v408
    %v463 = vpack.c.bf16 %v313, %v309
    %v464 = vpack.c.bf16 %v315, %v311
    %v465 = vpack.c.bf16 %v419, %v416
    %v466 = vpack.c.bf16 %v323, %v319
    %v467 = vpack.c.bf16 %v325, %v321
    %v468 = vpack.c.bf16 %v427, %v424
    %v469 = vpack.c.bf16 %v333, %v329
    %v470 = vpack.c.bf16 %v335, %v331
    %v471 = vpack.c.bf16 %v435, %v432
    %v472 = vpack.c.bf16 %v343, %v339
    %v473 = vpack.c.bf16 %v345, %v341
    %v474 = vpack.c.bf16 %v443, %v440
    %v475 = vpack.c.bf16 %v353, %v349
    %v476 = vpack.c.bf16 %v355, %v351
    %v477 = vpack.c.bf16 %v451, %v448
    %478 = vst [vmem:[#allocation2] sm:$0xff] %v454
    %479 = vst [vmem:[#allocation2 + $0x8] sm:$0xff] %v455
    %480 = vst [vmem:[#allocation2 + $0x10] sm:$0xff] %v456
    %481 = vst [vmem:[#allocation2 + $0x18] sm:$0xff] %v457
    %482 = vst [vmem:[#allocation2 + $0x20] sm:$0xff] %v458
    %483 = vst [vmem:[#allocation2 + $0x28] sm:$0xff] %v459
    %484 = vst [vmem:[#allocation2 + $0x30] sm:$0xff] %v460
    %485 = vst [vmem:[#allocation2 + $0x38] sm:$0xff] %v461
    %486 = vst [vmem:[#allocation2 + $0x40] sm:$0xff] %v462
    %487 = vst [vmem:[#allocation2 + $0x48] sm:$0xff] %v463
    %488 = vst [vmem:[#allocation2 + $0x50] sm:$0xff] %v464
    %489 = vst [vmem:[#allocation2 + $0x58] sm:$0xff] %v465
    %490 = vst [vmem:[#allocation2 + $0x60] sm:$0xff] %v466
    %491 = vst [vmem:[#allocation2 + $0x68] sm:$0xff] %v467
    %492 = vst [vmem:[#allocation2 + $0x70] sm:$0xff] %v468
    %493 = vst [vmem:[#allocation2 + $0x78] sm:$0xff] %v469
    %494 = vst [vmem:[#allocation2 + $0x80] sm:$0xff] %v470
    %495 = vst [vmem:[#allocation2 + $0x88] sm:$0xff] %v471
    %496 = vst [vmem:[#allocation2 + $0x90] sm:$0xff] %v472
    %497 = vst [vmem:[#allocation2 + $0x98] sm:$0xff] %v473
    %498 = vst [vmem:[#allocation2 + $0xa0] sm:$0xff] %v474
    %499 = vst [vmem:[#allocation2 + $0xa8] sm:$0xff] %v475
    %500 = vst [vmem:[#allocation2 + $0xb0] sm:$0xff] %v476
    %501 = vst [vmem:[#allocation2 + $0xb8] sm:$0xff] %v477
    %v502 = vld [vmem:[#allocation2] sm:$0xff]
    %v503 = vld [vmem:[#allocation2 + $0x18] sm:$0xff]
    %v504 = vld [vmem:[#allocation2 + $0x30] sm:$0xff]
    %v505 = vld [vmem:[#allocation2 + $0x48] sm:$0xff]
    %v506 = vld [vmem:[#allocation2 + $0x60] sm:$0xff]
    %v507 = vld [vmem:[#allocation2 + $0x78] sm:$0xff]
    %v508 = vld [vmem:[#allocation2 + $0x90] sm:$0xff]
    %v509 = vld [vmem:[#allocation2 + $0xa8] sm:$0xff]
    %v510 = vld [vmem:[#allocation2 + $0x8] sm:$0xff]
    %v511 = vld [vmem:[#allocation2 + $0x20] sm:$0xff]
    %v512 = vld [vmem:[#allocation2 + $0x38] sm:$0xff]
    %v513 = vld [vmem:[#allocation2 + $0x50] sm:$0xff]
    %v514 = vld [vmem:[#allocation2 + $0x68] sm:$0xff]
    %v515 = vld [vmem:[#allocation2 + $0x80] sm:$0xff]
    %v516 = vld [vmem:[#allocation2 + $0x98] sm:$0xff]
    %v517 = vld [vmem:[#allocation2 + $0xb0] sm:$0xff]
    %v518 = vld [vmem:[#allocation2 + $0x10] sm:$0xff]
    %v519 = vld [vmem:[#allocation2 + $0x28] sm:$0xff]
    %v520 = vld [vmem:[#allocation2 + $0x40] sm:$0xff]
    %v521 = vld [vmem:[#allocation2 + $0x58] sm:$0xff]
    %v522 = vld [vmem:[#allocation2 + $0x70] sm:$0xff]
    %v523 = vld [vmem:[#allocation2 + $0x88] sm:$0xff]
    %v524 = vld [vmem:[#allocation2 + $0xa0] sm:$0xff]
    %v525 = vld [vmem:[#allocation2 + $0xb8] sm:$0xff]
    %vm526 = vcmask 261120
    %v528 = vsel %vm526, %v502, 0
    %v531 = vsel %vm526, %v503, 0
    %v534 = vsel %vm526, %v504, 0
    %v537 = vsel %vm526, %v505, 0
    %v540 = vsel %vm526, %v510, 0
    %v543 = vsel %vm526, %v511, 0
    %v546 = vsel %vm526, %v512, 0
    %v549 = vsel %vm526, %v513, 0
    %551 = vmatprep.subr.bf16.mxu0 0
    %552 = vmatpush1.bf16.xpose.msra.mxu0 %v540
    %553 = vmatprep.subr.bf16.mxu0 0
    %554 = vmatpush1.bf16.xpose.msra.mxu0 %v543
    %555 = vmatprep.subr.bf16.mxu0 0
    %556 = vmatpush1.bf16.xpose.msra.mxu0 %v546
    %557 = vmatprep.subr.bf16.mxu0 0
    %558 = vmatpush1.bf16.xpose.msra.mxu0 %v549
    %559 = vmatprep.subr.bf16.mxu0 0
    %560 = vmatpush1.bf16.xpose.msra.mxu0 0
    %561 = vmatprep.subr.bf16.mxu0 0
    %562 = vmatpush1.bf16.xpose.msra.mxu0 0
    %563 = vmatprep.subr.bf16.mxu0 0
    %564 = vmatpush1.bf16.xpose.msra.mxu0 0
    %565 = vmatprep.subr.bf16.mxu0 0
    %566 = vmatpush1.bf16.xpose.msra.mxu0 0
    %567 = vmatprep.subr.bf16.mxu0 0
    %568 = vmatpush1.bf16.xpose.msra.mxu0 0
    %569 = vmatprep.subr.bf16.mxu0 0
    %570 = vmatpush1.bf16.xpose.msra.mxu0 0
    %571 = vmatprep.subr.bf16.mxu0 0
    %572 = vmatpush1.bf16.xpose.msra.mxu0 0
    %573 = vmatprep.subr.bf16.mxu0 0
    %574 = vmatpush1.bf16.xpose.msra.mxu0 0
    %575 = vmatprep.subr.bf16.mxu0 0
    %576 = vmatpush1.bf16.xpose.msra.mxu0 0
    %577 = vmatprep.subr.bf16.mxu0 0
    %578 = vmatpush1.bf16.xpose.msra.mxu0 0
    %579 = vmatprep.subr.bf16.mxu0 0
    %580 = vmatpush1.bf16.xpose.msra.mxu0 0
    %581 = vmatprep.subr.bf16.mxu0 0
    %582 = vmatpush1.bf16.xpose.msra.mxu0 0
    %583 = vmatprep.mubr.bf16.mxu0 0
    %584 = vmatmul.mubr.bf16.gmra.mrb[0].mxu0 %v528
    %v585 = vpop.f32.mrb[0].mxu0
    %v586 = vadd.f32 0.0, %v585
    %v587 = vpop.f32.mrb[0].mxu0
    %v588 = vpop.f32.mrb[0].mxu0
    %v589 = vadd.f32 0.0, %v588
    %v590 = vpop.f32.mrb[0].mxu0
    %591 = vmatprep.mubr.bf16.mxu0 0
    %592 = vmatmul.mubr.bf16.gmra.mrb[0].mxu0 %v531
    %v593 = vpop.f32.mrb[0].mxu0
    %v594 = vadd.f32 0.0, %v593
    %v595 = vpop.f32.mrb[0].mxu0
    %v596 = vpop.f32.mrb[0].mxu0
    %v597 = vadd.f32 0.0, %v596
    %v598 = vpop.f32.mrb[0].mxu0
    %599 = vmatprep.mubr.bf16.mxu0 0
    %600 = vmatmul.mubr.bf16.gmra.mrb[0].mxu0 %v534
    %v601 = vpop.f32.mrb[0].mxu0
    %v602 = vadd.f32 0.0, %v601
    %v603 = vpop.f32.mrb[0].mxu0
    %v604 = vpop.f32.mrb[0].mxu0
    %v605 = vadd.f32 0.0, %v604
    %v606 = vpop.f32.mrb[0].mxu0
    %607 = vmatprep.mubr.bf16.mxu0 0
    %608 = vmatmul.mubr.bf16.gmra.mrb[0].mxu0 %v537
    %v609 = vpop.f32.mrb[0].mxu0
    %v610 = vadd.f32 0.0, %v609
    %v611 = vpop.f32.mrb[0].mxu0
    %v612 = vpop.f32.mrb[0].mxu0
    %v613 = vadd.f32 0.0, %v612
    %v614 = vpop.f32.mrb[0].mxu0
    %615 = vdwg.mxu0
    %v617 = vsel %vm526, %v506, 0
    %v620 = vsel %vm526, %v507, 0
    %v623 = vsel %vm526, %v508, 0
    %v626 = vsel %vm526, %v509, 0
    %v629 = vsel %vm526, %v514, 0
    %v632 = vsel %vm526, %v515, 0
    %v635 = vsel %vm526, %v516, 0
    %v638 = vsel %vm526, %v517, 0
    %640 = vmatprep.subr.bf16.mxu0 0
    %641 = vmatpush1.bf16.xpose.msra.mxu0 %v629
    %642 = vmatprep.subr.bf16.mxu0 0
    %643 = vmatpush1.bf16.xpose.msra.mxu0 %v632
    %644 = vmatprep.subr.bf16.mxu0 0
    %645 = vmatpush1.bf16.xpose.msra.mxu0 %v635
    %646 = vmatprep.subr.bf16.mxu0 0
    %647 = vmatpush1.bf16.xpose.msra.mxu0 %v638
    %648 = vmatprep.subr.bf16.mxu0 0
    %649 = vmatpush1.bf16.xpose.msra.mxu0 0
    %650 = vmatprep.subr.bf16.mxu0 0
    %651 = vmatpush1.bf16.xpose.msra.mxu0 0
    %652 = vmatprep.subr.bf16.mxu0 0
    %653 = vmatpush1.bf16.xpose.msra.mxu0 0
    %654 = vmatprep.subr.bf16.mxu0 0
    %655 = vmatpush1.bf16.xpose.msra.mxu0 0
    %656 = vmatprep.subr.bf16.mxu0 0
    %657 = vmatpush1.bf16.xpose.msra.mxu0 0
    %658 = vmatprep.subr.bf16.mxu0 0
    %659 = vmatpush1.bf16.xpose.msra.mxu0 0
    %660 = vmatprep.subr.bf16.mxu0 0
    %661 = vmatpush1.bf16.xpose.msra.mxu0 0
    %662 = vmatprep.subr.bf16.mxu0 0
    %663 = vmatpush1.bf16.xpose.msra.mxu0 0
    %664 = vmatprep.subr.bf16.mxu0 0
    %665 = vmatpush1.bf16.xpose.msra.mxu0 0
    %666 = vmatprep.subr.bf16.mxu0 0
    %667 = vmatpush1.bf16.xpose.msra.mxu0 0
    %668 = vmatprep.subr.bf16.mxu0 0
    %669 = vmatpush1.bf16.xpose.msra.mxu0 0
    %670 = vmatprep.subr.bf16.mxu0 0
    %671 = vmatpush1.bf16.xpose.msra.mxu0 0
    %672 = vmatprep.mubr.bf16.mxu0 0
    %673 = vmatmul.mubr.bf16.gmra.mrb[0].mxu0 %v617
    %v674 = vpop.f32.mrb[0].mxu0
    %v675 = vadd.f32 0.0, %v674
    %v676 = vpop.f32.mrb[0].mxu0
    %v677 = vpop.f32.mrb[0].mxu0
    %v678 = vadd.f32 0.0, %v677
    %v679 = vpop.f32.mrb[0].mxu0
    %680 = vmatprep.mubr.bf16.mxu0 0
    %681 = vmatmul.mubr.bf16.gmra.mrb[0].mxu0 %v620
    %v682 = vpop.f32.mrb[0].mxu0
    %v683 = vadd.f32 0.0, %v682
    %v684 = vpop.f32.mrb[0].mxu0
    %v685 = vpop.f32.mrb[0].mxu0
    %v686 = vadd.f32 0.0, %v685
    %v687 = vpop.f32.mrb[0].mxu0
    %688 = vmatprep.mubr.bf16.mxu0 0
    %689 = vmatmul.mubr.bf16.gmra.mrb[0].mxu0 %v623
    %v690 = vpop.f32.mrb[0].mxu0
    %v691 = vadd.f32 0.0, %v690
    %v692 = vpop.f32.mrb[0].mxu0
    %v693 = vpop.f32.mrb[0].mxu0
    %v694 = vadd.f32 0.0, %v693
    %v695 = vpop.f32.mrb[0].mxu0
    %696 = vmatprep.mubr.bf16.mxu0 0
    %697 = vmatmul.mubr.bf16.gmra.mrb[0].mxu0 %v626
    %v698 = vpop.f32.mrb[0].mxu0
    %v699 = vadd.f32 0.0, %v698
    %v700 = vpop.f32.mrb[0].mxu0
    %v701 = vpop.f32.mrb[0].mxu0
    %v702 = vadd.f32 0.0, %v701
    %v703 = vpop.f32.mrb[0].mxu0
    %704 = vdwg.mxu0
    %vm705 = vcmask 523264
    %v706 = vsel %vm705, %v586, -inf
    %707 = vmax.xlane.f32.xlu0 %v706
    %v708 = vpop.xlane.xlu0 %707
    %v709 = vsel %vm705, %v589, -inf
    %710 = vmax.xlane.f32.xlu0 %v709
    %v711 = vpop.xlane.xlu0 %710
    %v712 = vsel %vm705, %v594, -inf
    %713 = vmax.xlane.f32.xlu0 %v712
    %v714 = vpop.xlane.xlu0 %713
    %v715 = vsel %vm705, %v597, -inf
    %716 = vmax.xlane.f32.xlu0 %v715
    %v717 = vpop.xlane.xlu0 %716
    %v718 = vsel %vm705, %v602, -inf
    %719 = vmax.xlane.f32.xlu0 %v718
    %v720 = vpop.xlane.xlu0 %719
    %v721 = vsel %vm705, %v605, -inf
    %722 = vmax.xlane.f32.xlu0 %v721
    %v723 = vpop.xlane.xlu0 %722
    %v724 = vsel %vm705, %v610, -inf
    %725 = vmax.xlane.f32.xlu0 %v724
    %v726 = vpop.xlane.xlu0 %725
    %v727 = vsel %vm705, %v613, -inf
    %728 = vmax.xlane.f32.xlu0 %v727
    %v729 = vpop.xlane.xlu0 %728
    %v730 = vsel %vm705, %v675, -inf
    %731 = vmax.xlane.f32.xlu0 %v730
    %v732 = vpop.xlane.xlu0 %731
    %v733 = vsel %vm705, %v678, -inf
    %734 = vmax.xlane.f32.xlu0 %v733
    %v735 = vpop.xlane.xlu0 %734
    %v736 = vsel %vm705, %v683, -inf
    %737 = vmax.xlane.f32.xlu0 %v736
    %v738 = vpop.xlane.xlu0 %737
    %v739 = vsel %vm705, %v686, -inf
    %740 = vmax.xlane.f32.xlu0 %v739
    %v741 = vpop.xlane.xlu0 %740
    %v742 = vsel %vm705, %v691, -inf
    %743 = vmax.xlane.f32.xlu0 %v742
    %v744 = vpop.xlane.xlu0 %743
    %v745 = vsel %vm705, %v694, -inf
    %746 = vmax.xlane.f32.xlu0 %v745
    %v747 = vpop.xlane.xlu0 %746
    %v748 = vsel %vm705, %v699, -inf
    %749 = vmax.xlane.f32.xlu0 %v748
    %v750 = vpop.xlane.xlu0 %749
    %v751 = vsel %vm705, %v702, -inf
    %752 = vmax.xlane.f32.xlu0 %v751
    %v753 = vpop.xlane.xlu0 %752
    %v754 = vsub.f32 %v586, %v708
    %v755 = vsub.f32 %v589, %v711
    %v756 = vsub.f32 %v594, %v714
    %v757 = vsub.f32 %v597, %v717
    %v758 = vsub.f32 %v602, %v720
    %v759 = vsub.f32 %v605, %v723
    %v760 = vsub.f32 %v610, %v726
    %v761 = vsub.f32 %v613, %v729
    %v762 = vsub.f32 %v675, %v732
    %v763 = vsub.f32 %v678, %v735
    %v764 = vsub.f32 %v683, %v738
    %v765 = vsub.f32 %v686, %v741
    %v766 = vsub.f32 %v691, %v744
    %v767 = vsub.f32 %v694, %v747
    %v768 = vsub.f32 %v699, %v750
    %v769 = vsub.f32 %v702, %v753
    %v770 = vmul.f32 %v754, 1.442695
    %v771 = vpow.pop %v770
    %v772 = vmul.f32 %v755, 1.442695
    %v773 = vpow.pop %v772
    %v774 = vmul.f32 %v756, 1.442695
    %v775 = vpow.pop %v774
    %v776 = vmul.f32 %v757, 1.442695
    %v777 = vpow.pop %v776
    %v778 = vmul.f32 %v758, 1.442695
    %v779 = vpow.pop %v778
    %v780 = vmul.f32 %v759, 1.442695
    %v781 = vpow.pop %v780
    %v782 = vmul.f32 %v760, 1.442695
    %v783 = vpow.pop %v782
    %v784 = vmul.f32 %v761, 1.442695
    %v785 = vpow.pop %v784
    %v786 = vmul.f32 %v762, 1.442695
    %v787 = vpow.pop %v786
    %v788 = vmul.f32 %v763, 1.442695
    %v789 = vpow.pop %v788
    %v790 = vmul.f32 %v764, 1.442695
    %v791 = vpow.pop %v790
    %v792 = vmul.f32 %v765, 1.442695
    %v793 = vpow.pop %v792
    %v794 = vmul.f32 %v766, 1.442695
    %v795 = vpow.pop %v794
    %v796 = vmul.f32 %v767, 1.442695
    %v797 = vpow.pop %v796
    %v798 = vmul.f32 %v768, 1.442695
    %v799 = vpow.pop %v798
    %v800 = vmul.f32 %v769, 1.442695
    %v801 = vpow.pop %v800
    %v802 = vsel %vm705, %v771, 0.0
    %803 = vadd.xlane.f32.xlu0 %v802
    %v804 = vpop.xlane.xlu0 %803
    %v805 = vsel %vm705, %v773, 0.0
    %806 = vadd.xlane.f32.xlu0 %v805
    %v807 = vpop.xlane.xlu0 %806
    %v808 = vsel %vm705, %v775, 0.0
    %809 = vadd.xlane.f32.xlu0 %v808
    %v810 = vpop.xlane.xlu0 %809
    %v811 = vsel %vm705, %v777, 0.0
    %812 = vadd.xlane.f32.xlu0 %v811
    %v813 = vpop.xlane.xlu0 %812
    %v814 = vsel %vm705, %v779, 0.0
    %815 = vadd.xlane.f32.xlu0 %v814
    %v816 = vpop.xlane.xlu0 %815
    %v817 = vsel %vm705, %v781, 0.0
    %818 = vadd.xlane.f32.xlu0 %v817
    %v819 = vpop.xlane.xlu0 %818
    %v820 = vsel %vm705, %v783, 0.0
    %821 = vadd.xlane.f32.xlu0 %v820
    %v822 = vpop.xlane.xlu0 %821
    %v823 = vsel %vm705, %v785, 0.0
    %824 = vadd.xlane.f32.xlu0 %v823
    %v825 = vpop.xlane.xlu0 %824
    %v826 = vsel %vm705, %v787, 0.0
    %827 = vadd.xlane.f32.xlu0 %v826
    %v828 = vpop.xlane.xlu0 %827
    %v829 = vsel %vm705, %v789, 0.0
    %830 = vadd.xlane.f32.xlu0 %v829
    %v831 = vpop.xlane.xlu0 %830
    %v832 = vsel %vm705, %v791, 0.0
    %833 = vadd.xlane.f32.xlu0 %v832
    %v834 = vpop.xlane.xlu0 %833
    %v835 = vsel %vm705, %v793, 0.0
    %836 = vadd.xlane.f32.xlu0 %v835
    %v837 = vpop.xlane.xlu0 %836
    %v838 = vsel %vm705, %v795, 0.0
    %839 = vadd.xlane.f32.xlu0 %v838
    %v840 = vpop.xlane.xlu0 %839
    %v841 = vsel %vm705, %v797, 0.0
    %842 = vadd.xlane.f32.xlu0 %v841
    %v843 = vpop.xlane.xlu0 %842
    %v844 = vsel %vm705, %v799, 0.0
    %845 = vadd.xlane.f32.xlu0 %v844
    %v846 = vpop.xlane.xlu0 %845
    %v847 = vsel %vm705, %v801, 0.0
    %848 = vadd.xlane.f32.xlu0 %v847
    %v849 = vpop.xlane.xlu0 %848
    %v850 = vpack.c.bf16 %v773, %v771
    %v851 = vpack.c.bf16 %v777, %v775
    %v852 = vpack.c.bf16 %v781, %v779
    %v853 = vpack.c.bf16 %v785, %v783
    %v854 = vpack.c.bf16 %v789, %v787
    %v855 = vpack.c.bf16 %v793, %v791
    %v856 = vpack.c.bf16 %v797, %v795
    %v857 = vpack.c.bf16 %v801, %v799
    %v859 = vsel %vm705, %v850, 0
    %v862 = vsel %vm705, %v851, 0
    %v865 = vsel %vm705, %v852, 0
    %v868 = vsel %vm705, %v853, 0
    %870 = vmatprep.subr.bf16.mxu0 0
    %871 = vmatpush1.bf16.msra.mxu0 %v518
    %872 = vmatprep.subr.bf16.mxu0 0
    %873 = vmatpush1.bf16.msra.mxu0 %v519
    %874 = vmatprep.subr.bf16.mxu0 0
    %875 = vmatpush1.bf16.msra.mxu0 %v520
    %876 = vmatprep.subr.bf16.mxu0 0
    %877 = vmatpush1.bf16.msra.mxu0 %v521
    %878 = vmatprep.subr.bf16.mxu0 0
    %879 = vmatpush1.bf16.msra.mxu0 0
    %880 = vmatprep.subr.bf16.mxu0 0
    %881 = vmatpush1.bf16.msra.mxu0 0
    %882 = vmatprep.subr.bf16.mxu0 0
    %883 = vmatpush1.bf16.msra.mxu0 0
    %884 = vmatprep.subr.bf16.mxu0 0
    %885 = vmatpush1.bf16.msra.mxu0 0
    %886 = vmatprep.subr.bf16.mxu0 0
    %887 = vmatpush1.bf16.msra.mxu0 0
    %888 = vmatprep.subr.bf16.mxu0 0
    %889 = vmatpush1.bf16.msra.mxu0 0
    %890 = vmatprep.subr.bf16.mxu0 0
    %891 = vmatpush1.bf16.msra.mxu0 0
    %892 = vmatprep.subr.bf16.mxu0 0
    %893 = vmatpush1.bf16.msra.mxu0 0
    %894 = vmatprep.subr.bf16.mxu0 0
    %895 = vmatpush1.bf16.msra.mxu0 0
    %896 = vmatprep.subr.bf16.mxu0 0
    %897 = vmatpush1.bf16.msra.mxu0 0
    %898 = vmatprep.subr.bf16.mxu0 0
    %899 = vmatpush1.bf16.msra.mxu0 0
    %900 = vmatprep.subr.bf16.mxu0 0
    %901 = vmatpush1.bf16.msra.mxu0 0
    %902 = vmatprep.mubr.bf16.mxu0 0
    %903 = vmatmul.mubr.bf16.gmra.mrb[0].mxu0 %v859
    %v904 = vpop.f32.mrb[0].mxu0
    %v905 = vadd.f32 0.0, %v904
    %v906 = vpop.f32.mrb[0].mxu0
    %v907 = vpop.f32.mrb[0].mxu0
    %v908 = vadd.f32 0.0, %v907
    %v909 = vpop.f32.mrb[0].mxu0
    %910 = vmatprep.mubr.bf16.mxu0 0
    %911 = vmatmul.mubr.bf16.gmra.mrb[0].mxu0 %v862
    %v912 = vpop.f32.mrb[0].mxu0
    %v913 = vadd.f32 0.0, %v912
    %v914 = vpop.f32.mrb[0].mxu0
    %v915 = vpop.f32.mrb[0].mxu0
    %v916 = vadd.f32 0.0, %v915
    %v917 = vpop.f32.mrb[0].mxu0
    %918 = vmatprep.mubr.bf16.mxu0 0
    %919 = vmatmul.mubr.bf16.gmra.mrb[0].mxu0 %v865
    %v920 = vpop.f32.mrb[0].mxu0
    %v921 = vadd.f32 0.0, %v920
    %v922 = vpop.f32.mrb[0].mxu0
    %v923 = vpop.f32.mrb[0].mxu0
    %v924 = vadd.f32 0.0, %v923
    %v925 = vpop.f32.mrb[0].mxu0
    %926 = vmatprep.mubr.bf16.mxu0 0
    %927 = vmatmul.mubr.bf16.gmra.mrb[0].mxu0 %v868
    %v928 = vpop.f32.mrb[0].mxu0
    %v929 = vadd.f32 0.0, %v928
    %v930 = vpop.f32.mrb[0].mxu0
    %v931 = vpop.f32.mrb[0].mxu0
    %v932 = vadd.f32 0.0, %v931
    %v933 = vpop.f32.mrb[0].mxu0
    %934 = vdwg.mxu0
    %v936 = vsel %vm705, %v854, 0
    %v939 = vsel %vm705, %v855, 0
    %v942 = vsel %vm705, %v856, 0
    %v945 = vsel %vm705, %v857, 0
    %947 = vmatprep.subr.bf16.mxu0 0
    %948 = vmatpush1.bf16.msra.mxu0 %v522
    %949 = vmatprep.subr.bf16.mxu0 0
    %950 = vmatpush1.bf16.msra.mxu0 %v523
    %951 = vmatprep.subr.bf16.mxu0 0
    %952 = vmatpush1.bf16.msra.mxu0 %v524
    %953 = vmatprep.subr.bf16.mxu0 0
    %954 = vmatpush1.bf16.msra.mxu0 %v525
    %955 = vmatprep.subr.bf16.mxu0 0
    %956 = vmatpush1.bf16.msra.mxu0 0
    %957 = vmatprep.subr.bf16.mxu0 0
    %958 = vmatpush1.bf16.msra.mxu0 0
    %959 = vmatprep.subr.bf16.mxu0 0
    %960 = vmatpush1.bf16.msra.mxu0 0
    %961 = vmatprep.subr.bf16.mxu0 0
    %962 = vmatpush1.bf16.msra.mxu0 0
    %963 = vmatprep.subr.bf16.mxu0 0
    %964 = vmatpush1.bf16.msra.mxu0 0
    %965 = vmatprep.subr.bf16.mxu0 0
    %966 = vmatpush1.bf16.msra.mxu0 0
    %967 = vmatprep.subr.bf16.mxu0 0
    %968 = vmatpush1.bf16.msra.mxu0 0
    %969 = vmatprep.subr.bf16.mxu0 0
    %970 = vmatpush1.bf16.msra.mxu0 0
    %971 = vmatprep.subr.bf16.mxu0 0
    %972 = vmatpush1.bf16.msra.mxu0 0
    %973 = vmatprep.subr.bf16.mxu0 0
    %974 = vmatpush1.bf16.msra.mxu0 0
    %975 = vmatprep.subr.bf16.mxu0 0
    %976 = vmatpush1.bf16.msra.mxu0 0
    %977 = vmatprep.subr.bf16.mxu0 0
    %978 = vmatpush1.bf16.msra.mxu0 0
    %979 = vmatprep.mubr.bf16.mxu0 0
    %980 = vmatmul.mubr.bf16.gmra.mrb[0].mxu0 %v936
    %v981 = vpop.f32.mrb[0].mxu0
    %v982 = vadd.f32 0.0, %v981
    %v983 = vpop.f32.mrb[0].mxu0
    %v984 = vpop.f32.mrb[0].mxu0
    %v985 = vadd.f32 0.0, %v984
    %v986 = vpop.f32.mrb[0].mxu0
    %987 = vmatprep.mubr.bf16.mxu0 0
    %988 = vmatmul.mubr.bf16.gmra.mrb[0].mxu0 %v939
    %v989 = vpop.f32.mrb[0].mxu0
    %v990 = vadd.f32 0.0, %v989
    %v991 = vpop.f32.mrb[0].mxu0
    %v992 = vpop.f32.mrb[0].mxu0
    %v993 = vadd.f32 0.0, %v992
    %v994 = vpop.f32.mrb[0].mxu0
    %995 = vmatprep.mubr.bf16.mxu0 0
    %996 = vmatmul.mubr.bf16.gmra.mrb[0].mxu0 %v942
    %v997 = vpop.f32.mrb[0].mxu0
    %v998 = vadd.f32 0.0, %v997
    %v999 = vpop.f32.mrb[0].mxu0
    %v1000 = vpop.f32.mrb[0].mxu0
    %v1001 = vadd.f32 0.0, %v1000
    %v1002 = vpop.f32.mrb[0].mxu0
    %1003 = vmatprep.mubr.bf16.mxu0 0
    %1004 = vmatmul.mubr.bf16.gmra.mrb[0].mxu0 %v945
    %v1005 = vpop.f32.mrb[0].mxu0
    %v1006 = vadd.f32 0.0, %v1005
    %v1007 = vpop.f32.mrb[0].mxu0
    %v1008 = vpop.f32.mrb[0].mxu0
    %v1009 = vadd.f32 0.0, %v1008
    %v1010 = vpop.f32.mrb[0].mxu0
    %1011 = vdwg.mxu0
    %v1012 = vrcp.pop %v804
    %v1013 = vrcp.pop %v807
    %v1014 = vrcp.pop %v810
    %v1015 = vrcp.pop %v813
    %v1016 = vrcp.pop %v816
    %v1017 = vrcp.pop %v819
    %v1018 = vrcp.pop %v822
    %v1019 = vrcp.pop %v825
    %v1020 = vrcp.pop %v828
    %v1021 = vrcp.pop %v831
    %v1022 = vrcp.pop %v834
    %v1023 = vrcp.pop %v837
    %v1024 = vrcp.pop %v840
    %v1025 = vrcp.pop %v843
    %v1026 = vrcp.pop %v846
    %v1027 = vrcp.pop %v849
    %v1028 = vmul.f32 %v905, %v1012
    %v1029 = vmul.f32 %v908, %v1013
    %v1030 = vmul.f32 %v913, %v1014
    %v1031 = vmul.f32 %v916, %v1015
    %v1032 = vmul.f32 %v921, %v1016
    %v1033 = vmul.f32 %v924, %v1017
    %v1034 = vmul.f32 %v929, %v1018
    %v1035 = vmul.f32 %v932, %v1019
    %v1036 = vmul.f32 %v982, %v1020
    %v1037 = vmul.f32 %v985, %v1021
    %v1038 = vmul.f32 %v990, %v1022
    %v1039 = vmul.f32 %v993, %v1023
    %v1040 = vmul.f32 %v998, %v1024
    %v1041 = vmul.f32 %v1001, %v1025
    %v1042 = vmul.f32 %v1006, %v1026
    %v1043 = vmul.f32 %v1009, %v1027
    %v1044 = vpack.c.bf16 %v1029, %v1028
    %v1045 = vpack.c.bf16 %v1031, %v1030
    %v1046 = vpack.c.bf16 %v1033, %v1032
    %v1047 = vpack.c.bf16 %v1035, %v1034
    %v1048 = vpack.c.bf16 %v1037, %v1036
    %v1049 = vpack.c.bf16 %v1039, %v1038
    %v1050 = vpack.c.bf16 %v1041, %v1040
    %v1051 = vpack.c.bf16 %v1043, %v1042
    %1052 = vst.msk [vmem:[#allocation3] sm:$0xff] %vm526, %v1044
    %1053 = vst.msk [vmem:[#allocation3 + $0x8] sm:$0xff] %vm526, %v1045
    %1054 = vst.msk [vmem:[#allocation3 + $0x10] sm:$0xff] %vm526, %v1046
    %1055 = vst.msk [vmem:[#allocation3 + $0x18] sm:$0xff] %vm526, %v1047
    %1056 = vst.msk [vmem:[#allocation3 + $0x20] sm:$0xff] %vm526, %v1048
    %1057 = vst.msk [vmem:[#allocation3 + $0x28] sm:$0xff] %vm526, %v1049
    %1058 = vst.msk [vmem:[#allocation3 + $0x30] sm:$0xff] %vm526, %v1050
    %1059 = vst.msk [vmem:[#allocation3 + $0x38] sm:$0xff] %vm526, %v1051
    %v1060 = vld [vmem:[#allocation2] sm:$0xff]
    %v1061 = vld [vmem:[#allocation2 + $0x18] sm:$0xff]
    %v1062 = vld [vmem:[#allocation2 + $0x30] sm:$0xff]
    %v1063 = vld [vmem:[#allocation2 + $0x48] sm:$0xff]
    %v1064 = vld [vmem:[#allocation2 + $0x60] sm:$0xff]
    %v1065 = vld [vmem:[#allocation2 + $0x78] sm:$0xff]
    %v1066 = vld [vmem:[#allocation2 + $0x90] sm:$0xff]
    %v1067 = vld [vmem:[#allocation2 + $0xa8] sm:$0xff]
    %v1068 = vld [vmem:[#allocation2 + $0x8] sm:$0xff]
    %v1069 = vld [vmem:[#allocation2 + $0x20] sm:$0xff]
    %v1070 = vld [vmem:[#allocation2 + $0x38] sm:$0xff]
    %v1071 = vld [vmem:[#allocation2 + $0x50] sm:$0xff]
    %v1072 = vld [vmem:[#allocation2 + $0x68] sm:$0xff]
    %v1073 = vld [vmem:[#allocation2 + $0x80] sm:$0xff]
    %v1074 = vld [vmem:[#allocation2 + $0x98] sm:$0xff]
    %v1075 = vld [vmem:[#allocation2 + $0xb0] sm:$0xff]
    %v1076 = vld [vmem:[#allocation2 + $0x10] sm:$0xff]
    %v1077 = vld [vmem:[#allocation2 + $0x28] sm:$0xff]
    %v1078 = vld [vmem:[#allocation2 + $0x40] sm:$0xff]
    %v1079 = vld [vmem:[#allocation2 + $0x58] sm:$0xff]
    %v1080 = vld [vmem:[#allocation2 + $0x70] sm:$0xff]
    %v1081 = vld [vmem:[#allocation2 + $0x88] sm:$0xff]
    %v1082 = vld [vmem:[#allocation2 + $0xa0] sm:$0xff]
    %v1083 = vld [vmem:[#allocation2 + $0xb8] sm:$0xff]
    %1088 = vrot.lane.b32.xlu0 %v1060, 96
    %v1089 = vpop.permute.xlu0 %1088
    %1090 = vrot.lane.b32.xlu0 %v1061, 96
    %v1091 = vpop.permute.xlu0 %1090
    %1092 = vrot.lane.b32.xlu0 %v1062, 96
    %v1093 = vpop.permute.xlu0 %1092
    %1094 = vrot.lane.b32.xlu0 %v1063, 96
    %v1095 = vpop.permute.xlu0 %1094
    %1100 = vrot.lane.b32.xlu0 %v1068, 96
    %v1101 = vpop.permute.xlu0 %1100
    %1102 = vrot.lane.b32.xlu0 %v1069, 96
    %v1103 = vpop.permute.xlu0 %1102
    %1104 = vrot.lane.b32.xlu0 %v1070, 96
    %v1105 = vpop.permute.xlu0 %1104
    %1106 = vrot.lane.b32.xlu0 %v1071, 96
    %v1107 = vpop.permute.xlu0 %1106
    %v1109 = vsel %vm526, %v1089, 0
    %v1112 = vsel %vm526, %v1091, 0
    %v1115 = vsel %vm526, %v1093, 0
    %v1118 = vsel %vm526, %v1095, 0
    %v1121 = vsel %vm526, %v1101, 0
    %v1124 = vsel %vm526, %v1103, 0
    %v1127 = vsel %vm526, %v1105, 0
    %v1130 = vsel %vm526, %v1107, 0
    %1132 = vmatprep.subr.bf16.mxu0 0
    %1133 = vmatpush1.bf16.xpose.msra.mxu0 %v1121
    %1134 = vmatprep.subr.bf16.mxu0 0
    %1135 = vmatpush1.bf16.xpose.msra.mxu0 %v1124
    %1136 = vmatprep.subr.bf16.mxu0 0
    %1137 = vmatpush1.bf16.xpose.msra.mxu0 %v1127
    %1138 = vmatprep.subr.bf16.mxu0 0
    %1139 = vmatpush1.bf16.xpose.msra.mxu0 %v1130
    %1140 = vmatprep.subr.bf16.mxu0 0
    %1141 = vmatpush1.bf16.xpose.msra.mxu0 0
    %1142 = vmatprep.subr.bf16.mxu0 0
    %1143 = vmatpush1.bf16.xpose.msra.mxu0 0
    %1144 = vmatprep.subr.bf16.mxu0 0
    %1145 = vmatpush1.bf16.xpose.msra.mxu0 0
    %1146 = vmatprep.subr.bf16.mxu0 0
    %1147 = vmatpush1.bf16.xpose.msra.mxu0 0
    %1148 = vmatprep.subr.bf16.mxu0 0
    %1149 = vmatpush1.bf16.xpose.msra.mxu0 0
    %1150 = vmatprep.subr.bf16.mxu0 0
    %1151 = vmatpush1.bf16.xpose.msra.mxu0 0
    %1152 = vmatprep.subr.bf16.mxu0 0
    %1153 = vmatpush1.bf16.xpose.msra.mxu0 0
    %1154 = vmatprep.subr.bf16.mxu0 0
    %1155 = vmatpush1.bf16.xpose.msra.mxu0 0
    %1156 = vmatprep.subr.bf16.mxu0 0
    %1157 = vmatpush1.bf16.xpose.msra.mxu0 0
    %1158 = vmatprep.subr.bf16.mxu0 0
    %1159 = vmatpush1.bf16.xpose.msra.mxu0 0
    %1160 = vmatprep.subr.bf16.mxu0 0
    %1161 = vmatpush1.bf16.xpose.msra.mxu0 0
    %1162 = vmatprep.subr.bf16.mxu0 0
    %1163 = vmatpush1.bf16.xpose.msra.mxu0 0
    %1164 = vmatprep.mubr.bf16.mxu0 0
    %1165 = vmatmul.mubr.bf16.gmra.mrb[0].mxu0 %v1109
    %v1166 = vpop.f32.mrb[0].mxu0
    %v1167 = vadd.f32 0.0, %v1166
    %v1168 = vpop.f32.mrb[0].mxu0
    %v1169 = vpop.f32.mrb[0].mxu0
    %v1170 = vadd.f32 0.0, %v1169
    %v1171 = vpop.f32.mrb[0].mxu0
    %1172 = vmatprep.mubr.bf16.mxu0 0
    %1173 = vmatmul.mubr.bf16.gmra.mrb[0].mxu0 %v1112
    %v1174 = vpop.f32.mrb[0].mxu0
    %v1175 = vadd.f32 0.0, %v1174
    %v1176 = vpop.f32.mrb[0].mxu0
    %v1177 = vpop.f32.mrb[0].mxu0
    %v1178 = vadd.f32 0.0, %v1177
    %v1179 = vpop.f32.mrb[0].mxu0
    %1180 = vmatprep.mubr.bf16.mxu0 0
    %1181 = vmatmul.mubr.bf16.gmra.mrb[0].mxu0 %v1115
    %v1182 = vpop.f32.mrb[0].mxu0
    %v1183 = vadd.f32 0.0, %v1182
    %v1184 = vpop.f32.mrb[0].mxu0
    %v1185 = vpop.f32.mrb[0].mxu0
    %v1186 = vadd.f32 0.0, %v1185
    %v1187 = vpop.f32.mrb[0].mxu0
    %1188 = vmatprep.mubr.bf16.mxu0 0
    %1189 = vmatmul.mubr.bf16.gmra.mrb[0].mxu0 %v1118
    %v1190 = vpop.f32.mrb[0].mxu0
    %v1191 = vadd.f32 0.0, %v1190
    %v1192 = vpop.f32.mrb[0].mxu0
    %v1193 = vpop.f32.mrb[0].mxu0
    %v1194 = vadd.f32 0.0, %v1193
    %v1195 = vpop.f32.mrb[0].mxu0
    %1196 = vdwg.mxu0
    %1201 = vrot.lane.b32.xlu0 %v1064, 96
    %v1202 = vpop.permute.xlu0 %1201
    %1203 = vrot.lane.b32.xlu0 %v1065, 96
    %v1204 = vpop.permute.xlu0 %1203
    %1205 = vrot.lane.b32.xlu0 %v1066, 96
    %v1206 = vpop.permute.xlu0 %1205
    %1207 = vrot.lane.b32.xlu0 %v1067, 96
    %v1208 = vpop.permute.xlu0 %1207
    %1213 = vrot.lane.b32.xlu0 %v1072, 96
    %v1214 = vpop.permute.xlu0 %1213
    %1215 = vrot.lane.b32.xlu0 %v1073, 96
    %v1216 = vpop.permute.xlu0 %1215
    %1217 = vrot.lane.b32.xlu0 %v1074, 96
    %v1218 = vpop.permute.xlu0 %1217
    %1219 = vrot.lane.b32.xlu0 %v1075, 96
    %v1220 = vpop.permute.xlu0 %1219
    %v1222 = vsel %vm526, %v1202, 0
    %v1225 = vsel %vm526, %v1204, 0
    %v1228 = vsel %vm526, %v1206, 0
    %v1231 = vsel %vm526, %v1208, 0
    %v1234 = vsel %vm526, %v1214, 0
    %v1237 = vsel %vm526, %v1216, 0
    %v1240 = vsel %vm526, %v1218, 0
    %v1243 = vsel %vm526, %v1220, 0
    %1245 = vmatprep.subr.bf16.mxu0 0
    %1246 = vmatpush1.bf16.xpose.msra.mxu0 %v1234
    %1247 = vmatprep.subr.bf16.mxu0 0
    %1248 = vmatpush1.bf16.xpose.msra.mxu0 %v1237
    %1249 = vmatprep.subr.bf16.mxu0 0
    %1250 = vmatpush1.bf16.xpose.msra.mxu0 %v1240
    %1251 = vmatprep.subr.bf16.mxu0 0
    %1252 = vmatpush1.bf16.xpose.msra.mxu0 %v1243
    %1253 = vmatprep.subr.bf16.mxu0 0
    %1254 = vmatpush1.bf16.xpose.msra.mxu0 0
    %1255 = vmatprep.subr.bf16.mxu0 0
    %1256 = vmatpush1.bf16.xpose.msra.mxu0 0
    %1257 = vmatprep.subr.bf16.mxu0 0
    %1258 = vmatpush1.bf16.xpose.msra.mxu0 0
    %1259 = vmatprep.subr.bf16.mxu0 0
    %1260 = vmatpush1.bf16.xpose.msra.mxu0 0
    %1261 = vmatprep.subr.bf16.mxu0 0
    %1262 = vmatpush1.bf16.xpose.msra.mxu0 0
    %1263 = vmatprep.subr.bf16.mxu0 0
    %1264 = vmatpush1.bf16.xpose.msra.mxu0 0
    %1265 = vmatprep.subr.bf16.mxu0 0
    %1266 = vmatpush1.bf16.xpose.msra.mxu0 0
    %1267 = vmatprep.subr.bf16.mxu0 0
    %1268 = vmatpush1.bf16.xpose.msra.mxu0 0
    %1269 = vmatprep.subr.bf16.mxu0 0
    %1270 = vmatpush1.bf16.xpose.msra.mxu0 0
    %1271 = vmatprep.subr.bf16.mxu0 0
    %1272 = vmatpush1.bf16.xpose.msra.mxu0 0
    %1273 = vmatprep.subr.bf16.mxu0 0
    %1274 = vmatpush1.bf16.xpose.msra.mxu0 0
    %1275 = vmatprep.subr.bf16.mxu0 0
    %1276 = vmatpush1.bf16.xpose.msra.mxu0 0
    %1277 = vmatprep.mubr.bf16.mxu0 0
    %1278 = vmatmul.mubr.bf16.gmra.mrb[0].mxu0 %v1222
    %v1279 = vpop.f32.mrb[0].mxu0
    %v1280 = vadd.f32 0.0, %v1279
    %v1281 = vpop.f32.mrb[0].mxu0
    %v1282 = vpop.f32.mrb[0].mxu0
    %v1283 = vadd.f32 0.0, %v1282
    %v1284 = vpop.f32.mrb[0].mxu0
    %1285 = vmatprep.mubr.bf16.mxu0 0
    %1286 = vmatmul.mubr.bf16.gmra.mrb[0].mxu0 %v1225
    %v1287 = vpop.f32.mrb[0].mxu0
    %v1288 = vadd.f32 0.0, %v1287
    %v1289 = vpop.f32.mrb[0].mxu0
    %v1290 = vpop.f32.mrb[0].mxu0
    %v1291 = vadd.f32 0.0, %v1290
    %v1292 = vpop.f32.mrb[0].mxu0
    %1293 = vmatprep.mubr.bf16.mxu0 0
    %1294 = vmatmul.mubr.bf16.gmra.mrb[0].mxu0 %v1228
    %v1295 = vpop.f32.mrb[0].mxu0
    %v1296 = vadd.f32 0.0, %v1295
    %v1297 = vpop.f32.mrb[0].mxu0
    %v1298 = vpop.f32.mrb[0].mxu0
    %v1299 = vadd.f32 0.0, %v1298
    %v1300 = vpop.f32.mrb[0].mxu0
    %1301 = vmatprep.mubr.bf16.mxu0 0
    %1302 = vmatmul.mubr.bf16.gmra.mrb[0].mxu0 %v1231
    %v1303 = vpop.f32.mrb[0].mxu0
    %v1304 = vadd.f32 0.0, %v1303
    %v1305 = vpop.f32.mrb[0].mxu0
    %v1306 = vpop.f32.mrb[0].mxu0
    %v1307 = vadd.f32 0.0, %v1306
    %v1308 = vpop.f32.mrb[0].mxu0
    %1309 = vdwg.mxu0
    %v1310 = vsel %vm705, %v1167, -inf
    %1311 = vmax.xlane.f32.xlu0 %v1310
    %v1312 = vpop.xlane.xlu0 %1311
    %v1313 = vsel %vm705, %v1170, -inf
    %1314 = vmax.xlane.f32.xlu0 %v1313
    %v1315 = vpop.xlane.xlu0 %1314
    %v1316 = vsel %vm705, %v1175, -inf
    %1317 = vmax.xlane.f32.xlu0 %v1316
    %v1318 = vpop.xlane.xlu0 %1317
    %v1319 = vsel %vm705, %v1178, -inf
    %1320 = vmax.xlane.f32.xlu0 %v1319
    %v1321 = vpop.xlane.xlu0 %1320
    %v1322 = vsel %vm705, %v1183, -inf
    %1323 = vmax.xlane.f32.xlu0 %v1322
    %v1324 = vpop.xlane.xlu0 %1323
    %v1325 = vsel %vm705, %v1186, -inf
    %1326 = vmax.xlane.f32.xlu0 %v1325
    %v1327 = vpop.xlane.xlu0 %1326
    %v1328 = vsel %vm705, %v1191, -inf
    %1329 = vmax.xlane.f32.xlu0 %v1328
    %v1330 = vpop.xlane.xlu0 %1329
    %v1331 = vsel %vm705, %v1194, -inf
    %1332 = vmax.xlane.f32.xlu0 %v1331
    %v1333 = vpop.xlane.xlu0 %1332
    %v1334 = vsel %vm705, %v1280, -inf
    %1335 = vmax.xlane.f32.xlu0 %v1334
    %v1336 = vpop.xlane.xlu0 %1335
    %v1337 = vsel %vm705, %v1283, -inf
    %1338 = vmax.xlane.f32.xlu0 %v1337
    %v1339 = vpop.xlane.xlu0 %1338
    %v1340 = vsel %vm705, %v1288, -inf
    %1341 = vmax.xlane.f32.xlu0 %v1340
    %v1342 = vpop.xlane.xlu0 %1341
    %v1343 = vsel %vm705, %v1291, -inf
    %1344 = vmax.xlane.f32.xlu0 %v1343
    %v1345 = vpop.xlane.xlu0 %1344
    %v1346 = vsel %vm705, %v1296, -inf
    %1347 = vmax.xlane.f32.xlu0 %v1346
    %v1348 = vpop.xlane.xlu0 %1347
    %v1349 = vsel %vm705, %v1299, -inf
    %1350 = vmax.xlane.f32.xlu0 %v1349
    %v1351 = vpop.xlane.xlu0 %1350
    %v1352 = vsel %vm705, %v1304, -inf
    %1353 = vmax.xlane.f32.xlu0 %v1352
    %v1354 = vpop.xlane.xlu0 %1353
    %v1355 = vsel %vm705, %v1307, -inf
    %1356 = vmax.xlane.f32.xlu0 %v1355
    %v1357 = vpop.xlane.xlu0 %1356
    %v1358 = vsub.f32 %v1167, %v1312
    %v1359 = vsub.f32 %v1170, %v1315
    %v1360 = vsub.f32 %v1175, %v1318
    %v1361 = vsub.f32 %v1178, %v1321
    %v1362 = vsub.f32 %v1183, %v1324
    %v1363 = vsub.f32 %v1186, %v1327
    %v1364 = vsub.f32 %v1191, %v1330
    %v1365 = vsub.f32 %v1194, %v1333
    %v1366 = vsub.f32 %v1280, %v1336
    %v1367 = vsub.f32 %v1283, %v1339
    %v1368 = vsub.f32 %v1288, %v1342
    %v1369 = vsub.f32 %v1291, %v1345
    %v1370 = vsub.f32 %v1296, %v1348
    %v1371 = vsub.f32 %v1299, %v1351
    %v1372 = vsub.f32 %v1304, %v1354
    %v1373 = vsub.f32 %v1307, %v1357
    %v1374 = vmul.f32 %v1358, 1.442695
    %v1375 = vpow.pop %v1374
    %v1376 = vmul.f32 %v1359, 1.442695
    %v1377 = vpow.pop %v1376
    %v1378 = vmul.f32 %v1360, 1.442695
    %v1379 = vpow.pop %v1378
    %v1380 = vmul.f32 %v1361, 1.442695
    %v1381 = vpow.pop %v1380
    %v1382 = vmul.f32 %v1362, 1.442695
    %v1383 = vpow.pop %v1382
    %v1384 = vmul.f32 %v1363, 1.442695
    %v1385 = vpow.pop %v1384
    %v1386 = vmul.f32 %v1364, 1.442695
    %v1387 = vpow.pop %v1386
    %v1388 = vmul.f32 %v1365, 1.442695
    %v1389 = vpow.pop %v1388
    %v1390 = vmul.f32 %v1366, 1.442695
    %v1391 = vpow.pop %v1390
    %v1392 = vmul.f32 %v1367, 1.442695
    %v1393 = vpow.pop %v1392
    %v1394 = vmul.f32 %v1368, 1.442695
    %v1395 = vpow.pop %v1394
    %v1396 = vmul.f32 %v1369, 1.442695
    %v1397 = vpow.pop %v1396
    %v1398 = vmul.f32 %v1370, 1.442695
    %v1399 = vpow.pop %v1398
    %v1400 = vmul.f32 %v1371, 1.442695
    %v1401 = vpow.pop %v1400
    %v1402 = vmul.f32 %v1372, 1.442695
    %v1403 = vpow.pop %v1402
    %v1404 = vmul.f32 %v1373, 1.442695
    %v1405 = vpow.pop %v1404
    %v1406 = vsel %vm705, %v1375, 0.0
    %1407 = vadd.xlane.f32.xlu0 %v1406
    %v1408 = vpop.xlane.xlu0 %1407
    %v1409 = vsel %vm705, %v1377, 0.0
    %1410 = vadd.xlane.f32.xlu0 %v1409
    %v1411 = vpop.xlane.xlu0 %1410
    %v1412 = vsel %vm705, %v1379, 0.0
    %1413 = vadd.xlane.f32.xlu0 %v1412
    %v1414 = vpop.xlane.xlu0 %1413
    %v1415 = vsel %vm705, %v1381, 0.0
    %1416 = vadd.xlane.f32.xlu0 %v1415
    %v1417 = vpop.xlane.xlu0 %1416
    %v1418 = vsel %vm705, %v1383, 0.0
    %1419 = vadd.xlane.f32.xlu0 %v1418
    %v1420 = vpop.xlane.xlu0 %1419
    %v1421 = vsel %vm705, %v1385, 0.0
    %1422 = vadd.xlane.f32.xlu0 %v1421
    %v1423 = vpop.xlane.xlu0 %1422
    %v1424 = vsel %vm705, %v1387, 0.0
    %1425 = vadd.xlane.f32.xlu0 %v1424
    %v1426 = vpop.xlane.xlu0 %1425
    %v1427 = vsel %vm705, %v1389, 0.0
    %1428 = vadd.xlane.f32.xlu0 %v1427
    %v1429 = vpop.xlane.xlu0 %1428
    %v1430 = vsel %vm705, %v1391, 0.0
    %1431 = vadd.xlane.f32.xlu0 %v1430
    %v1432 = vpop.xlane.xlu0 %1431
    %v1433 = vsel %vm705, %v1393, 0.0
    %1434 = vadd.xlane.f32.xlu0 %v1433
    %v1435 = vpop.xlane.xlu0 %1434
    %v1436 = vsel %vm705, %v1395, 0.0
    %1437 = vadd.xlane.f32.xlu0 %v1436
    %v1438 = vpop.xlane.xlu0 %1437
    %v1439 = vsel %vm705, %v1397, 0.0
    %1440 = vadd.xlane.f32.xlu0 %v1439
    %v1441 = vpop.xlane.xlu0 %1440
    %v1442 = vsel %vm705, %v1399, 0.0
    %1443 = vadd.xlane.f32.xlu0 %v1442
    %v1444 = vpop.xlane.xlu0 %1443
    %v1445 = vsel %vm705, %v1401, 0.0
    %1446 = vadd.xlane.f32.xlu0 %v1445
    %v1447 = vpop.xlane.xlu0 %1446
    %v1448 = vsel %vm705, %v1403, 0.0
    %1449 = vadd.xlane.f32.xlu0 %v1448
    %v1450 = vpop.xlane.xlu0 %1449
    %v1451 = vsel %vm705, %v1405, 0.0
    %1452 = vadd.xlane.f32.xlu0 %v1451
    %v1453 = vpop.xlane.xlu0 %1452
    %v1454 = vpack.c.bf16 %v1377, %v1375
    %v1455 = vpack.c.bf16 %v1381, %v1379
    %v1456 = vpack.c.bf16 %v1385, %v1383
    %v1457 = vpack.c.bf16 %v1389, %v1387
    %v1458 = vpack.c.bf16 %v1393, %v1391
    %v1459 = vpack.c.bf16 %v1397, %v1395
    %v1460 = vpack.c.bf16 %v1401, %v1399
    %v1461 = vpack.c.bf16 %v1405, %v1403
    %1466 = vrot.lane.b32.xlu0 %v1076, 96
    %v1467 = vpop.permute.xlu0 %1466
    %1468 = vrot.lane.b32.xlu0 %v1077, 96
    %v1469 = vpop.permute.xlu0 %1468
    %1470 = vrot.lane.b32.xlu0 %v1078, 96
    %v1471 = vpop.permute.xlu0 %1470
    %1472 = vrot.lane.b32.xlu0 %v1079, 96
    %v1473 = vpop.permute.xlu0 %1472
    %v1479 = vsel %vm705, %v1454, 0
    %v1482 = vsel %vm705, %v1455, 0
    %v1485 = vsel %vm705, %v1456, 0
    %v1488 = vsel %vm705, %v1457, 0
    %1490 = vmatprep.subr.bf16.mxu0 0
    %1491 = vmatpush1.bf16.msra.mxu0 %v1467
    %1492 = vmatprep.subr.bf16.mxu0 0
    %1493 = vmatpush1.bf16.msra.mxu0 %v1469
    %1494 = vmatprep.subr.bf16.mxu0 0
    %1495 = vmatpush1.bf16.msra.mxu0 %v1471
    %1496 = vmatprep.subr.bf16.mxu0 0
    %1497 = vmatpush1.bf16.msra.mxu0 %v1473
    %1498 = vmatprep.subr.bf16.mxu0 0
    %1499 = vmatpush1.bf16.msra.mxu0 0
    %1500 = vmatprep.subr.bf16.mxu0 0
    %1501 = vmatpush1.bf16.msra.mxu0 0
    %1502 = vmatprep.subr.bf16.mxu0 0
    %1503 = vmatpush1.bf16.msra.mxu0 0
    %1504 = vmatprep.subr.bf16.mxu0 0
    %1505 = vmatpush1.bf16.msra.mxu0 0
    %1506 = vmatprep.subr.bf16.mxu0 0
    %1507 = vmatpush1.bf16.msra.mxu0 0
    %1508 = vmatprep.subr.bf16.mxu0 0
    %1509 = vmatpush1.bf16.msra.mxu0 0
    %1510 = vmatprep.subr.bf16.mxu0 0
    %1511 = vmatpush1.bf16.msra.mxu0 0
    %1512 = vmatprep.subr.bf16.mxu0 0
    %1513 = vmatpush1.bf16.msra.mxu0 0
    %1514 = vmatprep.subr.bf16.mxu0 0
    %1515 = vmatpush1.bf16.msra.mxu0 0
    %1516 = vmatprep.subr.bf16.mxu0 0
    %1517 = vmatpush1.bf16.msra.mxu0 0
    %1518 = vmatprep.subr.bf16.mxu0 0
    %1519 = vmatpush1.bf16.msra.mxu0 0
    %1520 = vmatprep.subr.bf16.mxu0 0
    %1521 = vmatpush1.bf16.msra.mxu0 0
    %1522 = vmatprep.mubr.bf16.mxu0 0
    %1523 = vmatmul.mubr.bf16.gmra.mrb[0].mxu0 %v1479
    %v1524 = vpop.f32.mrb[0].mxu0
    %v1525 = vadd.f32 0.0, %v1524
    %v1526 = vpop.f32.mrb[0].mxu0
    %v1527 = vpop.f32.mrb[0].mxu0
    %v1528 = vadd.f32 0.0, %v1527
    %v1529 = vpop.f32.mrb[0].mxu0
    %1530 = vmatprep.mubr.bf16.mxu0 0
    %1531 = vmatmul.mubr.bf16.gmra.mrb[0].mxu0 %v1482
    %v1532 = vpop.f32.mrb[0].mxu0
    %v1533 = vadd.f32 0.0, %v1532
    %v1534 = vpop.f32.mrb[0].mxu0
    %v1535 = vpop.f32.mrb[0].mxu0
    %v1536 = vadd.f32 0.0, %v1535
    %v1537 = vpop.f32.mrb[0].mxu0
    %1538 = vmatprep.mubr.bf16.mxu0 0
    %1539 = vmatmul.mubr.bf16.gmra.mrb[0].mxu0 %v1485
    %v1540 = vpop.f32.mrb[0].mxu0
    %v1541 = vadd.f32 0.0, %v1540
    %v1542 = vpop.f32.mrb[0].mxu0
    %v1543 = vpop.f32.mrb[0].mxu0
    %v1544 = vadd.f32 0.0, %v1543
    %v1545 = vpop.f32.mrb[0].mxu0
    %1546 = vmatprep.mubr.bf16.mxu0 0
    %1547 = vmatmul.mubr.bf16.gmra.mrb[0].mxu0 %v1488
    %v1548 = vpop.f32.mrb[0].mxu0
    %v1549 = vadd.f32 0.0, %v1548
    %v1550 = vpop.f32.mrb[0].mxu0
    %v1551 = vpop.f32.mrb[0].mxu0
    %v1552 = vadd.f32 0.0, %v1551
    %v1553 = vpop.f32.mrb[0].mxu0
    %1554 = vdwg.mxu0
    %1559 = vrot.lane.b32.xlu0 %v1080, 96
    %v1560 = vpop.permute.xlu0 %1559
    %1561 = vrot.lane.b32.xlu0 %v1081, 96
    %v1562 = vpop.permute.xlu0 %1561
    %1563 = vrot.lane.b32.xlu0 %v1082, 96
    %v1564 = vpop.permute.xlu0 %1563
    %1565 = vrot.lane.b32.xlu0 %v1083, 96
    %v1566 = vpop.permute.xlu0 %1565
    %v1572 = vsel %vm705, %v1458, 0
    %v1575 = vsel %vm705, %v1459, 0
    %v1578 = vsel %vm705, %v1460, 0
    %v1581 = vsel %vm705, %v1461, 0
    %1583 = vmatprep.subr.bf16.mxu0 0
    %1584 = vmatpush1.bf16.msra.mxu0 %v1560
    %1585 = vmatprep.subr.bf16.mxu0 0
    %1586 = vmatpush1.bf16.msra.mxu0 %v1562
    %1587 = vmatprep.subr.bf16.mxu0 0
    %1588 = vmatpush1.bf16.msra.mxu0 %v1564
    %1589 = vmatprep.subr.bf16.mxu0 0
    %1590 = vmatpush1.bf16.msra.mxu0 %v1566
    %1591 = vmatprep.subr.bf16.mxu0 0
    %1592 = vmatpush1.bf16.msra.mxu0 0
    %1593 = vmatprep.subr.bf16.mxu0 0
    %1594 = vmatpush1.bf16.msra.mxu0 0
    %1595 = vmatprep.subr.bf16.mxu0 0
    %1596 = vmatpush1.bf16.msra.mxu0 0
    %1597 = vmatprep.subr.bf16.mxu0 0
    %1598 = vmatpush1.bf16.msra.mxu0 0
    %1599 = vmatprep.subr.bf16.mxu0 0
    %1600 = vmatpush1.bf16.msra.mxu0 0
    %1601 = vmatprep.subr.bf16.mxu0 0
    %1602 = vmatpush1.bf16.msra.mxu0 0
    %1603 = vmatprep.subr.bf16.mxu0 0
    %1604 = vmatpush1.bf16.msra.mxu0 0
    %1605 = vmatprep.subr.bf16.mxu0 0
    %1606 = vmatpush1.bf16.msra.mxu0 0
    %1607 = vmatprep.subr.bf16.mxu0 0
    %1608 = vmatpush1.bf16.msra.mxu0 0
    %1609 = vmatprep.subr.bf16.mxu0 0
    %1610 = vmatpush1.bf16.msra.mxu0 0
    %1611 = vmatprep.subr.bf16.mxu0 0
    %1612 = vmatpush1.bf16.msra.mxu0 0
    %1613 = vmatprep.subr.bf16.mxu0 0
    %1614 = vmatpush1.bf16.msra.mxu0 0
    %1615 = vmatprep.mubr.bf16.mxu0 0
    %1616 = vmatmul.mubr.bf16.gmra.mrb[0].mxu0 %v1572
    %v1617 = vpop.f32.mrb[0].mxu0
    %v1618 = vadd.f32 0.0, %v1617
    %v1619 = vpop.f32.mrb[0].mxu0
    %v1620 = vpop.f32.mrb[0].mxu0
    %v1621 = vadd.f32 0.0, %v1620
    %v1622 = vpop.f32.mrb[0].mxu0
    %1623 = vmatprep.mubr.bf16.mxu0 0
    %1624 = vmatmul.mubr.bf16.gmra.mrb[0].mxu0 %v1575
    %v1625 = vpop.f32.mrb[0].mxu0
    %v1626 = vadd.f32 0.0, %v1625
    %v1627 = vpop.f32.mrb[0].mxu0
    %v1628 = vpop.f32.mrb[0].mxu0
    %v1629 = vadd.f32 0.0, %v1628
    %v1630 = vpop.f32.mrb[0].mxu0
    %1631 = vmatprep.mubr.bf16.mxu0 0
    %1632 = vmatmul.mubr.bf16.gmra.mrb[0].mxu0 %v1578
    %v1633 = vpop.f32.mrb[0].mxu0
    %v1634 = vadd.f32 0.0, %v1633
    %v1635 = vpop.f32.mrb[0].mxu0
    %v1636 = vpop.f32.mrb[0].mxu0
    %v1637 = vadd.f32 0.0, %v1636
    %v1638 = vpop.f32.mrb[0].mxu0
    %1639 = vmatprep.mubr.bf16.mxu0 0
    %1640 = vmatmul.mubr.bf16.gmra.mrb[0].mxu0 %v1581
    %v1641 = vpop.f32.mrb[0].mxu0
    %v1642 = vadd.f32 0.0, %v1641
    %v1643 = vpop.f32.mrb[0].mxu0
    %v1644 = vpop.f32.mrb[0].mxu0
    %v1645 = vadd.f32 0.0, %v1644
    %v1646 = vpop.f32.mrb[0].mxu0
    %1647 = vdwg.mxu0
    %v1648 = vrcp.pop %v1408
    %v1649 = vrcp.pop %v1411
    %v1650 = vrcp.pop %v1414
    %v1651 = vrcp.pop %v1417
    %v1652 = vrcp.pop %v1420
    %v1653 = vrcp.pop %v1423
    %v1654 = vrcp.pop %v1426
    %v1655 = vrcp.pop %v1429
    %v1656 = vrcp.pop %v1432
    %v1657 = vrcp.pop %v1435
    %v1658 = vrcp.pop %v1438
    %v1659 = vrcp.pop %v1441
    %v1660 = vrcp.pop %v1444
    %v1661 = vrcp.pop %v1447
    %v1662 = vrcp.pop %v1450
    %v1663 = vrcp.pop %v1453
    %v1664 = vmul.f32 %v1525, %v1648
    %v1665 = vmul.f32 %v1528, %v1649
    %v1666 = vmul.f32 %v1533, %v1650
    %v1667 = vmul.f32 %v1536, %v1651
    %v1668 = vmul.f32 %v1541, %v1652
    %v1669 = vmul.f32 %v1544, %v1653
    %v1670 = vmul.f32 %v1549, %v1654
    %v1671 = vmul.f32 %v1552, %v1655
    %v1672 = vmul.f32 %v1618, %v1656
    %v1673 = vmul.f32 %v1621, %v1657
    %v1674 = vmul.f32 %v1626, %v1658
    %v1675 = vmul.f32 %v1629, %v1659
    %v1676 = vmul.f32 %v1634, %v1660
    %v1677 = vmul.f32 %v1637, %v1661
    %v1678 = vmul.f32 %v1642, %v1662
    %v1679 = vmul.f32 %v1645, %v1663
    %v1680 = vpack.c.bf16 %v1665, %v1664
    %v1681 = vpack.c.bf16 %v1667, %v1666
    %v1682 = vpack.c.bf16 %v1669, %v1668
    %v1683 = vpack.c.bf16 %v1671, %v1670
    %v1684 = vpack.c.bf16 %v1673, %v1672
    %v1685 = vpack.c.bf16 %v1675, %v1674
    %v1686 = vpack.c.bf16 %v1677, %v1676
    %v1687 = vpack.c.bf16 %v1679, %v1678
    %1696 = vrot.lane.b32.xlu0 %v1680, 32
    %v1697 = vpop.permute.xlu0 %1696
    %1698 = vrot.lane.b32.xlu0 %v1681, 32
    %v1699 = vpop.permute.xlu0 %1698
    %1700 = vrot.lane.b32.xlu0 %v1682, 32
    %v1701 = vpop.permute.xlu0 %1700
    %1702 = vrot.lane.b32.xlu0 %v1683, 32
    %v1703 = vpop.permute.xlu0 %1702
    %1704 = vrot.lane.b32.xlu0 %v1684, 32
    %v1705 = vpop.permute.xlu0 %1704
    %1706 = vrot.lane.b32.xlu0 %v1685, 32
    %v1707 = vpop.permute.xlu0 %1706
    %1708 = vrot.lane.b32.xlu0 %v1686, 32
    %v1709 = vpop.permute.xlu0 %1708
    %1710 = vrot.lane.b32.xlu0 %v1687, 32
    %v1711 = vpop.permute.xlu0 %1710
    %vm1720 = vcmask 523520
    %1721 = vst.msk [vmem:[#allocation3] sm:$0xff] %vm1720, %v1697
    %1722 = vst.msk [vmem:[#allocation3 + $0x8] sm:$0xff] %vm1720, %v1699
    %1723 = vst.msk [vmem:[#allocation3 + $0x10] sm:$0xff] %vm1720, %v1701
    %1724 = vst.msk [vmem:[#allocation3 + $0x18] sm:$0xff] %vm1720, %v1703
    %1725 = vst.msk [vmem:[#allocation3 + $0x20] sm:$0xff] %vm1720, %v1705
    %1726 = vst.msk [vmem:[#allocation3 + $0x28] sm:$0xff] %vm1720, %v1707
    %1727 = vst.msk [vmem:[#allocation3 + $0x30] sm:$0xff] %vm1720, %v1709
    %1728 = vst.msk [vmem:[#allocation3 + $0x38] sm:$0xff] %vm1720, %v1711
    %v1729 = vld [vmem:[#allocation2] sm:$0xff]
    %v1730 = vld [vmem:[#allocation2 + $0x18] sm:$0xff]
    %v1731 = vld [vmem:[#allocation2 + $0x30] sm:$0xff]
    %v1732 = vld [vmem:[#allocation2 + $0x48] sm:$0xff]
    %v1733 = vld [vmem:[#allocation2 + $0x60] sm:$0xff]
    %v1734 = vld [vmem:[#allocation2 + $0x78] sm:$0xff]
    %v1735 = vld [vmem:[#allocation2 + $0x90] sm:$0xff]
    %v1736 = vld [vmem:[#allocation2 + $0xa8] sm:$0xff]
    %v1737 = vld [vmem:[#allocation2 + $0x8] sm:$0xff]
    %v1738 = vld [vmem:[#allocation2 + $0x20] sm:$0xff]
    %v1739 = vld [vmem:[#allocation2 + $0x38] sm:$0xff]
    %v1740 = vld [vmem:[#allocation2 + $0x50] sm:$0xff]
    %v1741 = vld [vmem:[#allocation2 + $0x68] sm:$0xff]
    %v1742 = vld [vmem:[#allocation2 + $0x80] sm:$0xff]
    %v1743 = vld [vmem:[#allocation2 + $0x98] sm:$0xff]
    %v1744 = vld [vmem:[#allocation2 + $0xb0] sm:$0xff]
    %v1745 = vld [vmem:[#allocation2 + $0x10] sm:$0xff]
    %v1746 = vld [vmem:[#allocation2 + $0x28] sm:$0xff]
    %v1747 = vld [vmem:[#allocation2 + $0x40] sm:$0xff]
    %v1748 = vld [vmem:[#allocation2 + $0x58] sm:$0xff]
    %v1749 = vld [vmem:[#allocation2 + $0x70] sm:$0xff]
    %v1750 = vld [vmem:[#allocation2 + $0x88] sm:$0xff]
    %v1751 = vld [vmem:[#allocation2 + $0xa0] sm:$0xff]
    %v1752 = vld [vmem:[#allocation2 + $0xb8] sm:$0xff]
    %1757 = vrot.lane.b32.xlu0 %v1729, 64
    %v1758 = vpop.permute.xlu0 %1757
    %1759 = vrot.lane.b32.xlu0 %v1730, 64
    %v1760 = vpop.permute.xlu0 %1759
    %1761 = vrot.lane.b32.xlu0 %v1731, 64
    %v1762 = vpop.permute.xlu0 %1761
    %1763 = vrot.lane.b32.xlu0 %v1732, 64
    %v1764 = vpop.permute.xlu0 %1763
    %1769 = vrot.lane.b32.xlu0 %v1737, 64
    %v1770 = vpop.permute.xlu0 %1769
    %1771 = vrot.lane.b32.xlu0 %v1738, 64
    %v1772 = vpop.permute.xlu0 %1771
    %1773 = vrot.lane.b32.xlu0 %v1739, 64
    %v1774 = vpop.permute.xlu0 %1773
    %1775 = vrot.lane.b32.xlu0 %v1740, 64
    %v1776 = vpop.permute.xlu0 %1775
    %v1778 = vsel %vm526, %v1758, 0
    %v1781 = vsel %vm526, %v1760, 0
    %v1784 = vsel %vm526, %v1762, 0
    %v1787 = vsel %vm526, %v1764, 0
    %v1790 = vsel %vm526, %v1770, 0
    %v1793 = vsel %vm526, %v1772, 0
    %v1796 = vsel %vm526, %v1774, 0
    %v1799 = vsel %vm526, %v1776, 0
    %1801 = vmatprep.subr.bf16.mxu0 0
    %1802 = vmatpush1.bf16.xpose.msra.mxu0 %v1790
    %1803 = vmatprep.subr.bf16.mxu0 0
    %1804 = vmatpush1.bf16.xpose.msra.mxu0 %v1793
    %1805 = vmatprep.subr.bf16.mxu0 0
    %1806 = vmatpush1.bf16.xpose.msra.mxu0 %v1796
    %1807 = vmatprep.subr.bf16.mxu0 0
    %1808 = vmatpush1.bf16.xpose.msra.mxu0 %v1799
    %1809 = vmatprep.subr.bf16.mxu0 0
    %1810 = vmatpush1.bf16.xpose.msra.mxu0 0
    %1811 = vmatprep.subr.bf16.mxu0 0
    %1812 = vmatpush1.bf16.xpose.msra.mxu0 0
    %1813 = vmatprep.subr.bf16.mxu0 0
    %1814 = vmatpush1.bf16.xpose.msra.mxu0 0
    %1815 = vmatprep.subr.bf16.mxu0 0
    %1816 = vmatpush1.bf16.xpose.msra.mxu0 0
    %1817 = vmatprep.subr.bf16.mxu0 0
    %1818 = vmatpush1.bf16.xpose.msra.mxu0 0
    %1819 = vmatprep.subr.bf16.mxu0 0
    %1820 = vmatpush1.bf16.xpose.msra.mxu0 0
    %1821 = vmatprep.subr.bf16.mxu0 0
    %1822 = vmatpush1.bf16.xpose.msra.mxu0 0
    %1823 = vmatprep.subr.bf16.mxu0 0
    %1824 = vmatpush1.bf16.xpose.msra.mxu0 0
    %1825 = vmatprep.subr.bf16.mxu0 0
    %1826 = vmatpush1.bf16.xpose.msra.mxu0 0
    %1827 = vmatprep.subr.bf16.mxu0 0
    %1828 = vmatpush1.bf16.xpose.msra.mxu0 0
    %1829 = vmatprep.subr.bf16.mxu0 0
    %1830 = vmatpush1.bf16.xpose.msra.mxu0 0
    %1831 = vmatprep.subr.bf16.mxu0 0
    %1832 = vmatpush1.bf16.xpose.msra.mxu0 0
    %1833 = vmatprep.mubr.bf16.mxu0 0
    %1834 = vmatmul.mubr.bf16.gmra.mrb[0].mxu0 %v1778
    %v1835 = vpop.f32.mrb[0].mxu0
    %v1836 = vadd.f32 0.0, %v1835
    %v1837 = vpop.f32.mrb[0].mxu0
    %v1838 = vpop.f32.mrb[0].mxu0
    %v1839 = vadd.f32 0.0, %v1838
    %v1840 = vpop.f32.mrb[0].mxu0
    %1841 = vmatprep.mubr.bf16.mxu0 0
    %1842 = vmatmul.mubr.bf16.gmra.mrb[0].mxu0 %v1781
    %v1843 = vpop.f32.mrb[0].mxu0
    %v1844 = vadd.f32 0.0, %v1843
    %v1845 = vpop.f32.mrb[0].mxu0
    %v1846 = vpop.f32.mrb[0].mxu0
    %v1847 = vadd.f32 0.0, %v1846
    %v1848 = vpop.f32.mrb[0].mxu0
    %1849 = vmatprep.mubr.bf16.mxu0 0
    %1850 = vmatmul.mubr.bf16.gmra.mrb[0].mxu0 %v1784
    %v1851 = vpop.f32.mrb[0].mxu0
    %v1852 = vadd.f32 0.0, %v1851
    %v1853 = vpop.f32.mrb[0].mxu0
    %v1854 = vpop.f32.mrb[0].mxu0
    %v1855 = vadd.f32 0.0, %v1854
    %v1856 = vpop.f32.mrb[0].mxu0
    %1857 = vmatprep.mubr.bf16.mxu0 0
    %1858 = vmatmul.mubr.bf16.gmra.mrb[0].mxu0 %v1787
    %v1859 = vpop.f32.mrb[0].mxu0
    %v1860 = vadd.f32 0.0, %v1859
    %v1861 = vpop.f32.mrb[0].mxu0
    %v1862 = vpop.f32.mrb[0].mxu0
    %v1863 = vadd.f32 0.0, %v1862
    %v1864 = vpop.f32.mrb[0].mxu0
    %1865 = vdwg.mxu0
    %1870 = vrot.lane.b32.xlu0 %v1733, 64
    %v1871 = vpop.permute.xlu0 %1870
    %1872 = vrot.lane.b32.xlu0 %v1734, 64
    %v1873 = vpop.permute.xlu0 %1872
    %1874 = vrot.lane.b32.xlu0 %v1735, 64
    %v1875 = vpop.permute.xlu0 %1874
    %1876 = vrot.lane.b32.xlu0 %v1736, 64
    %v1877 = vpop.permute.xlu0 %1876
    %1882 = vrot.lane.b32.xlu0 %v1741, 64
    %v1883 = vpop.permute.xlu0 %1882
    %1884 = vrot.lane.b32.xlu0 %v1742, 64
    %v1885 = vpop.permute.xlu0 %1884
    %1886 = vrot.lane.b32.xlu0 %v1743, 64
    %v1887 = vpop.permute.xlu0 %1886
    %1888 = vrot.lane.b32.xlu0 %v1744, 64
    %v1889 = vpop.permute.xlu0 %1888
    %v1891 = vsel %vm526, %v1871, 0
    %v1894 = vsel %vm526, %v1873, 0
    %v1897 = vsel %vm526, %v1875, 0
    %v1900 = vsel %vm526, %v1877, 0
    %v1903 = vsel %vm526, %v1883, 0
    %v1906 = vsel %vm526, %v1885, 0
    %v1909 = vsel %vm526, %v1887, 0
    %v1912 = vsel %vm526, %v1889, 0
    %1914 = vmatprep.subr.bf16.mxu0 0
    %1915 = vmatpush1.bf16.xpose.msra.mxu0 %v1903
    %1916 = vmatprep.subr.bf16.mxu0 0
    %1917 = vmatpush1.bf16.xpose.msra.mxu0 %v1906
    %1918 = vmatprep.subr.bf16.mxu0 0
    %1919 = vmatpush1.bf16.xpose.msra.mxu0 %v1909
    %1920 = vmatprep.subr.bf16.mxu0 0
    %1921 = vmatpush1.bf16.xpose.msra.mxu0 %v1912
    %1922 = vmatprep.subr.bf16.mxu0 0
    %1923 = vmatpush1.bf16.xpose.msra.mxu0 0
    %1924 = vmatprep.subr.bf16.mxu0 0
    %1925 = vmatpush1.bf16.xpose.msra.mxu0 0
    %1926 = vmatprep.subr.bf16.mxu0 0
    %1927 = vmatpush1.bf16.xpose.msra.mxu0 0
    %1928 = vmatprep.subr.bf16.mxu0 0
    %1929 = vmatpush1.bf16.xpose.msra.mxu0 0
    %1930 = vmatprep.subr.bf16.mxu0 0
    %1931 = vmatpush1.bf16.xpose.msra.mxu0 0
    %1932 = vmatprep.subr.bf16.mxu0 0
    %1933 = vmatpush1.bf16.xpose.msra.mxu0 0
    %1934 = vmatprep.subr.bf16.mxu0 0
    %1935 = vmatpush1.bf16.xpose.msra.mxu0 0
    %1936 = vmatprep.subr.bf16.mxu0 0
    %1937 = vmatpush1.bf16.xpose.msra.mxu0 0
    %1938 = vmatprep.subr.bf16.mxu0 0
    %1939 = vmatpush1.bf16.xpose.msra.mxu0 0
    %1940 = vmatprep.subr.bf16.mxu0 0
    %1941 = vmatpush1.bf16.xpose.msra.mxu0 0
    %1942 = vmatprep.subr.bf16.mxu0 0
    %1943 = vmatpush1.bf16.xpose.msra.mxu0 0
    %1944 = vmatprep.subr.bf16.mxu0 0
    %1945 = vmatpush1.bf16.xpose.msra.mxu0 0
    %1946 = vmatprep.mubr.bf16.mxu0 0
    %1947 = vmatmul.mubr.bf16.gmra.mrb[0].mxu0 %v1891
    %v1948 = vpop.f32.mrb[0].mxu0
    %v1949 = vadd.f32 0.0, %v1948
    %v1950 = vpop.f32.mrb[0].mxu0
    %v1951 = vpop.f32.mrb[0].mxu0
    %v1952 = vadd.f32 0.0, %v1951
    %v1953 = vpop.f32.mrb[0].mxu0
    %1954 = vmatprep.mubr.bf16.mxu0 0
    %1955 = vmatmul.mubr.bf16.gmra.mrb[0].mxu0 %v1894
    %v1956 = vpop.f32.mrb[0].mxu0
    %v1957 = vadd.f32 0.0, %v1956
    %v1958 = vpop.f32.mrb[0].mxu0
    %v1959 = vpop.f32.mrb[0].mxu0
    %v1960 = vadd.f32 0.0, %v1959
    %v1961 = vpop.f32.mrb[0].mxu0
    %1962 = vmatprep.mubr.bf16.mxu0 0
    %1963 = vmatmul.mubr.bf16.gmra.mrb[0].mxu0 %v1897
    %v1964 = vpop.f32.mrb[0].mxu0
    %v1965 = vadd.f32 0.0, %v1964
    %v1966 = vpop.f32.mrb[0].mxu0
    %v1967 = vpop.f32.mrb[0].mxu0
    %v1968 = vadd.f32 0.0, %v1967
    %v1969 = vpop.f32.mrb[0].mxu0
    %1970 = vmatprep.mubr.bf16.mxu0 0
    %1971 = vmatmul.mubr.bf16.gmra.mrb[0].mxu0 %v1900
    %v1972 = vpop.f32.mrb[0].mxu0
    %v1973 = vadd.f32 0.0, %v1972
    %v1974 = vpop.f32.mrb[0].mxu0
    %v1975 = vpop.f32.mrb[0].mxu0
    %v1976 = vadd.f32 0.0, %v1975
    %v1977 = vpop.f32.mrb[0].mxu0
    %1978 = vdwg.mxu0
    %v1979 = vsel %vm705, %v1836, -inf
    %1980 = vmax.xlane.f32.xlu0 %v1979
    %v1981 = vpop.xlane.xlu0 %1980
    %v1982 = vsel %vm705, %v1839, -inf
    %1983 = vmax.xlane.f32.xlu0 %v1982
    %v1984 = vpop.xlane.xlu0 %1983
    %v1985 = vsel %vm705, %v1844, -inf
    %1986 = vmax.xlane.f32.xlu0 %v1985
    %v1987 = vpop.xlane.xlu0 %1986
    %v1988 = vsel %vm705, %v1847, -inf
    %1989 = vmax.xlane.f32.xlu0 %v1988
    %v1990 = vpop.xlane.xlu0 %1989
    %v1991 = vsel %vm705, %v1852, -inf
    %1992 = vmax.xlane.f32.xlu0 %v1991
    %v1993 = vpop.xlane.xlu0 %1992
    %v1994 = vsel %vm705, %v1855, -inf
    %1995 = vmax.xlane.f32.xlu0 %v1994
    %v1996 = vpop.xlane.xlu0 %1995
    %v1997 = vsel %vm705, %v1860, -inf
    %1998 = vmax.xlane.f32.xlu0 %v1997
    %v1999 = vpop.xlane.xlu0 %1998
    %v2000 = vsel %vm705, %v1863, -inf
    %2001 = vmax.xlane.f32.xlu0 %v2000
    %v2002 = vpop.xlane.xlu0 %2001
    %v2003 = vsel %vm705, %v1949, -inf
    %2004 = vmax.xlane.f32.xlu0 %v2003
    %v2005 = vpop.xlane.xlu0 %2004
    %v2006 = vsel %vm705, %v1952, -inf
    %2007 = vmax.xlane.f32.xlu0 %v2006
    %v2008 = vpop.xlane.xlu0 %2007
    %v2009 = vsel %vm705, %v1957, -inf
    %2010 = vmax.xlane.f32.xlu0 %v2009
    %v2011 = vpop.xlane.xlu0 %2010
    %v2012 = vsel %vm705, %v1960, -inf
    %2013 = vmax.xlane.f32.xlu0 %v2012
    %v2014 = vpop.xlane.xlu0 %2013
    %v2015 = vsel %vm705, %v1965, -inf
    %2016 = vmax.xlane.f32.xlu0 %v2015
    %v2017 = vpop.xlane.xlu0 %2016
    %v2018 = vsel %vm705, %v1968, -inf
    %2019 = vmax.xlane.f32.xlu0 %v2018
    %v2020 = vpop.xlane.xlu0 %2019
    %v2021 = vsel %vm705, %v1973, -inf
    %2022 = vmax.xlane.f32.xlu0 %v2021
    %v2023 = vpop.xlane.xlu0 %2022
    %v2024 = vsel %vm705, %v1976, -inf
    %2025 = vmax.xlane.f32.xlu0 %v2024
    %v2026 = vpop.xlane.xlu0 %2025
    %v2027 = vsub.f32 %v1836, %v1981
    %v2028 = vsub.f32 %v1839, %v1984
    %v2029 = vsub.f32 %v1844, %v1987
    %v2030 = vsub.f32 %v1847, %v1990
    %v2031 = vsub.f32 %v1852, %v1993
    %v2032 = vsub.f32 %v1855, %v1996
    %v2033 = vsub.f32 %v1860, %v1999
    %v2034 = vsub.f32 %v1863, %v2002
    %v2035 = vsub.f32 %v1949, %v2005
    %v2036 = vsub.f32 %v1952, %v2008
    %v2037 = vsub.f32 %v1957, %v2011
    %v2038 = vsub.f32 %v1960, %v2014
    %v2039 = vsub.f32 %v1965, %v2017
    %v2040 = vsub.f32 %v1968, %v2020
    %v2041 = vsub.f32 %v1973, %v2023
    %v2042 = vsub.f32 %v1976, %v2026
    %v2043 = vmul.f32 %v2027, 1.442695
    %v2044 = vpow.pop %v2043
    %v2045 = vmul.f32 %v2028, 1.442695
    %v2046 = vpow.pop %v2045
    %v2047 = vmul.f32 %v2029, 1.442695
    %v2048 = vpow.pop %v2047
    %v2049 = vmul.f32 %v2030, 1.442695
    %v2050 = vpow.pop %v2049
    %v2051 = vmul.f32 %v2031, 1.442695
    %v2052 = vpow.pop %v2051
    %v2053 = vmul.f32 %v2032, 1.442695
    %v2054 = vpow.pop %v2053
    %v2055 = vmul.f32 %v2033, 1.442695
    %v2056 = vpow.pop %v2055
    %v2057 = vmul.f32 %v2034, 1.442695
    %v2058 = vpow.pop %v2057
    %v2059 = vmul.f32 %v2035, 1.442695
    %v2060 = vpow.pop %v2059
    %v2061 = vmul.f32 %v2036, 1.442695
    %v2062 = vpow.pop %v2061
    %v2063 = vmul.f32 %v2037, 1.442695
    %v2064 = vpow.pop %v2063
    %v2065 = vmul.f32 %v2038, 1.442695
    %v2066 = vpow.pop %v2065
    %v2067 = vmul.f32 %v2039, 1.442695
    %v2068 = vpow.pop %v2067
    %v2069 = vmul.f32 %v2040, 1.442695
    %v2070 = vpow.pop %v2069
    %v2071 = vmul.f32 %v2041, 1.442695
    %v2072 = vpow.pop %v2071
    %v2073 = vmul.f32 %v2042, 1.442695
    %v2074 = vpow.pop %v2073
    %v2075 = vsel %vm705, %v2044, 0.0
    %2076 = vadd.xlane.f32.xlu0 %v2075
    %v2077 = vpop.xlane.xlu0 %2076
    %v2078 = vsel %vm705, %v2046, 0.0
    %2079 = vadd.xlane.f32.xlu0 %v2078
    %v2080 = vpop.xlane.xlu0 %2079
    %v2081 = vsel %vm705, %v2048, 0.0
    %2082 = vadd.xlane.f32.xlu0 %v2081
    %v2083 = vpop.xlane.xlu0 %2082
    %v2084 = vsel %vm705, %v2050, 0.0
    %2085 = vadd.xlane.f32.xlu0 %v2084
    %v2086 = vpop.xlane.xlu0 %2085
    %v2087 = vsel %vm705, %v2052, 0.0
    %2088 = vadd.xlane.f32.xlu0 %v2087
    %v2089 = vpop.xlane.xlu0 %2088
    %v2090 = vsel %vm705, %v2054, 0.0
    %2091 = vadd.xlane.f32.xlu0 %v2090
    %v2092 = vpop.xlane.xlu0 %2091
    %v2093 = vsel %vm705, %v2056, 0.0
    %2094 = vadd.xlane.f32.xlu0 %v2093
    %v2095 = vpop.xlane.xlu0 %2094
    %v2096 = vsel %vm705, %v2058, 0.0
    %2097 = vadd.xlane.f32.xlu0 %v2096
    %v2098 = vpop.xlane.xlu0 %2097
    %v2099 = vsel %vm705, %v2060, 0.0
    %2100 = vadd.xlane.f32.xlu0 %v2099
    %v2101 = vpop.xlane.xlu0 %2100
    %v2102 = vsel %vm705, %v2062, 0.0
    %2103 = vadd.xlane.f32.xlu0 %v2102
    %v2104 = vpop.xlane.xlu0 %2103
    %v2105 = vsel %vm705, %v2064, 0.0
    %2106 = vadd.xlane.f32.xlu0 %v2105
    %v2107 = vpop.xlane.xlu0 %2106
    %v2108 = vsel %vm705, %v2066, 0.0
    %2109 = vadd.xlane.f32.xlu0 %v2108
    %v2110 = vpop.xlane.xlu0 %2109
    %v2111 = vsel %vm705, %v2068, 0.0
    %2112 = vadd.xlane.f32.xlu0 %v2111
    %v2113 = vpop.xlane.xlu0 %2112
    %v2114 = vsel %vm705, %v2070, 0.0
    %2115 = vadd.xlane.f32.xlu0 %v2114
    %v2116 = vpop.xlane.xlu0 %2115
    %v2117 = vsel %vm705, %v2072, 0.0
    %2118 = vadd.xlane.f32.xlu0 %v2117
    %v2119 = vpop.xlane.xlu0 %2118
    %v2120 = vsel %vm705, %v2074, 0.0
    %2121 = vadd.xlane.f32.xlu0 %v2120
    %v2122 = vpop.xlane.xlu0 %2121
    %v2123 = vpack.c.bf16 %v2046, %v2044
    %v2124 = vpack.c.bf16 %v2050, %v2048
    %v2125 = vpack.c.bf16 %v2054, %v2052
    %v2126 = vpack.c.bf16 %v2058, %v2056
    %v2127 = vpack.c.bf16 %v2062, %v2060
    %v2128 = vpack.c.bf16 %v2066, %v2064
    %v2129 = vpack.c.bf16 %v2070, %v2068
    %v2130 = vpack.c.bf16 %v2074, %v2072
    %2135 = vrot.lane.b32.xlu0 %v1745, 64
    %v2136 = vpop.permute.xlu0 %2135
    %2137 = vrot.lane.b32.xlu0 %v1746, 64
    %v2138 = vpop.permute.xlu0 %2137
    %2139 = vrot.lane.b32.xlu0 %v1747, 64
    %v2140 = vpop.permute.xlu0 %2139
    %2141 = vrot.lane.b32.xlu0 %v1748, 64
    %v2142 = vpop.permute.xlu0 %2141
    %v2148 = vsel %vm705, %v2123, 0
    %v2151 = vsel %vm705, %v2124, 0
    %v2154 = vsel %vm705, %v2125, 0
    %v2157 = vsel %vm705, %v2126, 0
    %2159 = vmatprep.subr.bf16.mxu0 0
    %2160 = vmatpush1.bf16.msra.mxu0 %v2136
    %2161 = vmatprep.subr.bf16.mxu0 0
    %2162 = vmatpush1.bf16.msra.mxu0 %v2138
    %2163 = vmatprep.subr.bf16.mxu0 0
    %2164 = vmatpush1.bf16.msra.mxu0 %v2140
    %2165 = vmatprep.subr.bf16.mxu0 0
    %2166 = vmatpush1.bf16.msra.mxu0 %v2142
    %2167 = vmatprep.subr.bf16.mxu0 0
    %2168 = vmatpush1.bf16.msra.mxu0 0
    %2169 = vmatprep.subr.bf16.mxu0 0
    %2170 = vmatpush1.bf16.msra.mxu0 0
    %2171 = vmatprep.subr.bf16.mxu0 0
    %2172 = vmatpush1.bf16.msra.mxu0 0
    %2173 = vmatprep.subr.bf16.mxu0 0
    %2174 = vmatpush1.bf16.msra.mxu0 0
    %2175 = vmatprep.subr.bf16.mxu0 0
    %2176 = vmatpush1.bf16.msra.mxu0 0
    %2177 = vmatprep.subr.bf16.mxu0 0
    %2178 = vmatpush1.bf16.msra.mxu0 0
    %2179 = vmatprep.subr.bf16.mxu0 0
    %2180 = vmatpush1.bf16.msra.mxu0 0
    %2181 = vmatprep.subr.bf16.mxu0 0
    %2182 = vmatpush1.bf16.msra.mxu0 0
    %2183 = vmatprep.subr.bf16.mxu0 0
    %2184 = vmatpush1.bf16.msra.mxu0 0
    %2185 = vmatprep.subr.bf16.mxu0 0
    %2186 = vmatpush1.bf16.msra.mxu0 0
    %2187 = vmatprep.subr.bf16.mxu0 0
    %2188 = vmatpush1.bf16.msra.mxu0 0
    %2189 = vmatprep.subr.bf16.mxu0 0
    %2190 = vmatpush1.bf16.msra.mxu0 0
    %2191 = vmatprep.mubr.bf16.mxu0 0
    %2192 = vmatmul.mubr.bf16.gmra.mrb[0].mxu0 %v2148
    %v2193 = vpop.f32.mrb[0].mxu0
    %v2194 = vadd.f32 0.0, %v2193
    %v2195 = vpop.f32.mrb[0].mxu0
    %v2196 = vpop.f32.mrb[0].mxu0
    %v2197 = vadd.f32 0.0, %v2196
    %v2198 = vpop.f32.mrb[0].mxu0
    %2199 = vmatprep.mubr.bf16.mxu0 0
    %2200 = vmatmul.mubr.bf16.gmra.mrb[0].mxu0 %v2151
    %v2201 = vpop.f32.mrb[0].mxu0
    %v2202 = vadd.f32 0.0, %v2201
    %v2203 = vpop.f32.mrb[0].mxu0
    %v2204 = vpop.f32.mrb[0].mxu0
    %v2205 = vadd.f32 0.0, %v2204
    %v2206 = vpop.f32.mrb[0].mxu0
    %2207 = vmatprep.mubr.bf16.mxu0 0
    %2208 = vmatmul.mubr.bf16.gmra.mrb[0].mxu0 %v2154
    %v2209 = vpop.f32.mrb[0].mxu0
    %v2210 = vadd.f32 0.0, %v2209
    %v2211 = vpop.f32.mrb[0].mxu0
    %v2212 = vpop.f32.mrb[0].mxu0
    %v2213 = vadd.f32 0.0, %v2212
    %v2214 = vpop.f32.mrb[0].mxu0
    %2215 = vmatprep.mubr.bf16.mxu0 0
    %2216 = vmatmul.mubr.bf16.gmra.mrb[0].mxu0 %v2157
    %v2217 = vpop.f32.mrb[0].mxu0
    %v2218 = vadd.f32 0.0, %v2217
    %v2219 = vpop.f32.mrb[0].mxu0
    %v2220 = vpop.f32.mrb[0].mxu0
    %v2221 = vadd.f32 0.0, %v2220
    %v2222 = vpop.f32.mrb[0].mxu0
    %2223 = vdwg.mxu0
    %2228 = vrot.lane.b32.xlu0 %v1749, 64
    %v2229 = vpop.permute.xlu0 %2228
    %2230 = vrot.lane.b32.xlu0 %v1750, 64
    %v2231 = vpop.permute.xlu0 %2230
    %2232 = vrot.lane.b32.xlu0 %v1751, 64
    %v2233 = vpop.permute.xlu0 %2232
    %2234 = vrot.lane.b32.xlu0 %v1752, 64
    %v2235 = vpop.permute.xlu0 %2234
    %v2241 = vsel %vm705, %v2127, 0
    %v2244 = vsel %vm705, %v2128, 0
    %v2247 = vsel %vm705, %v2129, 0
    %v2250 = vsel %vm705, %v2130, 0
    %2252 = vmatprep.subr.bf16.mxu0 0
    %2253 = vmatpush1.bf16.msra.mxu0 %v2229
    %2254 = vmatprep.subr.bf16.mxu0 0
    %2255 = vmatpush1.bf16.msra.mxu0 %v2231
    %2256 = vmatprep.subr.bf16.mxu0 0
    %2257 = vmatpush1.bf16.msra.mxu0 %v2233
    %2258 = vmatprep.subr.bf16.mxu0 0
    %2259 = vmatpush1.bf16.msra.mxu0 %v2235
    %2260 = vmatprep.subr.bf16.mxu0 0
    %2261 = vmatpush1.bf16.msra.mxu0 0
    %2262 = vmatprep.subr.bf16.mxu0 0
    %2263 = vmatpush1.bf16.msra.mxu0 0
    %2264 = vmatprep.subr.bf16.mxu0 0
    %2265 = vmatpush1.bf16.msra.mxu0 0
    %2266 = vmatprep.subr.bf16.mxu0 0
    %2267 = vmatpush1.bf16.msra.mxu0 0
    %2268 = vmatprep.subr.bf16.mxu0 0
    %2269 = vmatpush1.bf16.msra.mxu0 0
    %2270 = vmatprep.subr.bf16.mxu0 0
    %2271 = vmatpush1.bf16.msra.mxu0 0
    %2272 = vmatprep.subr.bf16.mxu0 0
    %2273 = vmatpush1.bf16.msra.mxu0 0
    %2274 = vmatprep.subr.bf16.mxu0 0
    %2275 = vmatpush1.bf16.msra.mxu0 0
    %2276 = vmatprep.subr.bf16.mxu0 0
    %2277 = vmatpush1.bf16.msra.mxu0 0
    %2278 = vmatprep.subr.bf16.mxu0 0
    %2279 = vmatpush1.bf16.msra.mxu0 0
    %2280 = vmatprep.subr.bf16.mxu0 0
    %2281 = vmatpush1.bf16.msra.mxu0 0
    %2282 = vmatprep.subr.bf16.mxu0 0
    %2283 = vmatpush1.bf16.msra.mxu0 0
    %2284 = vmatprep.mubr.bf16.mxu0 0
    %2285 = vmatmul.mubr.bf16.gmra.mrb[0].mxu0 %v2241
    %v2286 = vpop.f32.mrb[0].mxu0
    %v2287 = vadd.f32 0.0, %v2286
    %v2288 = vpop.f32.mrb[0].mxu0
    %v2289 = vpop.f32.mrb[0].mxu0
    %v2290 = vadd.f32 0.0, %v2289
    %v2291 = vpop.f32.mrb[0].mxu0
    %2292 = vmatprep.mubr.bf16.mxu0 0
    %2293 = vmatmul.mubr.bf16.gmra.mrb[0].mxu0 %v2244
    %v2294 = vpop.f32.mrb[0].mxu0
    %v2295 = vadd.f32 0.0, %v2294
    %v2296 = vpop.f32.mrb[0].mxu0
    %v2297 = vpop.f32.mrb[0].mxu0
    %v2298 = vadd.f32 0.0, %v2297
    %v2299 = vpop.f32.mrb[0].mxu0
    %2300 = vmatprep.mubr.bf16.mxu0 0
    %2301 = vmatmul.mubr.bf16.gmra.mrb[0].mxu0 %v2247
    %v2302 = vpop.f32.mrb[0].mxu0
    %v2303 = vadd.f32 0.0, %v2302
    %v2304 = vpop.f32.mrb[0].mxu0
    %v2305 = vpop.f32.mrb[0].mxu0
    %v2306 = vadd.f32 0.0, %v2305
    %v2307 = vpop.f32.mrb[0].mxu0
    %2308 = vmatprep.mubr.bf16.mxu0 0
    %2309 = vmatmul.mubr.bf16.gmra.mrb[0].mxu0 %v2250
    %v2310 = vpop.f32.mrb[0].mxu0
    %v2311 = vadd.f32 0.0, %v2310
    %v2312 = vpop.f32.mrb[0].mxu0
    %v2313 = vpop.f32.mrb[0].mxu0
    %v2314 = vadd.f32 0.0, %v2313
    %v2315 = vpop.f32.mrb[0].mxu0
    %2316 = vdwg.mxu0
    %v2317 = vrcp.pop %v2077
    %v2318 = vrcp.pop %v2080
    %v2319 = vrcp.pop %v2083
    %v2320 = vrcp.pop %v2086
    %v2321 = vrcp.pop %v2089
    %v2322 = vrcp.pop %v2092
    %v2323 = vrcp.pop %v2095
    %v2324 = vrcp.pop %v2098
    %v2325 = vrcp.pop %v2101
    %v2326 = vrcp.pop %v2104
    %v2327 = vrcp.pop %v2107
    %v2328 = vrcp.pop %v2110
    %v2329 = vrcp.pop %v2113
    %v2330 = vrcp.pop %v2116
    %v2331 = vrcp.pop %v2119
    %v2332 = vrcp.pop %v2122
    %v2333 = vmul.f32 %v2194, %v2317
    %v2334 = vmul.f32 %v2197, %v2318
    %v2335 = vmul.f32 %v2202, %v2319
    %v2336 = vmul.f32 %v2205, %v2320
    %v2337 = vmul.f32 %v2210, %v2321
    %v2338 = vmul.f32 %v2213, %v2322
    %v2339 = vmul.f32 %v2218, %v2323
    %v2340 = vmul.f32 %v2221, %v2324
    %v2341 = vmul.f32 %v2287, %v2325
    %v2342 = vmul.f32 %v2290, %v2326
    %v2343 = vmul.f32 %v2295, %v2327
    %v2344 = vmul.f32 %v2298, %v2328
    %v2345 = vmul.f32 %v2303, %v2329
    %v2346 = vmul.f32 %v2306, %v2330
    %v2347 = vmul.f32 %v2311, %v2331
    %v2348 = vmul.f32 %v2314, %v2332
    %v2349 = vpack.c.bf16 %v2334, %v2333
    %v2350 = vpack.c.bf16 %v2336, %v2335
    %v2351 = vpack.c.bf16 %v2338, %v2337
    %v2352 = vpack.c.bf16 %v2340, %v2339
    %v2353 = vpack.c.bf16 %v2342, %v2341
    %v2354 = vpack.c.bf16 %v2344, %v2343
    %v2355 = vpack.c.bf16 %v2346, %v2345
    %v2356 = vpack.c.bf16 %v2348, %v2347
    %2365 = vrot.lane.b32.xlu0 %v2349, 64
    %v2366 = vpop.permute.xlu0 %2365
    %2367 = vrot.lane.b32.xlu0 %v2350, 64
    %v2368 = vpop.permute.xlu0 %2367
    %2369 = vrot.lane.b32.xlu0 %v2351, 64
    %v2370 = vpop.permute.xlu0 %2369
    %2371 = vrot.lane.b32.xlu0 %v2352, 64
    %v2372 = vpop.permute.xlu0 %2371
    %2373 = vrot.lane.b32.xlu0 %v2353, 64
    %v2374 = vpop.permute.xlu0 %2373
    %2375 = vrot.lane.b32.xlu0 %v2354, 64
    %v2376 = vpop.permute.xlu0 %2375
    %2377 = vrot.lane.b32.xlu0 %v2355, 64
    %v2378 = vpop.permute.xlu0 %2377
    %2379 = vrot.lane.b32.xlu0 %v2356, 64
    %v2380 = vpop.permute.xlu0 %2379
    %vm2389 = vcmask 785920
    %2390 = vst.msk [vmem:[#allocation3] sm:$0xff] %vm2389, %v2366
    %2391 = vst.msk [vmem:[#allocation3 + $0x8] sm:$0xff] %vm2389, %v2368
    %2392 = vst.msk [vmem:[#allocation3 + $0x10] sm:$0xff] %vm2389, %v2370
    %2393 = vst.msk [vmem:[#allocation3 + $0x18] sm:$0xff] %vm2389, %v2372
    %2394 = vst.msk [vmem:[#allocation3 + $0x20] sm:$0xff] %vm2389, %v2374
    %2395 = vst.msk [vmem:[#allocation3 + $0x28] sm:$0xff] %vm2389, %v2376
    %2396 = vst.msk [vmem:[#allocation3 + $0x30] sm:$0xff] %vm2389, %v2378
    %2397 = vst.msk [vmem:[#allocation3 + $0x38] sm:$0xff] %vm2389, %v2380
    %v2398 = vld [vmem:[#allocation2] sm:$0xff]
    %v2399 = vld [vmem:[#allocation2 + $0x18] sm:$0xff]
    %v2400 = vld [vmem:[#allocation2 + $0x30] sm:$0xff]
    %v2401 = vld [vmem:[#allocation2 + $0x48] sm:$0xff]
    %v2402 = vld [vmem:[#allocation2 + $0x60] sm:$0xff]
    %v2403 = vld [vmem:[#allocation2 + $0x78] sm:$0xff]
    %v2404 = vld [vmem:[#allocation2 + $0x90] sm:$0xff]
    %v2405 = vld [vmem:[#allocation2 + $0xa8] sm:$0xff]
    %v2406 = vld [vmem:[#allocation2 + $0x8] sm:$0xff]
    %v2407 = vld [vmem:[#allocation2 + $0x20] sm:$0xff]
    %v2408 = vld [vmem:[#allocation2 + $0x38] sm:$0xff]
    %v2409 = vld [vmem:[#allocation2 + $0x50] sm:$0xff]
    %v2410 = vld [vmem:[#allocation2 + $0x68] sm:$0xff]
    %v2411 = vld [vmem:[#allocation2 + $0x80] sm:$0xff]
    %v2412 = vld [vmem:[#allocation2 + $0x98] sm:$0xff]
    %v2413 = vld [vmem:[#allocation2 + $0xb0] sm:$0xff]
    %v2414 = vld [vmem:[#allocation2 + $0x10] sm:$0xff]
    %v2415 = vld [vmem:[#allocation2 + $0x28] sm:$0xff]
    %v2416 = vld [vmem:[#allocation2 + $0x40] sm:$0xff]
    %v2417 = vld [vmem:[#allocation2 + $0x58] sm:$0xff]
    %v2418 = vld [vmem:[#allocation2 + $0x70] sm:$0xff]
    %v2419 = vld [vmem:[#allocation2 + $0x88] sm:$0xff]
    %v2420 = vld [vmem:[#allocation2 + $0xa0] sm:$0xff]
    %v2421 = vld [vmem:[#allocation2 + $0xb8] sm:$0xff]
    %2426 = vrot.lane.b32.xlu0 %v2398, 32
    %v2427 = vpop.permute.xlu0 %2426
    %2428 = vrot.lane.b32.xlu0 %v2399, 32
    %v2429 = vpop.permute.xlu0 %2428
    %2430 = vrot.lane.b32.xlu0 %v2400, 32
    %v2431 = vpop.permute.xlu0 %2430
    %2432 = vrot.lane.b32.xlu0 %v2401, 32
    %v2433 = vpop.permute.xlu0 %2432
    %2438 = vrot.lane.b32.xlu0 %v2406, 32
    %v2439 = vpop.permute.xlu0 %2438
    %2440 = vrot.lane.b32.xlu0 %v2407, 32
    %v2441 = vpop.permute.xlu0 %2440
    %2442 = vrot.lane.b32.xlu0 %v2408, 32
    %v2443 = vpop.permute.xlu0 %2442
    %2444 = vrot.lane.b32.xlu0 %v2409, 32
    %v2445 = vpop.permute.xlu0 %2444
    %v2447 = vsel %vm526, %v2427, 0
    %v2450 = vsel %vm526, %v2429, 0
    %v2453 = vsel %vm526, %v2431, 0
    %v2456 = vsel %vm526, %v2433, 0
    %v2459 = vsel %vm526, %v2439, 0
    %v2462 = vsel %vm526, %v2441, 0
    %v2465 = vsel %vm526, %v2443, 0
    %v2468 = vsel %vm526, %v2445, 0
    %2470 = vmatprep.subr.bf16.mxu0 0
    %2471 = vmatpush1.bf16.xpose.msra.mxu0 %v2459
    %2472 = vmatprep.subr.bf16.mxu0 0
    %2473 = vmatpush1.bf16.xpose.msra.mxu0 %v2462
    %2474 = vmatprep.subr.bf16.mxu0 0
    %2475 = vmatpush1.bf16.xpose.msra.mxu0 %v2465
    %2476 = vmatprep.subr.bf16.mxu0 0
    %2477 = vmatpush1.bf16.xpose.msra.mxu0 %v2468
    %2478 = vmatprep.subr.bf16.mxu0 0
    %2479 = vmatpush1.bf16.xpose.msra.mxu0 0
    %2480 = vmatprep.subr.bf16.mxu0 0
    %2481 = vmatpush1.bf16.xpose.msra.mxu0 0
    %2482 = vmatprep.subr.bf16.mxu0 0
    %2483 = vmatpush1.bf16.xpose.msra.mxu0 0
    %2484 = vmatprep.subr.bf16.mxu0 0
    %2485 = vmatpush1.bf16.xpose.msra.mxu0 0
    %2486 = vmatprep.subr.bf16.mxu0 0
    %2487 = vmatpush1.bf16.xpose.msra.mxu0 0
    %2488 = vmatprep.subr.bf16.mxu0 0
    %2489 = vmatpush1.bf16.xpose.msra.mxu0 0
    %2490 = vmatprep.subr.bf16.mxu0 0
    %2491 = vmatpush1.bf16.xpose.msra.mxu0 0
    %2492 = vmatprep.subr.bf16.mxu0 0
    %2493 = vmatpush1.bf16.xpose.msra.mxu0 0
    %2494 = vmatprep.subr.bf16.mxu0 0
    %2495 = vmatpush1.bf16.xpose.msra.mxu0 0
    %2496 = vmatprep.subr.bf16.mxu0 0
    %2497 = vmatpush1.bf16.xpose.msra.mxu0 0
    %2498 = vmatprep.subr.bf16.mxu0 0
    %2499 = vmatpush1.bf16.xpose.msra.mxu0 0
    %2500 = vmatprep.subr.bf16.mxu0 0
    %2501 = vmatpush1.bf16.xpose.msra.mxu0 0
    %2502 = vmatprep.mubr.bf16.mxu0 0
    %2503 = vmatmul.mubr.bf16.gmra.mrb[0].mxu0 %v2447
    %v2504 = vpop.f32.mrb[0].mxu0
    %v2505 = vadd.f32 0.0, %v2504
    %v2506 = vpop.f32.mrb[0].mxu0
    %v2507 = vpop.f32.mrb[0].mxu0
    %v2508 = vadd.f32 0.0, %v2507
    %v2509 = vpop.f32.mrb[0].mxu0
    %2510 = vmatprep.mubr.bf16.mxu0 0
    %2511 = vmatmul.mubr.bf16.gmra.mrb[0].mxu0 %v2450
    %v2512 = vpop.f32.mrb[0].mxu0
    %v2513 = vadd.f32 0.0, %v2512
    %v2514 = vpop.f32.mrb[0].mxu0
    %v2515 = vpop.f32.mrb[0].mxu0
    %v2516 = vadd.f32 0.0, %v2515
    %v2517 = vpop.f32.mrb[0].mxu0
    %2518 = vmatprep.mubr.bf16.mxu0 0
    %2519 = vmatmul.mubr.bf16.gmra.mrb[0].mxu0 %v2453
    %v2520 = vpop.f32.mrb[0].mxu0
    %v2521 = vadd.f32 0.0, %v2520
    %v2522 = vpop.f32.mrb[0].mxu0
    %v2523 = vpop.f32.mrb[0].mxu0
    %v2524 = vadd.f32 0.0, %v2523
    %v2525 = vpop.f32.mrb[0].mxu0
    %2526 = vmatprep.mubr.bf16.mxu0 0
    %2527 = vmatmul.mubr.bf16.gmra.mrb[0].mxu0 %v2456
    %v2528 = vpop.f32.mrb[0].mxu0
    %v2529 = vadd.f32 0.0, %v2528
    %v2530 = vpop.f32.mrb[0].mxu0
    %v2531 = vpop.f32.mrb[0].mxu0
    %v2532 = vadd.f32 0.0, %v2531
    %v2533 = vpop.f32.mrb[0].mxu0
    %2534 = vdwg.mxu0
    %2539 = vrot.lane.b32.xlu0 %v2402, 32
    %v2540 = vpop.permute.xlu0 %2539
    %2541 = vrot.lane.b32.xlu0 %v2403, 32
    %v2542 = vpop.permute.xlu0 %2541
    %2543 = vrot.lane.b32.xlu0 %v2404, 32
    %v2544 = vpop.permute.xlu0 %2543
    %2545 = vrot.lane.b32.xlu0 %v2405, 32
    %v2546 = vpop.permute.xlu0 %2545
    %2551 = vrot.lane.b32.xlu0 %v2410, 32
    %v2552 = vpop.permute.xlu0 %2551
    %2553 = vrot.lane.b32.xlu0 %v2411, 32
    %v2554 = vpop.permute.xlu0 %2553
    %2555 = vrot.lane.b32.xlu0 %v2412, 32
    %v2556 = vpop.permute.xlu0 %2555
    %2557 = vrot.lane.b32.xlu0 %v2413, 32
    %v2558 = vpop.permute.xlu0 %2557
    %v2560 = vsel %vm526, %v2540, 0
    %v2563 = vsel %vm526, %v2542, 0
    %v2566 = vsel %vm526, %v2544, 0
    %v2569 = vsel %vm526, %v2546, 0
    %v2572 = vsel %vm526, %v2552, 0
    %v2575 = vsel %vm526, %v2554, 0
    %v2578 = vsel %vm526, %v2556, 0
    %v2581 = vsel %vm526, %v2558, 0
    %2583 = vmatprep.subr.bf16.mxu0 0
    %2584 = vmatpush1.bf16.xpose.msra.mxu0 %v2572
    %2585 = vmatprep.subr.bf16.mxu0 0
    %2586 = vmatpush1.bf16.xpose.msra.mxu0 %v2575
    %2587 = vmatprep.subr.bf16.mxu0 0
    %2588 = vmatpush1.bf16.xpose.msra.mxu0 %v2578
    %2589 = vmatprep.subr.bf16.mxu0 0
    %2590 = vmatpush1.bf16.xpose.msra.mxu0 %v2581
    %2591 = vmatprep.subr.bf16.mxu0 0
    %2592 = vmatpush1.bf16.xpose.msra.mxu0 0
    %2593 = vmatprep.subr.bf16.mxu0 0
    %2594 = vmatpush1.bf16.xpose.msra.mxu0 0
    %2595 = vmatprep.subr.bf16.mxu0 0
    %2596 = vmatpush1.bf16.xpose.msra.mxu0 0
    %2597 = vmatprep.subr.bf16.mxu0 0
    %2598 = vmatpush1.bf16.xpose.msra.mxu0 0
    %2599 = vmatprep.subr.bf16.mxu0 0
    %2600 = vmatpush1.bf16.xpose.msra.mxu0 0
    %2601 = vmatprep.subr.bf16.mxu0 0
    %2602 = vmatpush1.bf16.xpose.msra.mxu0 0
    %2603 = vmatprep.subr.bf16.mxu0 0
    %2604 = vmatpush1.bf16.xpose.msra.mxu0 0
    %2605 = vmatprep.subr.bf16.mxu0 0
    %2606 = vmatpush1.bf16.xpose.msra.mxu0 0
    %2607 = vmatprep.subr.bf16.mxu0 0
    %2608 = vmatpush1.bf16.xpose.msra.mxu0 0
    %2609 = vmatprep.subr.bf16.mxu0 0
    %2610 = vmatpush1.bf16.xpose.msra.mxu0 0
    %2611 = vmatprep.subr.bf16.mxu0 0
    %2612 = vmatpush1.bf16.xpose.msra.mxu0 0
    %2613 = vmatprep.subr.bf16.mxu0 0
    %2614 = vmatpush1.bf16.xpose.msra.mxu0 0
    %2615 = vmatprep.mubr.bf16.mxu0 0
    %2616 = vmatmul.mubr.bf16.gmra.mrb[0].mxu0 %v2560
    %v2617 = vpop.f32.mrb[0].mxu0
    %v2618 = vadd.f32 0.0, %v2617
    %v2619 = vpop.f32.mrb[0].mxu0
    %v2620 = vpop.f32.mrb[0].mxu0
    %v2621 = vadd.f32 0.0, %v2620
    %v2622 = vpop.f32.mrb[0].mxu0
    %2623 = vmatprep.mubr.bf16.mxu0 0
    %2624 = vmatmul.mubr.bf16.gmra.mrb[0].mxu0 %v2563
    %v2625 = vpop.f32.mrb[0].mxu0
    %v2626 = vadd.f32 0.0, %v2625
    %v2627 = vpop.f32.mrb[0].mxu0
    %v2628 = vpop.f32.mrb[0].mxu0
    %v2629 = vadd.f32 0.0, %v2628
    %v2630 = vpop.f32.mrb[0].mxu0
    %2631 = vmatprep.mubr.bf16.mxu0 0
    %2632 = vmatmul.mubr.bf16.gmra.mrb[0].mxu0 %v2566
    %v2633 = vpop.f32.mrb[0].mxu0
    %v2634 = vadd.f32 0.0, %v2633
    %v2635 = vpop.f32.mrb[0].mxu0
    %v2636 = vpop.f32.mrb[0].mxu0
    %v2637 = vadd.f32 0.0, %v2636
    %v2638 = vpop.f32.mrb[0].mxu0
    %2639 = vmatprep.mubr.bf16.mxu0 0
    %2640 = vmatmul.mubr.bf16.gmra.mrb[0].mxu0 %v2569
    %v2641 = vpop.f32.mrb[0].mxu0
    %v2642 = vadd.f32 0.0, %v2641
    %v2643 = vpop.f32.mrb[0].mxu0
    %v2644 = vpop.f32.mrb[0].mxu0
    %v2645 = vadd.f32 0.0, %v2644
    %v2646 = vpop.f32.mrb[0].mxu0
    %2647 = vdwg.mxu0
    %v2648 = vsel %vm705, %v2505, -inf
    %2649 = vmax.xlane.f32.xlu0 %v2648
    %v2650 = vpop.xlane.xlu0 %2649
    %v2651 = vsel %vm705, %v2508, -inf
    %2652 = vmax.xlane.f32.xlu0 %v2651
    %v2653 = vpop.xlane.xlu0 %2652
    %v2654 = vsel %vm705, %v2513, -inf
    %2655 = vmax.xlane.f32.xlu0 %v2654
    %v2656 = vpop.xlane.xlu0 %2655
    %v2657 = vsel %vm705, %v2516, -inf
    %2658 = vmax.xlane.f32.xlu0 %v2657
    %v2659 = vpop.xlane.xlu0 %2658
    %v2660 = vsel %vm705, %v2521, -inf
    %2661 = vmax.xlane.f32.xlu0 %v2660
    %v2662 = vpop.xlane.xlu0 %2661
    %v2663 = vsel %vm705, %v2524, -inf
    %2664 = vmax.xlane.f32.xlu0 %v2663
    %v2665 = vpop.xlane.xlu0 %2664
    %v2666 = vsel %vm705, %v2529, -inf
    %2667 = vmax.xlane.f32.xlu0 %v2666
    %v2668 = vpop.xlane.xlu0 %2667
    %v2669 = vsel %vm705, %v2532, -inf
    %2670 = vmax.xlane.f32.xlu0 %v2669
    %v2671 = vpop.xlane.xlu0 %2670
    %v2672 = vsel %vm705, %v2618, -inf
    %2673 = vmax.xlane.f32.xlu0 %v2672
    %v2674 = vpop.xlane.xlu0 %2673
    %v2675 = vsel %vm705, %v2621, -inf
    %2676 = vmax.xlane.f32.xlu0 %v2675
    %v2677 = vpop.xlane.xlu0 %2676
    %v2678 = vsel %vm705, %v2626, -inf
    %2679 = vmax.xlane.f32.xlu0 %v2678
    %v2680 = vpop.xlane.xlu0 %2679
    %v2681 = vsel %vm705, %v2629, -inf
    %2682 = vmax.xlane.f32.xlu0 %v2681
    %v2683 = vpop.xlane.xlu0 %2682
    %v2684 = vsel %vm705, %v2634, -inf
    %2685 = vmax.xlane.f32.xlu0 %v2684
    %v2686 = vpop.xlane.xlu0 %2685
    %v2687 = vsel %vm705, %v2637, -inf
    %2688 = vmax.xlane.f32.xlu0 %v2687
    %v2689 = vpop.xlane.xlu0 %2688
    %v2690 = vsel %vm705, %v2642, -inf
    %2691 = vmax.xlane.f32.xlu0 %v2690
    %v2692 = vpop.xlane.xlu0 %2691
    %v2693 = vsel %vm705, %v2645, -inf
    %2694 = vmax.xlane.f32.xlu0 %v2693
    %v2695 = vpop.xlane.xlu0 %2694
    %v2696 = vsub.f32 %v2505, %v2650
    %v2697 = vsub.f32 %v2508, %v2653
    %v2698 = vsub.f32 %v2513, %v2656
    %v2699 = vsub.f32 %v2516, %v2659
    %v2700 = vsub.f32 %v2521, %v2662
    %v2701 = vsub.f32 %v2524, %v2665
    %v2702 = vsub.f32 %v2529, %v2668
    %v2703 = vsub.f32 %v2532, %v2671
    %v2704 = vsub.f32 %v2618, %v2674
    %v2705 = vsub.f32 %v2621, %v2677
    %v2706 = vsub.f32 %v2626, %v2680
    %v2707 = vsub.f32 %v2629, %v2683
    %v2708 = vsub.f32 %v2634, %v2686
    %v2709 = vsub.f32 %v2637, %v2689
    %v2710 = vsub.f32 %v2642, %v2692
    %v2711 = vsub.f32 %v2645, %v2695
    %v2712 = vmul.f32 %v2696, 1.442695
    %v2713 = vpow.pop %v2712
    %v2714 = vmul.f32 %v2697, 1.442695
    %v2715 = vpow.pop %v2714
    %v2716 = vmul.f32 %v2698, 1.442695
    %v2717 = vpow.pop %v2716
    %v2718 = vmul.f32 %v2699, 1.442695
    %v2719 = vpow.pop %v2718
    %v2720 = vmul.f32 %v2700, 1.442695
    %v2721 = vpow.pop %v2720
    %v2722 = vmul.f32 %v2701, 1.442695
    %v2723 = vpow.pop %v2722
    %v2724 = vmul.f32 %v2702, 1.442695
    %v2725 = vpow.pop %v2724
    %v2726 = vmul.f32 %v2703, 1.442695
    %v2727 = vpow.pop %v2726
    %v2728 = vmul.f32 %v2704, 1.442695
    %v2729 = vpow.pop %v2728
    %v2730 = vmul.f32 %v2705, 1.442695
    %v2731 = vpow.pop %v2730
    %v2732 = vmul.f32 %v2706, 1.442695
    %v2733 = vpow.pop %v2732
    %v2734 = vmul.f32 %v2707, 1.442695
    %v2735 = vpow.pop %v2734
    %v2736 = vmul.f32 %v2708, 1.442695
    %v2737 = vpow.pop %v2736
    %v2738 = vmul.f32 %v2709, 1.442695
    %v2739 = vpow.pop %v2738
    %v2740 = vmul.f32 %v2710, 1.442695
    %v2741 = vpow.pop %v2740
    %v2742 = vmul.f32 %v2711, 1.442695
    %v2743 = vpow.pop %v2742
    %v2744 = vsel %vm705, %v2713, 0.0
    %2745 = vadd.xlane.f32.xlu0 %v2744
    %v2746 = vpop.xlane.xlu0 %2745
    %v2747 = vsel %vm705, %v2715, 0.0
    %2748 = vadd.xlane.f32.xlu0 %v2747
    %v2749 = vpop.xlane.xlu0 %2748
    %v2750 = vsel %vm705, %v2717, 0.0
    %2751 = vadd.xlane.f32.xlu0 %v2750
    %v2752 = vpop.xlane.xlu0 %2751
    %v2753 = vsel %vm705, %v2719, 0.0
    %2754 = vadd.xlane.f32.xlu0 %v2753
    %v2755 = vpop.xlane.xlu0 %2754
    %v2756 = vsel %vm705, %v2721, 0.0
    %2757 = vadd.xlane.f32.xlu0 %v2756
    %v2758 = vpop.xlane.xlu0 %2757
    %v2759 = vsel %vm705, %v2723, 0.0
    %2760 = vadd.xlane.f32.xlu0 %v2759
    %v2761 = vpop.xlane.xlu0 %2760
    %v2762 = vsel %vm705, %v2725, 0.0
    %2763 = vadd.xlane.f32.xlu0 %v2762
    %v2764 = vpop.xlane.xlu0 %2763
    %v2765 = vsel %vm705, %v2727, 0.0
    %2766 = vadd.xlane.f32.xlu0 %v2765
    %v2767 = vpop.xlane.xlu0 %2766
    %v2768 = vsel %vm705, %v2729, 0.0
    %2769 = vadd.xlane.f32.xlu0 %v2768
    %v2770 = vpop.xlane.xlu0 %2769
    %v2771 = vsel %vm705, %v2731, 0.0
    %2772 = vadd.xlane.f32.xlu0 %v2771
    %v2773 = vpop.xlane.xlu0 %2772
    %v2774 = vsel %vm705, %v2733, 0.0
    %2775 = vadd.xlane.f32.xlu0 %v2774
    %v2776 = vpop.xlane.xlu0 %2775
    %v2777 = vsel %vm705, %v2735, 0.0
    %2778 = vadd.xlane.f32.xlu0 %v2777
    %v2779 = vpop.xlane.xlu0 %2778
    %v2780 = vsel %vm705, %v2737, 0.0
    %2781 = vadd.xlane.f32.xlu0 %v2780
    %v2782 = vpop.xlane.xlu0 %2781
    %v2783 = vsel %vm705, %v2739, 0.0
    %2784 = vadd.xlane.f32.xlu0 %v2783
    %v2785 = vpop.xlane.xlu0 %2784
    %v2786 = vsel %vm705, %v2741, 0.0
    %2787 = vadd.xlane.f32.xlu0 %v2786
    %v2788 = vpop.xlane.xlu0 %2787
    %v2789 = vsel %vm705, %v2743, 0.0
    %2790 = vadd.xlane.f32.xlu0 %v2789
    %v2791 = vpop.xlane.xlu0 %2790
    %v2792 = vpack.c.bf16 %v2715, %v2713
    %v2793 = vpack.c.bf16 %v2719, %v2717
    %v2794 = vpack.c.bf16 %v2723, %v2721
    %v2795 = vpack.c.bf16 %v2727, %v2725
    %v2796 = vpack.c.bf16 %v2731, %v2729
    %v2797 = vpack.c.bf16 %v2735, %v2733
    %v2798 = vpack.c.bf16 %v2739, %v2737
    %v2799 = vpack.c.bf16 %v2743, %v2741
    %2804 = vrot.lane.b32.xlu0 %v2414, 32
    %v2805 = vpop.permute.xlu0 %2804
    %2806 = vrot.lane.b32.xlu0 %v2415, 32
    %v2807 = vpop.permute.xlu0 %2806
    %2808 = vrot.lane.b32.xlu0 %v2416, 32
    %v2809 = vpop.permute.xlu0 %2808
    %2810 = vrot.lane.b32.xlu0 %v2417, 32
    %v2811 = vpop.permute.xlu0 %2810
    %v2817 = vsel %vm705, %v2792, 0
    %v2820 = vsel %vm705, %v2793, 0
    %v2823 = vsel %vm705, %v2794, 0
    %v2826 = vsel %vm705, %v2795, 0
    %2828 = vmatprep.subr.bf16.mxu0 0
    %2829 = vmatpush1.bf16.msra.mxu0 %v2805
    %2830 = vmatprep.subr.bf16.mxu0 0
    %2831 = vmatpush1.bf16.msra.mxu0 %v2807
    %2832 = vmatprep.subr.bf16.mxu0 0
    %2833 = vmatpush1.bf16.msra.mxu0 %v2809
    %2834 = vmatprep.subr.bf16.mxu0 0
    %2835 = vmatpush1.bf16.msra.mxu0 %v2811
    %2836 = vmatprep.subr.bf16.mxu0 0
    %2837 = vmatpush1.bf16.msra.mxu0 0
    %2838 = vmatprep.subr.bf16.mxu0 0
    %2839 = vmatpush1.bf16.msra.mxu0 0
    %2840 = vmatprep.subr.bf16.mxu0 0
    %2841 = vmatpush1.bf16.msra.mxu0 0
    %2842 = vmatprep.subr.bf16.mxu0 0
    %2843 = vmatpush1.bf16.msra.mxu0 0
    %2844 = vmatprep.subr.bf16.mxu0 0
    %2845 = vmatpush1.bf16.msra.mxu0 0
    %2846 = vmatprep.subr.bf16.mxu0 0
    %2847 = vmatpush1.bf16.msra.mxu0 0
    %2848 = vmatprep.subr.bf16.mxu0 0
    %2849 = vmatpush1.bf16.msra.mxu0 0
    %2850 = vmatprep.subr.bf16.mxu0 0
    %2851 = vmatpush1.bf16.msra.mxu0 0
    %2852 = vmatprep.subr.bf16.mxu0 0
    %2853 = vmatpush1.bf16.msra.mxu0 0
    %2854 = vmatprep.subr.bf16.mxu0 0
    %2855 = vmatpush1.bf16.msra.mxu0 0
    %2856 = vmatprep.subr.bf16.mxu0 0
    %2857 = vmatpush1.bf16.msra.mxu0 0
    %2858 = vmatprep.subr.bf16.mxu0 0
    %2859 = vmatpush1.bf16.msra.mxu0 0
    %2860 = vmatprep.mubr.bf16.mxu0 0
    %2861 = vmatmul.mubr.bf16.gmra.mrb[0].mxu0 %v2817
    %v2862 = vpop.f32.mrb[0].mxu0
    %v2863 = vadd.f32 0.0, %v2862
    %v2864 = vpop.f32.mrb[0].mxu0
    %v2865 = vpop.f32.mrb[0].mxu0
    %v2866 = vadd.f32 0.0, %v2865
    %v2867 = vpop.f32.mrb[0].mxu0
    %2868 = vmatprep.mubr.bf16.mxu0 0
    %2869 = vmatmul.mubr.bf16.gmra.mrb[0].mxu0 %v2820
    %v2870 = vpop.f32.mrb[0].mxu0
    %v2871 = vadd.f32 0.0, %v2870
    %v2872 = vpop.f32.mrb[0].mxu0
    %v2873 = vpop.f32.mrb[0].mxu0
    %v2874 = vadd.f32 0.0, %v2873
    %v2875 = vpop.f32.mrb[0].mxu0
    %2876 = vmatprep.mubr.bf16.mxu0 0
    %2877 = vmatmul.mubr.bf16.gmra.mrb[0].mxu0 %v2823
    %v2878 = vpop.f32.mrb[0].mxu0
    %v2879 = vadd.f32 0.0, %v2878
    %v2880 = vpop.f32.mrb[0].mxu0
    %v2881 = vpop.f32.mrb[0].mxu0
    %v2882 = vadd.f32 0.0, %v2881
    %v2883 = vpop.f32.mrb[0].mxu0
    %2884 = vmatprep.mubr.bf16.mxu0 0
    %2885 = vmatmul.mubr.bf16.gmra.mrb[0].mxu0 %v2826
    %v2886 = vpop.f32.mrb[0].mxu0
    %v2887 = vadd.f32 0.0, %v2886
    %v2888 = vpop.f32.mrb[0].mxu0
    %v2889 = vpop.f32.mrb[0].mxu0
    %v2890 = vadd.f32 0.0, %v2889
    %v2891 = vpop.f32.mrb[0].mxu0
    %2892 = vdwg.mxu0
    %2897 = vrot.lane.b32.xlu0 %v2418, 32
    %v2898 = vpop.permute.xlu0 %2897
    %2899 = vrot.lane.b32.xlu0 %v2419, 32
    %v2900 = vpop.permute.xlu0 %2899
    %2901 = vrot.lane.b32.xlu0 %v2420, 32
    %v2902 = vpop.permute.xlu0 %2901
    %2903 = vrot.lane.b32.xlu0 %v2421, 32
    %v2904 = vpop.permute.xlu0 %2903
    %v2910 = vsel %vm705, %v2796, 0
    %v2913 = vsel %vm705, %v2797, 0
    %v2916 = vsel %vm705, %v2798, 0
    %v2919 = vsel %vm705, %v2799, 0
    %2921 = vmatprep.subr.bf16.mxu0 0
    %2922 = vmatpush1.bf16.msra.mxu0 %v2898
    %2923 = vmatprep.subr.bf16.mxu0 0
    %2924 = vmatpush1.bf16.msra.mxu0 %v2900
    %2925 = vmatprep.subr.bf16.mxu0 0
    %2926 = vmatpush1.bf16.msra.mxu0 %v2902
    %2927 = vmatprep.subr.bf16.mxu0 0
    %2928 = vmatpush1.bf16.msra.mxu0 %v2904
    %2929 = vmatprep.subr.bf16.mxu0 0
    %2930 = vmatpush1.bf16.msra.mxu0 0
    %2931 = vmatprep.subr.bf16.mxu0 0
    %2932 = vmatpush1.bf16.msra.mxu0 0
    %2933 = vmatprep.subr.bf16.mxu0 0
    %2934 = vmatpush1.bf16.msra.mxu0 0
    %2935 = vmatprep.subr.bf16.mxu0 0
    %2936 = vmatpush1.bf16.msra.mxu0 0
    %2937 = vmatprep.subr.bf16.mxu0 0
    %2938 = vmatpush1.bf16.msra.mxu0 0
    %2939 = vmatprep.subr.bf16.mxu0 0
    %2940 = vmatpush1.bf16.msra.mxu0 0
    %2941 = vmatprep.subr.bf16.mxu0 0
    %2942 = vmatpush1.bf16.msra.mxu0 0
    %2943 = vmatprep.subr.bf16.mxu0 0
    %2944 = vmatpush1.bf16.msra.mxu0 0
    %2945 = vmatprep.subr.bf16.mxu0 0
    %2946 = vmatpush1.bf16.msra.mxu0 0
    %2947 = vmatprep.subr.bf16.mxu0 0
    %2948 = vmatpush1.bf16.msra.mxu0 0
    %2949 = vmatprep.subr.bf16.mxu0 0
    %2950 = vmatpush1.bf16.msra.mxu0 0
    %2951 = vmatprep.subr.bf16.mxu0 0
    %2952 = vmatpush1.bf16.msra.mxu0 0
    %2953 = vmatprep.mubr.bf16.mxu0 0
    %2954 = vmatmul.mubr.bf16.gmra.mrb[0].mxu0 %v2910
    %v2955 = vpop.f32.mrb[0].mxu0
    %v2956 = vadd.f32 0.0, %v2955
    %v2957 = vpop.f32.mrb[0].mxu0
    %v2958 = vpop.f32.mrb[0].mxu0
    %v2959 = vadd.f32 0.0, %v2958
    %v2960 = vpop.f32.mrb[0].mxu0
    %2961 = vmatprep.mubr.bf16.mxu0 0
    %2962 = vmatmul.mubr.bf16.gmra.mrb[0].mxu0 %v2913
    %v2963 = vpop.f32.mrb[0].mxu0
    %v2964 = vadd.f32 0.0, %v2963
    %v2965 = vpop.f32.mrb[0].mxu0
    %v2966 = vpop.f32.mrb[0].mxu0
    %v2967 = vadd.f32 0.0, %v2966
    %v2968 = vpop.f32.mrb[0].mxu0
    %2969 = vmatprep.mubr.bf16.mxu0 0
    %2970 = vmatmul.mubr.bf16.gmra.mrb[0].mxu0 %v2916
    %v2971 = vpop.f32.mrb[0].mxu0
    %v2972 = vadd.f32 0.0, %v2971
    %v2973 = vpop.f32.mrb[0].mxu0
    %v2974 = vpop.f32.mrb[0].mxu0
    %v2975 = vadd.f32 0.0, %v2974
    %v2976 = vpop.f32.mrb[0].mxu0
    %2977 = vmatprep.mubr.bf16.mxu0 0
    %2978 = vmatmul.mubr.bf16.gmra.mrb[0].mxu0 %v2919
    %v2979 = vpop.f32.mrb[0].mxu0
    %v2980 = vadd.f32 0.0, %v2979
    %v2981 = vpop.f32.mrb[0].mxu0
    %v2982 = vpop.f32.mrb[0].mxu0
    %v2983 = vadd.f32 0.0, %v2982
    %v2984 = vpop.f32.mrb[0].mxu0
    %2985 = vdwg.mxu0
    %v2986 = vrcp.pop %v2746
    %v2987 = vrcp.pop %v2749
    %v2988 = vrcp.pop %v2752
    %v2989 = vrcp.pop %v2755
    %v2990 = vrcp.pop %v2758
    %v2991 = vrcp.pop %v2761
    %v2992 = vrcp.pop %v2764
    %v2993 = vrcp.pop %v2767
    %v2994 = vrcp.pop %v2770
    %v2995 = vrcp.pop %v2773
    %v2996 = vrcp.pop %v2776
    %v2997 = vrcp.pop %v2779
    %v2998 = vrcp.pop %v2782
    %v2999 = vrcp.pop %v2785
    %v3000 = vrcp.pop %v2788
    %v3001 = vrcp.pop %v2791
    %v3002 = vmul.f32 %v2863, %v2986
    %v3003 = vmul.f32 %v2866, %v2987
    %v3004 = vmul.f32 %v2871, %v2988
    %v3005 = vmul.f32 %v2874, %v2989
    %v3006 = vmul.f32 %v2879, %v2990
    %v3007 = vmul.f32 %v2882, %v2991
    %v3008 = vmul.f32 %v2887, %v2992
    %v3009 = vmul.f32 %v2890, %v2993
    %v3010 = vmul.f32 %v2956, %v2994
    %v3011 = vmul.f32 %v2959, %v2995
    %v3012 = vmul.f32 %v2964, %v2996
    %v3013 = vmul.f32 %v2967, %v2997
    %v3014 = vmul.f32 %v2972, %v2998
    %v3015 = vmul.f32 %v2975, %v2999
    %v3016 = vmul.f32 %v2980, %v3000
    %v3017 = vmul.f32 %v2983, %v3001
    %v3018 = vpack.c.bf16 %v3003, %v3002
    %v3019 = vpack.c.bf16 %v3005, %v3004
    %v3020 = vpack.c.bf16 %v3007, %v3006
    %v3021 = vpack.c.bf16 %v3009, %v3008
    %v3022 = vpack.c.bf16 %v3011, %v3010
    %v3023 = vpack.c.bf16 %v3013, %v3012
    %v3024 = vpack.c.bf16 %v3015, %v3014
    %v3025 = vpack.c.bf16 %v3017, %v3016
    %3034 = vrot.lane.b32.xlu0 %v3018, 96
    %v3035 = vpop.permute.xlu0 %3034
    %3036 = vrot.lane.b32.xlu0 %v3019, 96
    %v3037 = vpop.permute.xlu0 %3036
    %3038 = vrot.lane.b32.xlu0 %v3020, 96
    %v3039 = vpop.permute.xlu0 %3038
    %3040 = vrot.lane.b32.xlu0 %v3021, 96
    %v3041 = vpop.permute.xlu0 %3040
    %3042 = vrot.lane.b32.xlu0 %v3022, 96
    %v3043 = vpop.permute.xlu0 %3042
    %3044 = vrot.lane.b32.xlu0 %v3023, 96
    %v3045 = vpop.permute.xlu0 %3044
    %3046 = vrot.lane.b32.xlu0 %v3024, 96
    %v3047 = vpop.permute.xlu0 %3046
    %3048 = vrot.lane.b32.xlu0 %v3025, 96
    %v3049 = vpop.permute.xlu0 %3048
    %vm3058 = vcmask 1048320
    %3059 = vst.msk [vmem:[#allocation3] sm:$0xff] %vm3058, %v3035
    %3060 = vst.msk [vmem:[#allocation3 + $0x8] sm:$0xff] %vm3058, %v3037
    %3061 = vst.msk [vmem:[#allocation3 + $0x10] sm:$0xff] %vm3058, %v3039
    %3062 = vst.msk [vmem:[#allocation3 + $0x18] sm:$0xff] %vm3058, %v3041
    %3063 = vst.msk [vmem:[#allocation3 + $0x20] sm:$0xff] %vm3058, %v3043
    %3064 = vst.msk [vmem:[#allocation3 + $0x28] sm:$0xff] %vm3058, %v3045
    %3065 = vst.msk [vmem:[#allocation3 + $0x30] sm:$0xff] %vm3058, %v3047
    %3066 = vst.msk [vmem:[#allocation3 + $0x38] sm:$0xff] %vm3058, %v3049
    %v3067 = vld [vmem:[#allocation3] sm:$0xff]
    %v3068 = vld [vmem:[#allocation3 + $0x8] sm:$0xff]
    %v3069 = vld [vmem:[#allocation3 + $0x10] sm:$0xff]
    %v3070 = vld [vmem:[#allocation3 + $0x18] sm:$0xff]
    %v3071 = vld [vmem:[#allocation3 + $0x20] sm:$0xff]
    %v3072 = vld [vmem:[#allocation3 + $0x28] sm:$0xff]
    %v3073 = vld [vmem:[#allocation3 + $0x30] sm:$0xff]
    %v3074 = vld [vmem:[#allocation3 + $0x38] sm:$0xff]
    %v3075 = vld [vmem:[#allocation9] sm:$0xf]
    %v3076 = vld [vmem:[#allocation9 + $0x4] sm:$0xf]
    %v3077 = vld [vmem:[#allocation9 + $0x8] sm:$0xf]
    %v3078 = vld [vmem:[#allocation9 + $0xc] sm:$0xf]
    %v3079 = vld [vmem:[#allocation9 + $0x10] sm:$0xf]
    %v3080 = vld [vmem:[#allocation9 + $0x14] sm:$0xf]
    %v3081 = vld [vmem:[#allocation9 + $0x18] sm:$0xf]
    %v3082 = vld [vmem:[#allocation9 + $0x1c] sm:$0xf]
    %v3083 = vld [vmem:[#allocation9 + $0x20] sm:$0xf]
    %v3084 = vld [vmem:[#allocation9 + $0x24] sm:$0xf]
    %v3085 = vld [vmem:[#allocation9 + $0x28] sm:$0xf]
    %v3086 = vld [vmem:[#allocation9 + $0x2c] sm:$0xf]
    %v3087 = vld [vmem:[#allocation9 + $0x30] sm:$0xf]
    %v3088 = vld [vmem:[#allocation9 + $0x34] sm:$0xf]
    %v3089 = vld [vmem:[#allocation9 + $0x38] sm:$0xf]
    %v3090 = vld [vmem:[#allocation9 + $0x3c] sm:$0xf]
    %v3091 = vld [vmem:[%s3] sm:$0x1]
    %v3093 = vlaneseq
    %v3094 = vshrl.u32 %v3093, 7
    %v3095 = vsub.s32 0, %v3094
    %v3096 = vrot.slane %v3091, %v3095
    %v3114 = vunpack.c.l.b16 %v3075
    %v3115 = vunpack.c.l.b16 %v3076
    %v3116 = vunpack.c.l.b16 %v3077
    %v3117 = vunpack.c.l.b16 %v3078
    %v3118 = vunpack.c.l.b16 %v3079
    %v3119 = vunpack.c.l.b16 %v3080
    %v3120 = vunpack.c.l.b16 %v3081
    %v3121 = vunpack.c.l.b16 %v3082
    %v3122 = vunpack.c.l.b16 %v3083
    %v3123 = vunpack.c.l.b16 %v3084
    %v3124 = vunpack.c.l.b16 %v3085
    %v3125 = vunpack.c.l.b16 %v3086
    %v3126 = vunpack.c.l.b16 %v3087
    %v3127 = vunpack.c.l.b16 %v3088
    %v3128 = vunpack.c.l.b16 %v3089
    %v3129 = vunpack.c.l.b16 %v3090
    %v3130 = vpack.c.b16 %v3115, %v3114
    %v3131 = vpack.c.b16 %v3117, %v3116
    %v3132 = vpack.c.b16 %v3119, %v3118
    %v3133 = vpack.c.b16 %v3121, %v3120
    %v3134 = vpack.c.b16 %v3123, %v3122
    %v3135 = vpack.c.b16 %v3125, %v3124
    %v3136 = vpack.c.b16 %v3127, %v3126
    %v3137 = vpack.c.b16 %v3129, %v3128
    %3146 = vmatprep.subr.bf16.mxu0 0
    %3147 = vmatpush1.bf16.msra.mxu0 %v3130
    %3148 = vmatprep.subr.bf16.mxu0 0
    %3149 = vmatpush1.bf16.msra.mxu0 %v3131
    %3150 = vmatprep.subr.bf16.mxu0 0
    %3151 = vmatpush1.bf16.msra.mxu0 %v3132
    %3152 = vmatprep.subr.bf16.mxu0 0
    %3153 = vmatpush1.bf16.msra.mxu0 %v3133
    %3154 = vmatprep.subr.bf16.mxu0 0
    %3155 = vmatpush1.bf16.msra.mxu0 %v3134
    %3156 = vmatprep.subr.bf16.mxu0 0
    %3157 = vmatpush1.bf16.msra.mxu0 %v3135
    %3158 = vmatprep.subr.bf16.mxu0 0
    %3159 = vmatpush1.bf16.msra.mxu0 %v3136
    %3160 = vmatprep.subr.bf16.mxu0 0
    %3161 = vmatpush1.bf16.msra.mxu0 %v3137
    %3162 = vmatprep.subr.bf16.mxu0 0
    %3163 = vmatpush1.bf16.msra.mxu0 0
    %3164 = vmatprep.subr.bf16.mxu0 0
    %3165 = vmatpush1.bf16.msra.mxu0 0
    %3166 = vmatprep.subr.bf16.mxu0 0
    %3167 = vmatpush1.bf16.msra.mxu0 0
    %3168 = vmatprep.subr.bf16.mxu0 0
    %3169 = vmatpush1.bf16.msra.mxu0 0
    %3170 = vmatprep.subr.bf16.mxu0 0
    %3171 = vmatpush1.bf16.msra.mxu0 0
    %3172 = vmatprep.subr.bf16.mxu0 0
    %3173 = vmatpush1.bf16.msra.mxu0 0
    %3174 = vmatprep.subr.bf16.mxu0 0
    %3175 = vmatpush1.bf16.msra.mxu0 0
    %3176 = vmatprep.subr.bf16.mxu0 0
    %3177 = vmatpush1.bf16.msra.mxu0 0
    %3178 = vmatprep.mubr.bf16.mxu0 0
    %3179 = vmatmul.mubr.bf16.gmra.mrb[0].mxu0 %v3067
    %v3180 = vpop.f32.mrb[0].mxu0
    %v3181 = vadd.f32 %v3096, %v3180
    %v3182 = vpop.f32.mrb[0].mxu0
    %v3183 = vpop.f32.mrb[0].mxu0
    %v3184 = vadd.f32 %v3096, %v3183
    %v3185 = vpop.f32.mrb[0].mxu0
    %3186 = vmatprep.mubr.bf16.mxu0 0
    %3187 = vmatmul.mubr.bf16.gmra.mrb[0].mxu0 %v3068
    %v3188 = vpop.f32.mrb[0].mxu0
    %v3189 = vadd.f32 %v3096, %v3188
    %v3190 = vpop.f32.mrb[0].mxu0
    %v3191 = vpop.f32.mrb[0].mxu0
    %v3192 = vadd.f32 %v3096, %v3191
    %v3193 = vpop.f32.mrb[0].mxu0
    %3194 = vmatprep.mubr.bf16.mxu0 0
    %3195 = vmatmul.mubr.bf16.gmra.mrb[0].mxu0 %v3069
    %v3196 = vpop.f32.mrb[0].mxu0
    %v3197 = vadd.f32 %v3096, %v3196
    %v3198 = vpop.f32.mrb[0].mxu0
    %v3199 = vpop.f32.mrb[0].mxu0
    %v3200 = vadd.f32 %v3096, %v3199
    %v3201 = vpop.f32.mrb[0].mxu0
    %3202 = vmatprep.mubr.bf16.mxu0 0
    %3203 = vmatmul.mubr.bf16.gmra.mrb[0].mxu0 %v3070
    %v3204 = vpop.f32.mrb[0].mxu0
    %v3205 = vadd.f32 %v3096, %v3204
    %v3206 = vpop.f32.mrb[0].mxu0
    %v3207 = vpop.f32.mrb[0].mxu0
    %v3208 = vadd.f32 %v3096, %v3207
    %v3209 = vpop.f32.mrb[0].mxu0
    %3210 = vmatprep.mubr.bf16.mxu0 0
    %3211 = vmatmul.mubr.bf16.gmra.mrb[0].mxu0 %v3071
    %v3212 = vpop.f32.mrb[0].mxu0
    %v3213 = vadd.f32 %v3096, %v3212
    %v3214 = vpop.f32.mrb[0].mxu0
    %v3215 = vpop.f32.mrb[0].mxu0
    %v3216 = vadd.f32 %v3096, %v3215
    %v3217 = vpop.f32.mrb[0].mxu0
    %3218 = vmatprep.mubr.bf16.mxu0 0
    %3219 = vmatmul.mubr.bf16.gmra.mrb[0].mxu0 %v3072
    %v3220 = vpop.f32.mrb[0].mxu0
    %v3221 = vadd.f32 %v3096, %v3220
    %v3222 = vpop.f32.mrb[0].mxu0
    %v3223 = vpop.f32.mrb[0].mxu0
    %v3224 = vadd.f32 %v3096, %v3223
    %v3225 = vpop.f32.mrb[0].mxu0
    %3226 = vmatprep.mubr.bf16.mxu0 0
    %3227 = vmatmul.mubr.bf16.gmra.mrb[0].mxu0 %v3073
    %v3228 = vpop.f32.mrb[0].mxu0
    %v3229 = vadd.f32 %v3096, %v3228
    %v3230 = vpop.f32.mrb[0].mxu0
    %v3231 = vpop.f32.mrb[0].mxu0
    %v3232 = vadd.f32 %v3096, %v3231
    %v3233 = vpop.f32.mrb[0].mxu0
    %3234 = vmatprep.mubr.bf16.mxu0 0
    %3235 = vmatmul.mubr.bf16.gmra.mrb[0].mxu0 %v3074
    %v3236 = vpop.f32.mrb[0].mxu0
    %v3237 = vadd.f32 %v3096, %v3236
    %v3238 = vpop.f32.mrb[0].mxu0
    %v3239 = vpop.f32.mrb[0].mxu0
    %v3240 = vadd.f32 %v3096, %v3239
    %v3241 = vpop.f32.mrb[0].mxu0
    %3242 = vdwg.mxu0
    %3243 = vst [vmem:[#allocation10] sm:$0xff] %v3181
    %3244 = vst [vmem:[#allocation10 + $0x8] sm:$0xff] %v3184
    %3245 = vst [vmem:[#allocation10 + $0x10] sm:$0xff] %v3189
    %3246 = vst [vmem:[#allocation10 + $0x18] sm:$0xff] %v3192
    %3247 = vst [vmem:[#allocation10 + $0x20] sm:$0xff] %v3197
    %3248 = vst [vmem:[#allocation10 + $0x28] sm:$0xff] %v3200
    %3249 = vst [vmem:[#allocation10 + $0x30] sm:$0xff] %v3205
    %3250 = vst [vmem:[#allocation10 + $0x38] sm:$0xff] %v3208
    %3251 = vst [vmem:[#allocation10 + $0x40] sm:$0xff] %v3213
    %3252 = vst [vmem:[#allocation10 + $0x48] sm:$0xff] %v3216
    %3253 = vst [vmem:[#allocation10 + $0x50] sm:$0xff] %v3221
    %3254 = vst [vmem:[#allocation10 + $0x58] sm:$0xff] %v3224
    %3255 = vst [vmem:[#allocation10 + $0x60] sm:$0xff] %v3229
    %3256 = vst [vmem:[#allocation10 + $0x68] sm:$0xff] %v3232
    %3257 = vst [vmem:[#allocation10 + $0x70] sm:$0xff] %v3237
    %3258 = vst [vmem:[#allocation10 + $0x78] sm:$0xff] %v3240
    // Predicated region
    $region30: #{tpu_custom_call.1} parent=1 // pred_check
      _
    $region31: #{tpu_custom_call.1} parent=1 // pred_check_branch
      %3260 = sbr.rel (0) target = $region33
    $region32: #{tpu_custom_call.1} parent=1 // pred_region
      %s3262 = ssub.s32 2048, 2048
      %3263 = vsyncadd [#allocation6], %s3262
      %s3264 = sshll.u32 [#allocation10], 4
      %s3265 = int_to_ptr.vmem [resolvable:$true] %s3264
      %3270 = dma.vmem_to_hbm [thread:$0]  %s3265, 2048, %s4, [#allocation6], 128, 128, 8
    $region33: #{tpu_custom_call.1} parent=1 // pred_fallthru
      _
    // Predicated region
    $region34: #{tpu_custom_call.1} parent=1 // pred_check
      _
    $region35: #{tpu_custom_call.1} parent=1 // pred_check_branch
      %3272 = sbr.rel (0) target = $region37
    $region36: #{tpu_custom_call.1} parent=1 // pred_region
      %3273 = dma.done [#allocation6], 2048
    $region37: #{tpu_custom_call.1} parent=1 // pred_fallthru
      _
    %3274 = vsyncpa [#allocation5], 1
    %3275 = vsyncpa [#allocation8], 1
    %3276 = vsyncpa [#allocation6], 1

</llo_original>
